<compile_context>
chip_gen: v5e
topology: v5e:2x2
jax: 0.10.0
libtpu: 0.0.40
codegen_flags: <defaults>
</compile_context>

<pallas_src>
import functools

import jax
import jax.numpy as jnp
from jax import lax
from jax.experimental import pallas as pl
from jax.experimental.pallas import tpu as pltpu


GL = 128  # gate lane slot == padded hidden width (one f32 vreg lane span)


def seq2seq_kernel(
    output_size,   # static python int (bound via functools.partial)
    # ---- inputs ----
    src_ref,       # SMEM (S,)  int32 source token ids
    trg_ref,       # SMEM (T,)  int32 target token ids
    tf_ref,        # SMEM (T,)  int32 teacher-forcing mask (precomputed)
    enc_emb_ref,   # VMEM (V_pad, Hp)
    enc_wih_ref,   # VMEM (Hp, 4*GL)  gate slots (i, f, o, g)
    enc_whh_ref,   # VMEM (Hp, 4*GL)
    enc_b_ref,     # VMEM (1, 4*GL)   b_ih + b_hh
    dec_emb_ref,   # VMEM (O_pad, Hp)
    dec_wih_ref,   # VMEM (Hp, 4*GL)
    dec_whh_ref,   # VMEM (Hp, 4*GL)
    dec_b_ref,     # VMEM (1, 4*GL)
    out_w_ref,     # VMEM (Hp, Op)
    out_b_ref,     # VMEM (1, Op)     lanes >= O are -1e30
    # ---- outputs ----
    out_ref,       # SMEM (1, T) float32
    # ---- scratch ----
    tab_ref,       # VMEM (O_pad, 4*GL) f32: decoder x-side gate table
    preds_ref,     # VMEM (T_pad, Op)   f32: per-step predictions
):
    S = src_ref.shape[0]
    T = trg_ref.shape[0]
    O = output_size
    Hp = enc_emb_ref.shape[1]        # 128 (padded hidden == gate slot width)
    Op = out_w_ref.shape[1]          # 128 (padded output vocab)
    G3 = 3 * Hp

    # Hoisted full-ref reads (reused across the unrolled loops).
    enc_wih = enc_wih_ref[...]
    enc_whh = enc_whh_ref[...]
    enc_b = enc_b_ref[...]
    dec_whh = dec_whh_ref[...]
    out_w = out_w_ref[...]
    out_b = out_b_ref[...]

    # Hoisted iota / constants (JAX does not CSE broadcast_in_dim).
    idx_bits = max(1, (O - 1).bit_length())
    idx_mask = (1 << idx_bits) - 1
    lane = lax.broadcasted_iota(jnp.int32, (1, Op), 1)
    idx_code = jnp.where(lane < O, (O - 1) - lane, 0)        # (1, Op) int32
    int_min = jnp.int32(-2147483648)

    def argmax_key(p):
        """Pack (value, O-1-index) into one int32 key: lane-max of the key is
        the argmax.  Float bits are remapped to an order-preserving int32; the
        low idx_bits bits carry O-1-index (values within a few ulps of the max
        tie-break toward the smaller index, i.e. first-max)."""
        b = pltpu.bitcast(p, jnp.int32)
        mono = jnp.where(b < 0, int_min - b, b)
        return (mono & jnp.int32(~idx_mask)) | idx_code

    def cell(x_gates, h, c, whh):
        # Single packed recurrent matmul; x-side contribution already folded in.
        gates = x_gates + jnp.dot(h, whh, preferred_element_type=jnp.float32)
        ifo = jax.nn.sigmoid(gates[:, :G3])      # one EUP pass over i|f|o
        g = jnp.tanh(gates[:, G3:])              # one EUP pass over g
        i = ifo[:, :Hp]
        f = ifo[:, Hp:2 * Hp]
        o = ifo[:, 2 * Hp:]
        c_new = f * c + i * g                    # padding lanes stay exactly 0
        h_new = o * jnp.tanh(c_new)
        return h_new, c_new

    h = jnp.zeros((1, Hp), jnp.float32)
    c = jnp.zeros((1, Hp), jnp.float32)

    # ---- Encoder: embedding row gather + packed LSTM step, fully unrolled ----
    for t in range(S):
        emb = enc_emb_ref[pl.ds(src_ref[t], 1), :]                       # (1, Hp)
        xg = jnp.dot(emb, enc_wih, preferred_element_type=jnp.float32) + enc_b
        h, c = cell(xg, h, c, enc_whh)

    # ---- Decoder x-side gate table: emb @ Wih + b, computed once ----
    dec_xg = jnp.dot(dec_emb_ref[...], dec_wih_ref[...],
                     preferred_element_type=jnp.float32) + dec_b_ref[...]
    tab_ref[...] = dec_xg

    trg_vals = [trg_ref[t] for t in range(T)]
    tf_vals = [tf_ref[t] for t in range(T)]

    # dec_inp starts at trg[0]; x-side gates come from one dynamic row load.
    x_gates = tab_ref[pl.ds(trg_vals[0], 1), :]

    # ---- Decoder: greedy decode with teacher forcing, fully unrolled ----
    for t in range(1, T):
        h, c = cell(x_gates, h, c, dec_whh)

        if t < T - 1:
            # Teacher-forced steps take the true branch and never execute the
            # prediction matmul / argmax on the recurrence path.
            def _use_trg(tok=trg_vals[t]):
                return tok.astype(jnp.int32)

            def _use_pred(hh=h):
                p = jnp.dot(hh, out_w, preferred_element_type=jnp.float32) + out_b
                top_key = jnp.max(argmax_key(p))             # ONE reduction
                return ((O - 1) - (top_key & idx_mask)).astype(jnp.int32)

            nxt = lax.cond(tf_vals[t] == 1, _use_trg, _use_pred)
            x_gates = tab_ref[pl.ds(nxt, 1), :]

        # Prediction for the output; its argmax is deferred to after the loop
        # so it never sits on the recurrent dependence chain.
        pred = jnp.dot(h, out_w, preferred_element_type=jnp.float32) + out_b
        preds_ref[pl.ds(t, 1), :] = pred

    # ---- Output argmaxes (batched key computation, off the critical path) ----
    keys = argmax_key(preds_ref[...])                          # (T_pad, Op)
    out_ref[0, 0] = jnp.float32(0.0)   # outputs[0][0] is never written in PyTorch
    for t in range(1, T):
        kmax = jnp.max(keys[t:t + 1, :])
        out_ref[0, t] = ((O - 1) - (kmax & idx_mask)).astype(jnp.float32)


def seq2seq_forward(src_idx, trg_idx, tf_mask, params, output_size):
    (enc_emb, enc_wih, enc_whh, enc_b,
     dec_emb, dec_wih, dec_whh, dec_b, out_w, out_b) = params
    T = trg_idx.shape[0]
    T_pad = ((T + 7) // 8) * 8
    smem = pl.BlockSpec(memory_space=pltpu.MemorySpace.SMEM)
    vmem = pl.BlockSpec(memory_space=pltpu.MemorySpace.VMEM)
    kernel = functools.partial(seq2seq_kernel, output_size)
    return pl.pallas_call(
        kernel,
        out_shape=jax.ShapeDtypeStruct((1, T), jnp.float32),
        in_specs=[smem, smem, smem] + [vmem] * 10,
        out_specs=smem,
        scratch_shapes=[
            pltpu.VMEM((dec_emb.shape[0], dec_wih.shape[1]), jnp.float32),
            pltpu.VMEM((T_pad, out_w.shape[1]), jnp.float32),
        ],
    )(src_idx, trg_idx, tf_mask, *params)


def init_params(key, input_size, hidden_size, output_size):
    """Synthetic PyTorch-style uniform(-1/sqrt(H), 1/sqrt(H)) weights, generated
    dense and scattered into the lane-aligned padded layout described above."""
    H = hidden_size
    Hp = GL
    V = input_size
    O = output_size
    scale = 1.0 / (H ** 0.5)
    ks = jax.random.split(key, 12)

    def u(k, shape):
        return jax.random.uniform(k, shape, jnp.float32, -scale, scale)

    def pad_emb(w):                          # (rows, H) -> (rows_pad8, Hp)
        rows = ((w.shape[0] + 7) // 8) * 8
        return jnp.zeros((rows, Hp), jnp.float32).at[:w.shape[0], :H].set(w)

    def pad_gate_w(w):                       # (H, 4H), order (i,f,o,g) -> (Hp, 4*GL)
        out = jnp.zeros((Hp, 4 * GL), jnp.float32)
        for g in range(4):
            out = out.at[:H, g * GL:g * GL + H].set(w[:, g * H:(g + 1) * H])
        return out

    def pad_gate_b(b):                       # (1, 4H) -> (1, 4*GL)
        out = jnp.zeros((1, 4 * GL), jnp.float32)
        for g in range(4):
            out = out.at[:, g * GL:g * GL + H].set(b[:, g * H:(g + 1) * H])
        return out

    enc_emb = pad_emb(u(ks[0], (V, H)))
    enc_wih = pad_gate_w(u(ks[1], (H, 4 * H)))
    enc_whh = pad_gate_w(u(ks[2], (H, 4 * H)))
    enc_b = pad_gate_b(u(ks[3], (1, 4 * H)) + u(ks[4], (1, 4 * H)))

    dec_emb = pad_emb(u(ks[5], (O, H)))
    dec_wih = pad_gate_w(u(ks[6], (H, 4 * H)))
    dec_whh = pad_gate_w(u(ks[7], (H, 4 * H)))
    dec_b = pad_gate_b(u(ks[8], (1, 4 * H)) + u(ks[9], (1, 4 * H)))

    out_w = jnp.zeros((Hp, GL), jnp.float32).at[:H, :O].set(u(ks[10], (H, O)))
    # lanes >= O get -1e30 so padded lanes can never win the argmax
    out_b = jnp.full((1, GL), -1e30, jnp.float32).at[:, :O].set(u(ks[11], (1, O)))

    return (enc_emb, enc_wih, enc_whh, enc_b,
            dec_emb, dec_wih, dec_whh, dec_b,
            out_w, out_b)


if __name__ == "__main__":
    hidden_size = 20
    # source = 'my name is yogesh sharma' -> 5 tokens, ids = [0..4]
    S = 5
    input_size = S
    # target sequence length / output vocabulary (len(target_vec[0]))
    T = 8
    output_size = T

    key = jax.random.PRNGKey(0)
    k_param, k_trg, k_tf = jax.random.split(key, 3)

    # src_vec = [[0, 1, 2, 3, 4]]
    src_idx = jnp.arange(S, dtype=jnp.int32)
    # target token ids in [0, output_size)
    trg_idx = jax.random.randint(k_trg, (T,), 0, output_size, dtype=jnp.int32)
    # teacher forcing coin flips (deterministic stand-in for random.random() < 0.75)
    tf_mask = jax.random.bernoulli(k_tf, 0.75, (T,)).astype(jnp.int32)

    params = init_params(k_param, input_size, hidden_size, output_size)

    outputs = seq2seq_forward(src_idx, trg_idx, tf_mask, params, output_size)
    outputs = jax.block_until_ready(outputs)
    assert outputs.shape == (1, T) and outputs.dtype == jnp.float32
    print("KERNEL_OK")
</pallas_src>

<mosaic_0001>
module attributes {stable_mosaic.version = 11 : i64} {
  func.func @seq2seq_kernel(%arg0: memref<5xi32, #tpu.memory_space<smem>>, %arg1: memref<8xi32, #tpu.memory_space<smem>>, %arg2: memref<8xi32, #tpu.memory_space<smem>>, %arg3: memref<8x128xf32, #tpu.memory_space<vmem>>, %arg4: memref<128x512xf32, #tpu.memory_space<vmem>>, %arg5: memref<128x512xf32, #tpu.memory_space<vmem>>, %arg6: memref<1x512xf32, #tpu.memory_space<vmem>>, %arg7: memref<8x128xf32, #tpu.memory_space<vmem>>, %arg8: memref<128x512xf32, #tpu.memory_space<vmem>>, %arg9: memref<128x512xf32, #tpu.memory_space<vmem>>, %arg10: memref<1x512xf32, #tpu.memory_space<vmem>>, %arg11: memref<128x128xf32, #tpu.memory_space<vmem>>, %arg12: memref<1x128xf32, #tpu.memory_space<vmem>>, %arg13: memref<1x8xf32, #tpu.memory_space<smem>>, %arg14: memref<8x512xf32, #tpu.memory_space<vmem>>, %arg15: memref<8x128xf32, #tpu.memory_space<vmem>>) attributes {dimension_semantics = [], scalar_prefetch = 0 : i64, scratch_operands = 2 : i64, tpu.core_type = #tpu.core_type<tc>} {
    %c0 = arith.constant 0 : index
    %c0_0 = arith.constant 0 : index
    %0 = vector.load %arg4[%c0, %c0_0] : memref<128x512xf32, #tpu.memory_space<vmem>>, vector<128x512xf32>
    %c0_1 = arith.constant 0 : index
    %c0_2 = arith.constant 0 : index
    %1 = vector.load %arg5[%c0_1, %c0_2] : memref<128x512xf32, #tpu.memory_space<vmem>>, vector<128x512xf32>
    %c0_3 = arith.constant 0 : index
    %c0_4 = arith.constant 0 : index
    %2 = vector.load %arg6[%c0_3, %c0_4] : memref<1x512xf32, #tpu.memory_space<vmem>>, vector<1x512xf32>
    %c0_5 = arith.constant 0 : index
    %c0_6 = arith.constant 0 : index
    %3 = vector.load %arg9[%c0_5, %c0_6] : memref<128x512xf32, #tpu.memory_space<vmem>>, vector<128x512xf32>
    %c0_7 = arith.constant 0 : index
    %c0_8 = arith.constant 0 : index
    %4 = vector.load %arg11[%c0_7, %c0_8] : memref<128x128xf32, #tpu.memory_space<vmem>>, vector<128x128xf32>
    %c0_9 = arith.constant 0 : index
    %c0_10 = arith.constant 0 : index
    %5 = vector.load %arg12[%c0_9, %c0_10] : memref<1x128xf32, #tpu.memory_space<vmem>>, vector<1x128xf32>
    %6 = tpu.iota {dimensions = array<i32: 1>} : vector<1x128xi32>
    %c8_i32 = arith.constant 8 : i32
    %7 = vector.broadcast %c8_i32 : i32 to vector<1x128xi32>
    %8 = arith.cmpi slt, %6, %7 : vector<1x128xi32>
    %c7_i32 = arith.constant 7 : i32
    %9 = vector.broadcast %c7_i32 : i32 to vector<1x128xi32>
    %10 = arith.subi %9, %6 : vector<1x128xi32>
    %c0_i32 = arith.constant 0 : i32
    %11 = vector.broadcast %c0_i32 : i32 to vector<1x128xi32>
    %12 = arith.select %8, %10, %11 : vector<1x128xi1>, vector<1x128xi32>
    %cst = arith.constant 0.000000e+00 : f32
    %13 = vector.broadcast %cst : f32 to vector<1x128xf32>
    %cst_11 = arith.constant 0.000000e+00 : f32
    %14 = vector.broadcast %cst_11 : f32 to vector<1x128xf32>
    %c0_12 = arith.constant 0 : index
    %15 = memref.load %arg0[%c0_12] : memref<5xi32, #tpu.memory_space<smem>>
    %16 = arith.index_cast %15 : i32 to index
    %c0_13 = arith.constant 0 : index
    %17 = vector.load %arg3[%16, %c0_13] : memref<8x128xf32, #tpu.memory_space<vmem>>, vector<1x128xf32>
    %cst_14 = arith.constant dense<0.000000e+00> : vector<1x512xf32>
    %18 = tpu.matmul %17, %0, %cst_14 {dimension_numbers = #tpu.dot_dimension_numbers<[1], [0], [0], [1], [0, 0, 1, 1], [], []>} : vector<1x128xf32>, vector<128x512xf32>, vector<1x512xf32> -> vector<1x512xf32>
    %19 = arith.addf %18, %2 : vector<1x512xf32>
    %cst_15 = arith.constant dense<0.000000e+00> : vector<1x512xf32>
    %20 = tpu.matmul %13, %1, %cst_15 {dimension_numbers = #tpu.dot_dimension_numbers<[1], [0], [0], [1], [0, 0, 1, 1], [], []>} : vector<1x128xf32>, vector<128x512xf32>, vector<1x512xf32> -> vector<1x512xf32>
    %21 = arith.addf %19, %20 : vector<1x512xf32>
    %22 = vector.extract_strided_slice %21 {offsets = [0, 0], sizes = [1, 384], strides = [1, 1]} : vector<1x512xf32> to vector<1x384xf32>
    %23 = arith.negf %22 : vector<1x384xf32>
    %24 = math.exp %23 : vector<1x384xf32>
    %cst_16 = arith.constant 1.000000e+00 : f32
    %25 = vector.broadcast %cst_16 : f32 to vector<1x384xf32>
    %26 = arith.addf %25, %24 : vector<1x384xf32>
    %27 = arith.divf %25, %26 : vector<1x384xf32>
    %28 = vector.extract_strided_slice %21 {offsets = [0, 384], sizes = [1, 128], strides = [1, 1]} : vector<1x512xf32> to vector<1x128xf32>
    %29 = math.tanh %28 : vector<1x128xf32>
    %30 = vector.extract_strided_slice %27 {offsets = [0, 0], sizes = [1, 128], strides = [1, 1]} : vector<1x384xf32> to vector<1x128xf32>
    %31 = vector.extract_strided_slice %27 {offsets = [0, 128], sizes = [1, 128], strides = [1, 1]} : vector<1x384xf32> to vector<1x128xf32>
    %32 = vector.extract_strided_slice %27 {offsets = [0, 256], sizes = [1, 128], strides = [1, 1]} : vector<1x384xf32> to vector<1x128xf32>
    %33 = arith.mulf %31, %14 : vector<1x128xf32>
    %34 = arith.mulf %30, %29 : vector<1x128xf32>
    %35 = arith.addf %33, %34 : vector<1x128xf32>
    %36 = math.tanh %35 : vector<1x128xf32>
    %37 = arith.mulf %32, %36 : vector<1x128xf32>
    %c1 = arith.constant 1 : index
    %38 = memref.load %arg0[%c1] : memref<5xi32, #tpu.memory_space<smem>>
    %39 = arith.index_cast %38 : i32 to index
    %c0_17 = arith.constant 0 : index
    %40 = vector.load %arg3[%39, %c0_17] : memref<8x128xf32, #tpu.memory_space<vmem>>, vector<1x128xf32>
    %cst_18 = arith.constant dense<0.000000e+00> : vector<1x512xf32>
    %41 = tpu.matmul %40, %0, %cst_18 {dimension_numbers = #tpu.dot_dimension_numbers<[1], [0], [0], [1], [0, 0, 1, 1], [], []>} : vector<1x128xf32>, vector<128x512xf32>, vector<1x512xf32> -> vector<1x512xf32>
    %42 = arith.addf %41, %2 : vector<1x512xf32>
    %cst_19 = arith.constant dense<0.000000e+00> : vector<1x512xf32>
    %43 = tpu.matmul %37, %1, %cst_19 {dimension_numbers = #tpu.dot_dimension_numbers<[1], [0], [0], [1], [0, 0, 1, 1], [], []>} : vector<1x128xf32>, vector<128x512xf32>, vector<1x512xf32> -> vector<1x512xf32>
    %44 = arith.addf %42, %43 : vector<1x512xf32>
    %45 = vector.extract_strided_slice %44 {offsets = [0, 0], sizes = [1, 384], strides = [1, 1]} : vector<1x512xf32> to vector<1x384xf32>
    %46 = arith.negf %45 : vector<1x384xf32>
    %47 = math.exp %46 : vector<1x384xf32>
    %cst_20 = arith.constant 1.000000e+00 : f32
    %48 = vector.broadcast %cst_20 : f32 to vector<1x384xf32>
    %49 = arith.addf %48, %47 : vector<1x384xf32>
    %50 = arith.divf %48, %49 : vector<1x384xf32>
    %51 = vector.extract_strided_slice %44 {offsets = [0, 384], sizes = [1, 128], strides = [1, 1]} : vector<1x512xf32> to vector<1x128xf32>
    %52 = math.tanh %51 : vector<1x128xf32>
    %53 = vector.extract_strided_slice %50 {offsets = [0, 0], sizes = [1, 128], strides = [1, 1]} : vector<1x384xf32> to vector<1x128xf32>
    %54 = vector.extract_strided_slice %50 {offsets = [0, 128], sizes = [1, 128], strides = [1, 1]} : vector<1x384xf32> to vector<1x128xf32>
    %55 = vector.extract_strided_slice %50 {offsets = [0, 256], sizes = [1, 128], strides = [1, 1]} : vector<1x384xf32> to vector<1x128xf32>
    %56 = arith.mulf %54, %35 : vector<1x128xf32>
    %57 = arith.mulf %53, %52 : vector<1x128xf32>
    %58 = arith.addf %56, %57 : vector<1x128xf32>
    %59 = math.tanh %58 : vector<1x128xf32>
    %60 = arith.mulf %55, %59 : vector<1x128xf32>
    %c2 = arith.constant 2 : index
    %61 = memref.load %arg0[%c2] : memref<5xi32, #tpu.memory_space<smem>>
    %62 = arith.index_cast %61 : i32 to index
    %c0_21 = arith.constant 0 : index
    %63 = vector.load %arg3[%62, %c0_21] : memref<8x128xf32, #tpu.memory_space<vmem>>, vector<1x128xf32>
    %cst_22 = arith.constant dense<0.000000e+00> : vector<1x512xf32>
    %64 = tpu.matmul %63, %0, %cst_22 {dimension_numbers = #tpu.dot_dimension_numbers<[1], [0], [0], [1], [0, 0, 1, 1], [], []>} : vector<1x128xf32>, vector<128x512xf32>, vector<1x512xf32> -> vector<1x512xf32>
    %65 = arith.addf %64, %2 : vector<1x512xf32>
    %cst_23 = arith.constant dense<0.000000e+00> : vector<1x512xf32>
    %66 = tpu.matmul %60, %1, %cst_23 {dimension_numbers = #tpu.dot_dimension_numbers<[1], [0], [0], [1], [0, 0, 1, 1], [], []>} : vector<1x128xf32>, vector<128x512xf32>, vector<1x512xf32> -> vector<1x512xf32>
    %67 = arith.addf %65, %66 : vector<1x512xf32>
    %68 = vector.extract_strided_slice %67 {offsets = [0, 0], sizes = [1, 384], strides = [1, 1]} : vector<1x512xf32> to vector<1x384xf32>
    %69 = arith.negf %68 : vector<1x384xf32>
    %70 = math.exp %69 : vector<1x384xf32>
    %cst_24 = arith.constant 1.000000e+00 : f32
    %71 = vector.broadcast %cst_24 : f32 to vector<1x384xf32>
    %72 = arith.addf %71, %70 : vector<1x384xf32>
    %73 = arith.divf %71, %72 : vector<1x384xf32>
    %74 = vector.extract_strided_slice %67 {offsets = [0, 384], sizes = [1, 128], strides = [1, 1]} : vector<1x512xf32> to vector<1x128xf32>
    %75 = math.tanh %74 : vector<1x128xf32>
    %76 = vector.extract_strided_slice %73 {offsets = [0, 0], sizes = [1, 128], strides = [1, 1]} : vector<1x384xf32> to vector<1x128xf32>
    %77 = vector.extract_strided_slice %73 {offsets = [0, 128], sizes = [1, 128], strides = [1, 1]} : vector<1x384xf32> to vector<1x128xf32>
    %78 = vector.extract_strided_slice %73 {offsets = [0, 256], sizes = [1, 128], strides = [1, 1]} : vector<1x384xf32> to vector<1x128xf32>
    %79 = arith.mulf %77, %58 : vector<1x128xf32>
    %80 = arith.mulf %76, %75 : vector<1x128xf32>
    %81 = arith.addf %79, %80 : vector<1x128xf32>
    %82 = math.tanh %81 : vector<1x128xf32>
    %83 = arith.mulf %78, %82 : vector<1x128xf32>
    %c3 = arith.constant 3 : index
    %84 = memref.load %arg0[%c3] : memref<5xi32, #tpu.memory_space<smem>>
    %85 = arith.index_cast %84 : i32 to index
    %c0_25 = arith.constant 0 : index
    %86 = vector.load %arg3[%85, %c0_25] : memref<8x128xf32, #tpu.memory_space<vmem>>, vector<1x128xf32>
    %cst_26 = arith.constant dense<0.000000e+00> : vector<1x512xf32>
    %87 = tpu.matmul %86, %0, %cst_26 {dimension_numbers = #tpu.dot_dimension_numbers<[1], [0], [0], [1], [0, 0, 1, 1], [], []>} : vector<1x128xf32>, vector<128x512xf32>, vector<1x512xf32> -> vector<1x512xf32>
    %88 = arith.addf %87, %2 : vector<1x512xf32>
    %cst_27 = arith.constant dense<0.000000e+00> : vector<1x512xf32>
    %89 = tpu.matmul %83, %1, %cst_27 {dimension_numbers = #tpu.dot_dimension_numbers<[1], [0], [0], [1], [0, 0, 1, 1], [], []>} : vector<1x128xf32>, vector<128x512xf32>, vector<1x512xf32> -> vector<1x512xf32>
    %90 = arith.addf %88, %89 : vector<1x512xf32>
    %91 = vector.extract_strided_slice %90 {offsets = [0, 0], sizes = [1, 384], strides = [1, 1]} : vector<1x512xf32> to vector<1x384xf32>
    %92 = arith.negf %91 : vector<1x384xf32>
    %93 = math.exp %92 : vector<1x384xf32>
    %cst_28 = arith.constant 1.000000e+00 : f32
    %94 = vector.broadcast %cst_28 : f32 to vector<1x384xf32>
    %95 = arith.addf %94, %93 : vector<1x384xf32>
    %96 = arith.divf %94, %95 : vector<1x384xf32>
    %97 = vector.extract_strided_slice %90 {offsets = [0, 384], sizes = [1, 128], strides = [1, 1]} : vector<1x512xf32> to vector<1x128xf32>
    %98 = math.tanh %97 : vector<1x128xf32>
    %99 = vector.extract_strided_slice %96 {offsets = [0, 0], sizes = [1, 128], strides = [1, 1]} : vector<1x384xf32> to vector<1x128xf32>
    %100 = vector.extract_strided_slice %96 {offsets = [0, 128], sizes = [1, 128], strides = [1, 1]} : vector<1x384xf32> to vector<1x128xf32>
    %101 = vector.extract_strided_slice %96 {offsets = [0, 256], sizes = [1, 128], strides = [1, 1]} : vector<1x384xf32> to vector<1x128xf32>
    %102 = arith.mulf %100, %81 : vector<1x128xf32>
    %103 = arith.mulf %99, %98 : vector<1x128xf32>
    %104 = arith.addf %102, %103 : vector<1x128xf32>
    %105 = math.tanh %104 : vector<1x128xf32>
    %106 = arith.mulf %101, %105 : vector<1x128xf32>
    %c4 = arith.constant 4 : index
    %107 = memref.load %arg0[%c4] : memref<5xi32, #tpu.memory_space<smem>>
    %108 = arith.index_cast %107 : i32 to index
    %c0_29 = arith.constant 0 : index
    %109 = vector.load %arg3[%108, %c0_29] : memref<8x128xf32, #tpu.memory_space<vmem>>, vector<1x128xf32>
    %cst_30 = arith.constant dense<0.000000e+00> : vector<1x512xf32>
    %110 = tpu.matmul %109, %0, %cst_30 {dimension_numbers = #tpu.dot_dimension_numbers<[1], [0], [0], [1], [0, 0, 1, 1], [], []>} : vector<1x128xf32>, vector<128x512xf32>, vector<1x512xf32> -> vector<1x512xf32>
    %111 = arith.addf %110, %2 : vector<1x512xf32>
    %cst_31 = arith.constant dense<0.000000e+00> : vector<1x512xf32>
    %112 = tpu.matmul %106, %1, %cst_31 {dimension_numbers = #tpu.dot_dimension_numbers<[1], [0], [0], [1], [0, 0, 1, 1], [], []>} : vector<1x128xf32>, vector<128x512xf32>, vector<1x512xf32> -> vector<1x512xf32>
    %113 = arith.addf %111, %112 : vector<1x512xf32>
    %114 = vector.extract_strided_slice %113 {offsets = [0, 0], sizes = [1, 384], strides = [1, 1]} : vector<1x512xf32> to vector<1x384xf32>
    %115 = arith.negf %114 : vector<1x384xf32>
    %116 = math.exp %115 : vector<1x384xf32>
    %cst_32 = arith.constant 1.000000e+00 : f32
    %117 = vector.broadcast %cst_32 : f32 to vector<1x384xf32>
    %118 = arith.addf %117, %116 : vector<1x384xf32>
    %119 = arith.divf %117, %118 : vector<1x384xf32>
    %120 = vector.extract_strided_slice %113 {offsets = [0, 384], sizes = [1, 128], strides = [1, 1]} : vector<1x512xf32> to vector<1x128xf32>
    %121 = math.tanh %120 : vector<1x128xf32>
    %122 = vector.extract_strided_slice %119 {offsets = [0, 0], sizes = [1, 128], strides = [1, 1]} : vector<1x384xf32> to vector<1x128xf32>
    %123 = vector.extract_strided_slice %119 {offsets = [0, 128], sizes = [1, 128], strides = [1, 1]} : vector<1x384xf32> to vector<1x128xf32>
    %124 = vector.extract_strided_slice %119 {offsets = [0, 256], sizes = [1, 128], strides = [1, 1]} : vector<1x384xf32> to vector<1x128xf32>
    %125 = arith.mulf %123, %104 : vector<1x128xf32>
    %126 = arith.mulf %122, %121 : vector<1x128xf32>
    %127 = arith.addf %125, %126 : vector<1x128xf32>
    %128 = math.tanh %127 : vector<1x128xf32>
    %129 = arith.mulf %124, %128 : vector<1x128xf32>
    %c0_33 = arith.constant 0 : index
    %c0_34 = arith.constant 0 : index
    %130 = vector.load %arg7[%c0_33, %c0_34] : memref<8x128xf32, #tpu.memory_space<vmem>>, vector<8x128xf32>
    %c0_35 = arith.constant 0 : index
    %c0_36 = arith.constant 0 : index
    %131 = vector.load %arg8[%c0_35, %c0_36] : memref<128x512xf32, #tpu.memory_space<vmem>>, vector<128x512xf32>
    %cst_37 = arith.constant dense<0.000000e+00> : vector<8x512xf32>
    %132 = tpu.matmul %130, %131, %cst_37 {dimension_numbers = #tpu.dot_dimension_numbers<[1], [0], [0], [1], [0, 0, 1, 1], [], []>} : vector<8x128xf32>, vector<128x512xf32>, vector<8x512xf32> -> vector<8x512xf32>
    %c0_38 = arith.constant 0 : index
    %c0_39 = arith.constant 0 : index
    %133 = vector.load %arg10[%c0_38, %c0_39] : memref<1x512xf32, #tpu.memory_space<vmem>>, vector<1x512xf32>
    %134 = vector.broadcast %133 : vector<1x512xf32> to vector<8x512xf32>
    %135 = arith.addf %132, %134 : vector<8x512xf32>
    %c0_40 = arith.constant 0 : index
    %c0_41 = arith.constant 0 : index
    %136 = vector.load %arg14[%c0_40, %c0_41] : memref<8x512xf32, #tpu.memory_space<vmem>>, vector<8x512xf32>
    tpu.vector_store %arg14[%c0_40, %c0_41], %135 {strides = array<i32>} : memref<8x512xf32, #tpu.memory_space<vmem>>, vector<8x512xf32>,
    %c0_42 = arith.constant 0 : index
    %137 = memref.load %arg1[%c0_42] : memref<8xi32, #tpu.memory_space<smem>>
    %c1_43 = arith.constant 1 : index
    %138 = memref.load %arg1[%c1_43] : memref<8xi32, #tpu.memory_space<smem>>
    %c2_44 = arith.constant 2 : index
    %139 = memref.load %arg1[%c2_44] : memref<8xi32, #tpu.memory_space<smem>>
    %c3_45 = arith.constant 3 : index
    %140 = memref.load %arg1[%c3_45] : memref<8xi32, #tpu.memory_space<smem>>
    %c4_46 = arith.constant 4 : index
    %141 = memref.load %arg1[%c4_46] : memref<8xi32, #tpu.memory_space<smem>>
    %c5 = arith.constant 5 : index
    %142 = memref.load %arg1[%c5] : memref<8xi32, #tpu.memory_space<smem>>
    %c6 = arith.constant 6 : index
    %143 = memref.load %arg1[%c6] : memref<8xi32, #tpu.memory_space<smem>>
    %c1_47 = arith.constant 1 : index
    %144 = memref.load %arg2[%c1_47] : memref<8xi32, #tpu.memory_space<smem>>
    %c2_48 = arith.constant 2 : index
    %145 = memref.load %arg2[%c2_48] : memref<8xi32, #tpu.memory_space<smem>>
    %c3_49 = arith.constant 3 : index
    %146 = memref.load %arg2[%c3_49] : memref<8xi32, #tpu.memory_space<smem>>
    %c4_50 = arith.constant 4 : index
    %147 = memref.load %arg2[%c4_50] : memref<8xi32, #tpu.memory_space<smem>>
    %c5_51 = arith.constant 5 : index
    %148 = memref.load %arg2[%c5_51] : memref<8xi32, #tpu.memory_space<smem>>
    %c6_52 = arith.constant 6 : index
    %149 = memref.load %arg2[%c6_52] : memref<8xi32, #tpu.memory_space<smem>>
    %150 = arith.index_cast %137 : i32 to index
    %c0_53 = arith.constant 0 : index
    %151 = vector.load %arg14[%150, %c0_53] : memref<8x512xf32, #tpu.memory_space<vmem>>, vector<1x512xf32>
    %cst_54 = arith.constant dense<0.000000e+00> : vector<1x512xf32>
    %152 = tpu.matmul %129, %3, %cst_54 {dimension_numbers = #tpu.dot_dimension_numbers<[1], [0], [0], [1], [0, 0, 1, 1], [], []>} : vector<1x128xf32>, vector<128x512xf32>, vector<1x512xf32> -> vector<1x512xf32>
    %153 = arith.addf %151, %152 : vector<1x512xf32>
    %154 = vector.extract_strided_slice %153 {offsets = [0, 0], sizes = [1, 384], strides = [1, 1]} : vector<1x512xf32> to vector<1x384xf32>
    %155 = arith.negf %154 : vector<1x384xf32>
    %156 = math.exp %155 : vector<1x384xf32>
    %cst_55 = arith.constant 1.000000e+00 : f32
    %157 = vector.broadcast %cst_55 : f32 to vector<1x384xf32>
    %158 = arith.addf %157, %156 : vector<1x384xf32>
    %159 = arith.divf %157, %158 : vector<1x384xf32>
    %160 = vector.extract_strided_slice %153 {offsets = [0, 384], sizes = [1, 128], strides = [1, 1]} : vector<1x512xf32> to vector<1x128xf32>
    %161 = math.tanh %160 : vector<1x128xf32>
    %162 = vector.extract_strided_slice %159 {offsets = [0, 0], sizes = [1, 128], strides = [1, 1]} : vector<1x384xf32> to vector<1x128xf32>
    %163 = vector.extract_strided_slice %159 {offsets = [0, 128], sizes = [1, 128], strides = [1, 1]} : vector<1x384xf32> to vector<1x128xf32>
    %164 = vector.extract_strided_slice %159 {offsets = [0, 256], sizes = [1, 128], strides = [1, 1]} : vector<1x384xf32> to vector<1x128xf32>
    %165 = arith.mulf %163, %127 : vector<1x128xf32>
    %166 = arith.mulf %162, %161 : vector<1x128xf32>
    %167 = arith.addf %165, %166 : vector<1x128xf32>
    %168 = math.tanh %167 : vector<1x128xf32>
    %169 = arith.mulf %164, %168 : vector<1x128xf32>
    %c1_i32 = arith.constant 1 : i32
    %170 = arith.cmpi eq, %144, %c1_i32 : i32
    %171 = arith.extui %170 : i1 to i32
    %c-2147483648_i32 = arith.constant -2147483648 : i32
    %c0_i32_56 = arith.constant 0 : i32
    %172 = arith.cmpi ne, %171, %c0_i32_56 : i32
    %173 = scf.if %172 -> (i32) {
      scf.yield %138 : i32
    } else {
      %cst_152 = arith.constant dense<0.000000e+00> : vector<1x128xf32>
      %410 = tpu.matmul %169, %4, %cst_152 {dimension_numbers = #tpu.dot_dimension_numbers<[1], [0], [0], [1], [0, 0, 1, 1], [], []>} : vector<1x128xf32>, vector<128x128xf32>, vector<1x128xf32> -> vector<1x128xf32>
      %411 = arith.addf %410, %5 : vector<1x128xf32>
      %412 = tpu.bitcast %411 : vector<1x128xf32> -> vector<1x128xi32>
      %c0_i32_153 = arith.constant 0 : i32
      %413 = vector.broadcast %c0_i32_153 : i32 to vector<1x128xi32>
      %414 = arith.cmpi slt, %412, %413 : vector<1x128xi32>
      %415 = vector.broadcast %c-2147483648_i32 : i32 to vector<1x128xi32>
      %416 = arith.subi %415, %412 : vector<1x128xi32>
      %417 = arith.select %414, %416, %412 : vector<1x128xi1>, vector<1x128xi32>
      %c-8_i32_154 = arith.constant -8 : i32
      %418 = vector.broadcast %c-8_i32_154 : i32 to vector<1x128xi32>
      %419 = arith.andi %417, %418 : vector<1x128xi32>
      %420 = arith.ori %419, %12 : vector<1x128xi32>
      %421 = vector.shape_cast %420 : vector<1x128xi32> to vector<1x1x128xi32>
      %cst_155 = arith.constant dense<-2147483648> : vector<1xi32>
      %422 = vector.multi_reduction <maxsi>, %421, %cst_155 [1, 2] : vector<1x1x128xi32> to vector<1xi32>
      %423 = vector.shape_cast %422 : vector<1xi32> to vector<1x1x1xi32>
      %424 = vector.extract %423[0, 0, 0] : i32 from vector<1x1x1xi32>
      %c7_i32_156 = arith.constant 7 : i32
      %425 = arith.andi %424, %c7_i32_156 : i32
      %c7_i32_157 = arith.constant 7 : i32
      %426 = arith.subi %c7_i32_157, %425 : i32
      scf.yield %426 : i32
    }
    %174 = arith.index_cast %173 : i32 to index
    %c0_57 = arith.constant 0 : index
    %175 = vector.load %arg14[%174, %c0_57] : memref<8x512xf32, #tpu.memory_space<vmem>>, vector<1x512xf32>
    %cst_58 = arith.constant dense<0.000000e+00> : vector<1x128xf32>
    %176 = tpu.matmul %169, %4, %cst_58 {dimension_numbers = #tpu.dot_dimension_numbers<[1], [0], [0], [1], [0, 0, 1, 1], [], []>} : vector<1x128xf32>, vector<128x128xf32>, vector<1x128xf32> -> vector<1x128xf32>
    %177 = arith.addf %176, %5 : vector<1x128xf32>
    %c1_59 = arith.constant 1 : index
    %c0_60 = arith.constant 0 : index
    %178 = vector.load %arg15[%c1_59, %c0_60] : memref<8x128xf32, #tpu.memory_space<vmem>>, vector<1x128xf32>
    tpu.vector_store %arg15[%c1_59, %c0_60], %177 {strides = array<i32>} : memref<8x128xf32, #tpu.memory_space<vmem>>, vector<1x128xf32>,
    %cst_61 = arith.constant dense<0.000000e+00> : vector<1x512xf32>
    %179 = tpu.matmul %169, %3, %cst_61 {dimension_numbers = #tpu.dot_dimension_numbers<[1], [0], [0], [1], [0, 0, 1, 1], [], []>} : vector<1x128xf32>, vector<128x512xf32>, vector<1x512xf32> -> vector<1x512xf32>
    %180 = arith.addf %175, %179 : vector<1x512xf32>
    %181 = vector.extract_strided_slice %180 {offsets = [0, 0], sizes = [1, 384], strides = [1, 1]} : vector<1x512xf32> to vector<1x384xf32>
    %182 = arith.negf %181 : vector<1x384xf32>
    %183 = math.exp %182 : vector<1x384xf32>
    %cst_62 = arith.constant 1.000000e+00 : f32
    %184 = vector.broadcast %cst_62 : f32 to vector<1x384xf32>
    %185 = arith.addf %184, %183 : vector<1x384xf32>
    %186 = arith.divf %184, %185 : vector<1x384xf32>
    %187 = vector.extract_strided_slice %180 {offsets = [0, 384], sizes = [1, 128], strides = [1, 1]} : vector<1x512xf32> to vector<1x128xf32>
    %188 = math.tanh %187 : vector<1x128xf32>
    %189 = vector.extract_strided_slice %186 {offsets = [0, 0], sizes = [1, 128], strides = [1, 1]} : vector<1x384xf32> to vector<1x128xf32>
    %190 = vector.extract_strided_slice %186 {offsets = [0, 128], sizes = [1, 128], strides = [1, 1]} : vector<1x384xf32> to vector<1x128xf32>
    %191 = vector.extract_strided_slice %186 {offsets = [0, 256], sizes = [1, 128], strides = [1, 1]} : vector<1x384xf32> to vector<1x128xf32>
    %192 = arith.mulf %190, %167 : vector<1x128xf32>
    %193 = arith.mulf %189, %188 : vector<1x128xf32>
    %194 = arith.addf %192, %193 : vector<1x128xf32>
    %195 = math.tanh %194 : vector<1x128xf32>
    %196 = arith.mulf %191, %195 : vector<1x128xf32>
    %c1_i32_63 = arith.constant 1 : i32
    %197 = arith.cmpi eq, %145, %c1_i32_63 : i32
    %198 = arith.extui %197 : i1 to i32
    %c-2147483648_i32_64 = arith.constant -2147483648 : i32
    %c0_i32_65 = arith.constant 0 : i32
    %199 = arith.cmpi ne, %198, %c0_i32_65 : i32
    %200 = scf.if %199 -> (i32) {
      scf.yield %139 : i32
    } else {
      %cst_152 = arith.constant dense<0.000000e+00> : vector<1x128xf32>
      %410 = tpu.matmul %196, %4, %cst_152 {dimension_numbers = #tpu.dot_dimension_numbers<[1], [0], [0], [1], [0, 0, 1, 1], [], []>} : vector<1x128xf32>, vector<128x128xf32>, vector<1x128xf32> -> vector<1x128xf32>
      %411 = arith.addf %410, %5 : vector<1x128xf32>
      %412 = tpu.bitcast %411 : vector<1x128xf32> -> vector<1x128xi32>
      %c0_i32_153 = arith.constant 0 : i32
      %413 = vector.broadcast %c0_i32_153 : i32 to vector<1x128xi32>
      %414 = arith.cmpi slt, %412, %413 : vector<1x128xi32>
      %415 = vector.broadcast %c-2147483648_i32_64 : i32 to vector<1x128xi32>
      %416 = arith.subi %415, %412 : vector<1x128xi32>
      %417 = arith.select %414, %416, %412 : vector<1x128xi1>, vector<1x128xi32>
      %c-8_i32_154 = arith.constant -8 : i32
      %418 = vector.broadcast %c-8_i32_154 : i32 to vector<1x128xi32>
      %419 = arith.andi %417, %418 : vector<1x128xi32>
      %420 = arith.ori %419, %12 : vector<1x128xi32>
      %421 = vector.shape_cast %420 : vector<1x128xi32> to vector<1x1x128xi32>
      %cst_155 = arith.constant dense<-2147483648> : vector<1xi32>
      %422 = vector.multi_reduction <maxsi>, %421, %cst_155 [1, 2] : vector<1x1x128xi32> to vector<1xi32>
      %423 = vector.shape_cast %422 : vector<1xi32> to vector<1x1x1xi32>
      %424 = vector.extract %423[0, 0, 0] : i32 from vector<1x1x1xi32>
      %c7_i32_156 = arith.constant 7 : i32
      %425 = arith.andi %424, %c7_i32_156 : i32
      %c7_i32_157 = arith.constant 7 : i32
      %426 = arith.subi %c7_i32_157, %425 : i32
      scf.yield %426 : i32
    }
    %201 = arith.index_cast %200 : i32 to index
    %c0_66 = arith.constant 0 : index
    %202 = vector.load %arg14[%201, %c0_66] : memref<8x512xf32, #tpu.memory_space<vmem>>, vector<1x512xf32>
    %cst_67 = arith.constant dense<0.000000e+00> : vector<1x128xf32>
    %203 = tpu.matmul %196, %4, %cst_67 {dimension_numbers = #tpu.dot_dimension_numbers<[1], [0], [0], [1], [0, 0, 1, 1], [], []>} : vector<1x128xf32>, vector<128x128xf32>, vector<1x128xf32> -> vector<1x128xf32>
    %204 = arith.addf %203, %5 : vector<1x128xf32>
    %c2_68 = arith.constant 2 : index
    %c0_69 = arith.constant 0 : index
    %205 = vector.load %arg15[%c2_68, %c0_69] : memref<8x128xf32, #tpu.memory_space<vmem>>, vector<1x128xf32>
    tpu.vector_store %arg15[%c2_68, %c0_69], %204 {strides = array<i32>} : memref<8x128xf32, #tpu.memory_space<vmem>>, vector<1x128xf32>,
    %cst_70 = arith.constant dense<0.000000e+00> : vector<1x512xf32>
    %206 = tpu.matmul %196, %3, %cst_70 {dimension_numbers = #tpu.dot_dimension_numbers<[1], [0], [0], [1], [0, 0, 1, 1], [], []>} : vector<1x128xf32>, vector<128x512xf32>, vector<1x512xf32> -> vector<1x512xf32>
    %207 = arith.addf %202, %206 : vector<1x512xf32>
    %208 = vector.extract_strided_slice %207 {offsets = [0, 0], sizes = [1, 384], strides = [1, 1]} : vector<1x512xf32> to vector<1x384xf32>
    %209 = arith.negf %208 : vector<1x384xf32>
    %210 = math.exp %209 : vector<1x384xf32>
    %cst_71 = arith.constant 1.000000e+00 : f32
    %211 = vector.broadcast %cst_71 : f32 to vector<1x384xf32>
    %212 = arith.addf %211, %210 : vector<1x384xf32>
    %213 = arith.divf %211, %212 : vector<1x384xf32>
    %214 = vector.extract_strided_slice %207 {offsets = [0, 384], sizes = [1, 128], strides = [1, 1]} : vector<1x512xf32> to vector<1x128xf32>
    %215 = math.tanh %214 : vector<1x128xf32>
    %216 = vector.extract_strided_slice %213 {offsets = [0, 0], sizes = [1, 128], strides = [1, 1]} : vector<1x384xf32> to vector<1x128xf32>
    %217 = vector.extract_strided_slice %213 {offsets = [0, 128], sizes = [1, 128], strides = [1, 1]} : vector<1x384xf32> to vector<1x128xf32>
    %218 = vector.extract_strided_slice %213 {offsets = [0, 256], sizes = [1, 128], strides = [1, 1]} : vector<1x384xf32> to vector<1x128xf32>
    %219 = arith.mulf %217, %194 : vector<1x128xf32>
    %220 = arith.mulf %216, %215 : vector<1x128xf32>
    %221 = arith.addf %219, %220 : vector<1x128xf32>
    %222 = math.tanh %221 : vector<1x128xf32>
    %223 = arith.mulf %218, %222 : vector<1x128xf32>
    %c1_i32_72 = arith.constant 1 : i32
    %224 = arith.cmpi eq, %146, %c1_i32_72 : i32
    %225 = arith.extui %224 : i1 to i32
    %c-2147483648_i32_73 = arith.constant -2147483648 : i32
    %c0_i32_74 = arith.constant 0 : i32
    %226 = arith.cmpi ne, %225, %c0_i32_74 : i32
    %227 = scf.if %226 -> (i32) {
      scf.yield %140 : i32
    } else {
      %cst_152 = arith.constant dense<0.000000e+00> : vector<1x128xf32>
      %410 = tpu.matmul %223, %4, %cst_152 {dimension_numbers = #tpu.dot_dimension_numbers<[1], [0], [0], [1], [0, 0, 1, 1], [], []>} : vector<1x128xf32>, vector<128x128xf32>, vector<1x128xf32> -> vector<1x128xf32>
      %411 = arith.addf %410, %5 : vector<1x128xf32>
      %412 = tpu.bitcast %411 : vector<1x128xf32> -> vector<1x128xi32>
      %c0_i32_153 = arith.constant 0 : i32
      %413 = vector.broadcast %c0_i32_153 : i32 to vector<1x128xi32>
      %414 = arith.cmpi slt, %412, %413 : vector<1x128xi32>
      %415 = vector.broadcast %c-2147483648_i32_73 : i32 to vector<1x128xi32>
      %416 = arith.subi %415, %412 : vector<1x128xi32>
      %417 = arith.select %414, %416, %412 : vector<1x128xi1>, vector<1x128xi32>
      %c-8_i32_154 = arith.constant -8 : i32
      %418 = vector.broadcast %c-8_i32_154 : i32 to vector<1x128xi32>
      %419 = arith.andi %417, %418 : vector<1x128xi32>
      %420 = arith.ori %419, %12 : vector<1x128xi32>
      %421 = vector.shape_cast %420 : vector<1x128xi32> to vector<1x1x128xi32>
      %cst_155 = arith.constant dense<-2147483648> : vector<1xi32>
      %422 = vector.multi_reduction <maxsi>, %421, %cst_155 [1, 2] : vector<1x1x128xi32> to vector<1xi32>
      %423 = vector.shape_cast %422 : vector<1xi32> to vector<1x1x1xi32>
      %424 = vector.extract %423[0, 0, 0] : i32 from vector<1x1x1xi32>
      %c7_i32_156 = arith.constant 7 : i32
      %425 = arith.andi %424, %c7_i32_156 : i32
      %c7_i32_157 = arith.constant 7 : i32
      %426 = arith.subi %c7_i32_157, %425 : i32
      scf.yield %426 : i32
    }
    %228 = arith.index_cast %227 : i32 to index
    %c0_75 = arith.constant 0 : index
    %229 = vector.load %arg14[%228, %c0_75] : memref<8x512xf32, #tpu.memory_space<vmem>>, vector<1x512xf32>
    %cst_76 = arith.constant dense<0.000000e+00> : vector<1x128xf32>
    %230 = tpu.matmul %223, %4, %cst_76 {dimension_numbers = #tpu.dot_dimension_numbers<[1], [0], [0], [1], [0, 0, 1, 1], [], []>} : vector<1x128xf32>, vector<128x128xf32>, vector<1x128xf32> -> vector<1x128xf32>
    %231 = arith.addf %230, %5 : vector<1x128xf32>
    %c3_77 = arith.constant 3 : index
    %c0_78 = arith.constant 0 : index
    %232 = vector.load %arg15[%c3_77, %c0_78] : memref<8x128xf32, #tpu.memory_space<vmem>>, vector<1x128xf32>
    tpu.vector_store %arg15[%c3_77, %c0_78], %231 {strides = array<i32>} : memref<8x128xf32, #tpu.memory_space<vmem>>, vector<1x128xf32>,
    %cst_79 = arith.constant dense<0.000000e+00> : vector<1x512xf32>
    %233 = tpu.matmul %223, %3, %cst_79 {dimension_numbers = #tpu.dot_dimension_numbers<[1], [0], [0], [1], [0, 0, 1, 1], [], []>} : vector<1x128xf32>, vector<128x512xf32>, vector<1x512xf32> -> vector<1x512xf32>
    %234 = arith.addf %229, %233 : vector<1x512xf32>
    %235 = vector.extract_strided_slice %234 {offsets = [0, 0], sizes = [1, 384], strides = [1, 1]} : vector<1x512xf32> to vector<1x384xf32>
    %236 = arith.negf %235 : vector<1x384xf32>
    %237 = math.exp %236 : vector<1x384xf32>
    %cst_80 = arith.constant 1.000000e+00 : f32
    %238 = vector.broadcast %cst_80 : f32 to vector<1x384xf32>
    %239 = arith.addf %238, %237 : vector<1x384xf32>
    %240 = arith.divf %238, %239 : vector<1x384xf32>
    %241 = vector.extract_strided_slice %234 {offsets = [0, 384], sizes = [1, 128], strides = [1, 1]} : vector<1x512xf32> to vector<1x128xf32>
    %242 = math.tanh %241 : vector<1x128xf32>
    %243 = vector.extract_strided_slice %240 {offsets = [0, 0], sizes = [1, 128], strides = [1, 1]} : vector<1x384xf32> to vector<1x128xf32>
    %244 = vector.extract_strided_slice %240 {offsets = [0, 128], sizes = [1, 128], strides = [1, 1]} : vector<1x384xf32> to vector<1x128xf32>
    %245 = vector.extract_strided_slice %240 {offsets = [0, 256], sizes = [1, 128], strides = [1, 1]} : vector<1x384xf32> to vector<1x128xf32>
    %246 = arith.mulf %244, %221 : vector<1x128xf32>
    %247 = arith.mulf %243, %242 : vector<1x128xf32>
    %248 = arith.addf %246, %247 : vector<1x128xf32>
    %249 = math.tanh %248 : vector<1x128xf32>
    %250 = arith.mulf %245, %249 : vector<1x128xf32>
    %c1_i32_81 = arith.constant 1 : i32
    %251 = arith.cmpi eq, %147, %c1_i32_81 : i32
    %252 = arith.extui %251 : i1 to i32
    %c-2147483648_i32_82 = arith.constant -2147483648 : i32
    %c0_i32_83 = arith.constant 0 : i32
    %253 = arith.cmpi ne, %252, %c0_i32_83 : i32
    %254 = scf.if %253 -> (i32) {
      scf.yield %141 : i32
    } else {
      %cst_152 = arith.constant dense<0.000000e+00> : vector<1x128xf32>
      %410 = tpu.matmul %250, %4, %cst_152 {dimension_numbers = #tpu.dot_dimension_numbers<[1], [0], [0], [1], [0, 0, 1, 1], [], []>} : vector<1x128xf32>, vector<128x128xf32>, vector<1x128xf32> -> vector<1x128xf32>
      %411 = arith.addf %410, %5 : vector<1x128xf32>
      %412 = tpu.bitcast %411 : vector<1x128xf32> -> vector<1x128xi32>
      %c0_i32_153 = arith.constant 0 : i32
      %413 = vector.broadcast %c0_i32_153 : i32 to vector<1x128xi32>
      %414 = arith.cmpi slt, %412, %413 : vector<1x128xi32>
      %415 = vector.broadcast %c-2147483648_i32_82 : i32 to vector<1x128xi32>
      %416 = arith.subi %415, %412 : vector<1x128xi32>
      %417 = arith.select %414, %416, %412 : vector<1x128xi1>, vector<1x128xi32>
      %c-8_i32_154 = arith.constant -8 : i32
      %418 = vector.broadcast %c-8_i32_154 : i32 to vector<1x128xi32>
      %419 = arith.andi %417, %418 : vector<1x128xi32>
      %420 = arith.ori %419, %12 : vector<1x128xi32>
      %421 = vector.shape_cast %420 : vector<1x128xi32> to vector<1x1x128xi32>
      %cst_155 = arith.constant dense<-2147483648> : vector<1xi32>
      %422 = vector.multi_reduction <maxsi>, %421, %cst_155 [1, 2] : vector<1x1x128xi32> to vector<1xi32>
      %423 = vector.shape_cast %422 : vector<1xi32> to vector<1x1x1xi32>
      %424 = vector.extract %423[0, 0, 0] : i32 from vector<1x1x1xi32>
      %c7_i32_156 = arith.constant 7 : i32
      %425 = arith.andi %424, %c7_i32_156 : i32
      %c7_i32_157 = arith.constant 7 : i32
      %426 = arith.subi %c7_i32_157, %425 : i32
      scf.yield %426 : i32
    }
    %255 = arith.index_cast %254 : i32 to index
    %c0_84 = arith.constant 0 : index
    %256 = vector.load %arg14[%255, %c0_84] : memref<8x512xf32, #tpu.memory_space<vmem>>, vector<1x512xf32>
    %cst_85 = arith.constant dense<0.000000e+00> : vector<1x128xf32>
    %257 = tpu.matmul %250, %4, %cst_85 {dimension_numbers = #tpu.dot_dimension_numbers<[1], [0], [0], [1], [0, 0, 1, 1], [], []>} : vector<1x128xf32>, vector<128x128xf32>, vector<1x128xf32> -> vector<1x128xf32>
    %258 = arith.addf %257, %5 : vector<1x128xf32>
    %c4_86 = arith.constant 4 : index
    %c0_87 = arith.constant 0 : index
    %259 = vector.load %arg15[%c4_86, %c0_87] : memref<8x128xf32, #tpu.memory_space<vmem>>, vector<1x128xf32>
    tpu.vector_store %arg15[%c4_86, %c0_87], %258 {strides = array<i32>} : memref<8x128xf32, #tpu.memory_space<vmem>>, vector<1x128xf32>,
    %cst_88 = arith.constant dense<0.000000e+00> : vector<1x512xf32>
    %260 = tpu.matmul %250, %3, %cst_88 {dimension_numbers = #tpu.dot_dimension_numbers<[1], [0], [0], [1], [0, 0, 1, 1], [], []>} : vector<1x128xf32>, vector<128x512xf32>, vector<1x512xf32> -> vector<1x512xf32>
    %261 = arith.addf %256, %260 : vector<1x512xf32>
    %262 = vector.extract_strided_slice %261 {offsets = [0, 0], sizes = [1, 384], strides = [1, 1]} : vector<1x512xf32> to vector<1x384xf32>
    %263 = arith.negf %262 : vector<1x384xf32>
    %264 = math.exp %263 : vector<1x384xf32>
    %cst_89 = arith.constant 1.000000e+00 : f32
    %265 = vector.broadcast %cst_89 : f32 to vector<1x384xf32>
    %266 = arith.addf %265, %264 : vector<1x384xf32>
    %267 = arith.divf %265, %266 : vector<1x384xf32>
    %268 = vector.extract_strided_slice %261 {offsets = [0, 384], sizes = [1, 128], strides = [1, 1]} : vector<1x512xf32> to vector<1x128xf32>
    %269 = math.tanh %268 : vector<1x128xf32>
    %270 = vector.extract_strided_slice %267 {offsets = [0, 0], sizes = [1, 128], strides = [1, 1]} : vector<1x384xf32> to vector<1x128xf32>
    %271 = vector.extract_strided_slice %267 {offsets = [0, 128], sizes = [1, 128], strides = [1, 1]} : vector<1x384xf32> to vector<1x128xf32>
    %272 = vector.extract_strided_slice %267 {offsets = [0, 256], sizes = [1, 128], strides = [1, 1]} : vector<1x384xf32> to vector<1x128xf32>
    %273 = arith.mulf %271, %248 : vector<1x128xf32>
    %274 = arith.mulf %270, %269 : vector<1x128xf32>
    %275 = arith.addf %273, %274 : vector<1x128xf32>
    %276 = math.tanh %275 : vector<1x128xf32>
    %277 = arith.mulf %272, %276 : vector<1x128xf32>
    %c1_i32_90 = arith.constant 1 : i32
    %278 = arith.cmpi eq, %148, %c1_i32_90 : i32
    %279 = arith.extui %278 : i1 to i32
    %c-2147483648_i32_91 = arith.constant -2147483648 : i32
    %c0_i32_92 = arith.constant 0 : i32
    %280 = arith.cmpi ne, %279, %c0_i32_92 : i32
    %281 = scf.if %280 -> (i32) {
      scf.yield %142 : i32
    } else {
      %cst_152 = arith.constant dense<0.000000e+00> : vector<1x128xf32>
      %410 = tpu.matmul %277, %4, %cst_152 {dimension_numbers = #tpu.dot_dimension_numbers<[1], [0], [0], [1], [0, 0, 1, 1], [], []>} : vector<1x128xf32>, vector<128x128xf32>, vector<1x128xf32> -> vector<1x128xf32>
      %411 = arith.addf %410, %5 : vector<1x128xf32>
      %412 = tpu.bitcast %411 : vector<1x128xf32> -> vector<1x128xi32>
      %c0_i32_153 = arith.constant 0 : i32
      %413 = vector.broadcast %c0_i32_153 : i32 to vector<1x128xi32>
      %414 = arith.cmpi slt, %412, %413 : vector<1x128xi32>
      %415 = vector.broadcast %c-2147483648_i32_91 : i32 to vector<1x128xi32>
      %416 = arith.subi %415, %412 : vector<1x128xi32>
      %417 = arith.select %414, %416, %412 : vector<1x128xi1>, vector<1x128xi32>
      %c-8_i32_154 = arith.constant -8 : i32
      %418 = vector.broadcast %c-8_i32_154 : i32 to vector<1x128xi32>
      %419 = arith.andi %417, %418 : vector<1x128xi32>
      %420 = arith.ori %419, %12 : vector<1x128xi32>
      %421 = vector.shape_cast %420 : vector<1x128xi32> to vector<1x1x128xi32>
      %cst_155 = arith.constant dense<-2147483648> : vector<1xi32>
      %422 = vector.multi_reduction <maxsi>, %421, %cst_155 [1, 2] : vector<1x1x128xi32> to vector<1xi32>
      %423 = vector.shape_cast %422 : vector<1xi32> to vector<1x1x1xi32>
      %424 = vector.extract %423[0, 0, 0] : i32 from vector<1x1x1xi32>
      %c7_i32_156 = arith.constant 7 : i32
      %425 = arith.andi %424, %c7_i32_156 : i32
      %c7_i32_157 = arith.constant 7 : i32
      %426 = arith.subi %c7_i32_157, %425 : i32
      scf.yield %426 : i32
    }
    %282 = arith.index_cast %281 : i32 to index
    %c0_93 = arith.constant 0 : index
    %283 = vector.load %arg14[%282, %c0_93] : memref<8x512xf32, #tpu.memory_space<vmem>>, vector<1x512xf32>
    %cst_94 = arith.constant dense<0.000000e+00> : vector<1x128xf32>
    %284 = tpu.matmul %277, %4, %cst_94 {dimension_numbers = #tpu.dot_dimension_numbers<[1], [0], [0], [1], [0, 0, 1, 1], [], []>} : vector<1x128xf32>, vector<128x128xf32>, vector<1x128xf32> -> vector<1x128xf32>
    %285 = arith.addf %284, %5 : vector<1x128xf32>
    %c5_95 = arith.constant 5 : index
    %c0_96 = arith.constant 0 : index
    %286 = vector.load %arg15[%c5_95, %c0_96] : memref<8x128xf32, #tpu.memory_space<vmem>>, vector<1x128xf32>
    tpu.vector_store %arg15[%c5_95, %c0_96], %285 {strides = array<i32>} : memref<8x128xf32, #tpu.memory_space<vmem>>, vector<1x128xf32>,
    %cst_97 = arith.constant dense<0.000000e+00> : vector<1x512xf32>
    %287 = tpu.matmul %277, %3, %cst_97 {dimension_numbers = #tpu.dot_dimension_numbers<[1], [0], [0], [1], [0, 0, 1, 1], [], []>} : vector<1x128xf32>, vector<128x512xf32>, vector<1x512xf32> -> vector<1x512xf32>
    %288 = arith.addf %283, %287 : vector<1x512xf32>
    %289 = vector.extract_strided_slice %288 {offsets = [0, 0], sizes = [1, 384], strides = [1, 1]} : vector<1x512xf32> to vector<1x384xf32>
    %290 = arith.negf %289 : vector<1x384xf32>
    %291 = math.exp %290 : vector<1x384xf32>
    %cst_98 = arith.constant 1.000000e+00 : f32
    %292 = vector.broadcast %cst_98 : f32 to vector<1x384xf32>
    %293 = arith.addf %292, %291 : vector<1x384xf32>
    %294 = arith.divf %292, %293 : vector<1x384xf32>
    %295 = vector.extract_strided_slice %288 {offsets = [0, 384], sizes = [1, 128], strides = [1, 1]} : vector<1x512xf32> to vector<1x128xf32>
    %296 = math.tanh %295 : vector<1x128xf32>
    %297 = vector.extract_strided_slice %294 {offsets = [0, 0], sizes = [1, 128], strides = [1, 1]} : vector<1x384xf32> to vector<1x128xf32>
    %298 = vector.extract_strided_slice %294 {offsets = [0, 128], sizes = [1, 128], strides = [1, 1]} : vector<1x384xf32> to vector<1x128xf32>
    %299 = vector.extract_strided_slice %294 {offsets = [0, 256], sizes = [1, 128], strides = [1, 1]} : vector<1x384xf32> to vector<1x128xf32>
    %300 = arith.mulf %298, %275 : vector<1x128xf32>
    %301 = arith.mulf %297, %296 : vector<1x128xf32>
    %302 = arith.addf %300, %301 : vector<1x128xf32>
    %303 = math.tanh %302 : vector<1x128xf32>
    %304 = arith.mulf %299, %303 : vector<1x128xf32>
    %c1_i32_99 = arith.constant 1 : i32
    %305 = arith.cmpi eq, %149, %c1_i32_99 : i32
    %306 = arith.extui %305 : i1 to i32
    %c-2147483648_i32_100 = arith.constant -2147483648 : i32
    %c0_i32_101 = arith.constant 0 : i32
    %307 = arith.cmpi ne, %306, %c0_i32_101 : i32
    %308 = scf.if %307 -> (i32) {
      scf.yield %143 : i32
    } else {
      %cst_152 = arith.constant dense<0.000000e+00> : vector<1x128xf32>
      %410 = tpu.matmul %304, %4, %cst_152 {dimension_numbers = #tpu.dot_dimension_numbers<[1], [0], [0], [1], [0, 0, 1, 1], [], []>} : vector<1x128xf32>, vector<128x128xf32>, vector<1x128xf32> -> vector<1x128xf32>
      %411 = arith.addf %410, %5 : vector<1x128xf32>
      %412 = tpu.bitcast %411 : vector<1x128xf32> -> vector<1x128xi32>
      %c0_i32_153 = arith.constant 0 : i32
      %413 = vector.broadcast %c0_i32_153 : i32 to vector<1x128xi32>
      %414 = arith.cmpi slt, %412, %413 : vector<1x128xi32>
      %415 = vector.broadcast %c-2147483648_i32_100 : i32 to vector<1x128xi32>
      %416 = arith.subi %415, %412 : vector<1x128xi32>
      %417 = arith.select %414, %416, %412 : vector<1x128xi1>, vector<1x128xi32>
      %c-8_i32_154 = arith.constant -8 : i32
      %418 = vector.broadcast %c-8_i32_154 : i32 to vector<1x128xi32>
      %419 = arith.andi %417, %418 : vector<1x128xi32>
      %420 = arith.ori %419, %12 : vector<1x128xi32>
      %421 = vector.shape_cast %420 : vector<1x128xi32> to vector<1x1x128xi32>
      %cst_155 = arith.constant dense<-2147483648> : vector<1xi32>
      %422 = vector.multi_reduction <maxsi>, %421, %cst_155 [1, 2] : vector<1x1x128xi32> to vector<1xi32>
      %423 = vector.shape_cast %422 : vector<1xi32> to vector<1x1x1xi32>
      %424 = vector.extract %423[0, 0, 0] : i32 from vector<1x1x1xi32>
      %c7_i32_156 = arith.constant 7 : i32
      %425 = arith.andi %424, %c7_i32_156 : i32
      %c7_i32_157 = arith.constant 7 : i32
      %426 = arith.subi %c7_i32_157, %425 : i32
      scf.yield %426 : i32
    }
    %309 = arith.index_cast %308 : i32 to index
    %c0_102 = arith.constant 0 : index
    %310 = vector.load %arg14[%309, %c0_102] : memref<8x512xf32, #tpu.memory_space<vmem>>, vector<1x512xf32>
    %cst_103 = arith.constant dense<0.000000e+00> : vector<1x128xf32>
    %311 = tpu.matmul %304, %4, %cst_103 {dimension_numbers = #tpu.dot_dimension_numbers<[1], [0], [0], [1], [0, 0, 1, 1], [], []>} : vector<1x128xf32>, vector<128x128xf32>, vector<1x128xf32> -> vector<1x128xf32>
    %312 = arith.addf %311, %5 : vector<1x128xf32>
    %c6_104 = arith.constant 6 : index
    %c0_105 = arith.constant 0 : index
    %313 = vector.load %arg15[%c6_104, %c0_105] : memref<8x128xf32, #tpu.memory_space<vmem>>, vector<1x128xf32>
    tpu.vector_store %arg15[%c6_104, %c0_105], %312 {strides = array<i32>} : memref<8x128xf32, #tpu.memory_space<vmem>>, vector<1x128xf32>,
    %cst_106 = arith.constant dense<0.000000e+00> : vector<1x512xf32>
    %314 = tpu.matmul %304, %3, %cst_106 {dimension_numbers = #tpu.dot_dimension_numbers<[1], [0], [0], [1], [0, 0, 1, 1], [], []>} : vector<1x128xf32>, vector<128x512xf32>, vector<1x512xf32> -> vector<1x512xf32>
    %315 = arith.addf %310, %314 : vector<1x512xf32>
    %316 = vector.extract_strided_slice %315 {offsets = [0, 0], sizes = [1, 384], strides = [1, 1]} : vector<1x512xf32> to vector<1x384xf32>
    %317 = arith.negf %316 : vector<1x384xf32>
    %318 = math.exp %317 : vector<1x384xf32>
    %cst_107 = arith.constant 1.000000e+00 : f32
    %319 = vector.broadcast %cst_107 : f32 to vector<1x384xf32>
    %320 = arith.addf %319, %318 : vector<1x384xf32>
    %321 = arith.divf %319, %320 : vector<1x384xf32>
    %322 = vector.extract_strided_slice %315 {offsets = [0, 384], sizes = [1, 128], strides = [1, 1]} : vector<1x512xf32> to vector<1x128xf32>
    %323 = math.tanh %322 : vector<1x128xf32>
    %324 = vector.extract_strided_slice %321 {offsets = [0, 0], sizes = [1, 128], strides = [1, 1]} : vector<1x384xf32> to vector<1x128xf32>
    %325 = vector.extract_strided_slice %321 {offsets = [0, 128], sizes = [1, 128], strides = [1, 1]} : vector<1x384xf32> to vector<1x128xf32>
    %326 = vector.extract_strided_slice %321 {offsets = [0, 256], sizes = [1, 128], strides = [1, 1]} : vector<1x384xf32> to vector<1x128xf32>
    %327 = arith.mulf %325, %302 : vector<1x128xf32>
    %328 = arith.mulf %324, %323 : vector<1x128xf32>
    %329 = arith.addf %327, %328 : vector<1x128xf32>
    %330 = math.tanh %329 : vector<1x128xf32>
    %331 = arith.mulf %326, %330 : vector<1x128xf32>
    %cst_108 = arith.constant dense<0.000000e+00> : vector<1x128xf32>
    %332 = tpu.matmul %331, %4, %cst_108 {dimension_numbers = #tpu.dot_dimension_numbers<[1], [0], [0], [1], [0, 0, 1, 1], [], []>} : vector<1x128xf32>, vector<128x128xf32>, vector<1x128xf32> -> vector<1x128xf32>
    %333 = arith.addf %332, %5 : vector<1x128xf32>
    %c7 = arith.constant 7 : index
    %c0_109 = arith.constant 0 : index
    %334 = vector.load %arg15[%c7, %c0_109] : memref<8x128xf32, #tpu.memory_space<vmem>>, vector<1x128xf32>
    tpu.vector_store %arg15[%c7, %c0_109], %333 {strides = array<i32>} : memref<8x128xf32, #tpu.memory_space<vmem>>, vector<1x128xf32>,
    %c0_110 = arith.constant 0 : index
    %c0_111 = arith.constant 0 : index
    %335 = vector.load %arg15[%c0_110, %c0_111] : memref<8x128xf32, #tpu.memory_space<vmem>>, vector<8x128xf32>
    %336 = tpu.bitcast %335 : vector<8x128xf32> -> vector<8x128xi32>
    %c0_i32_112 = arith.constant 0 : i32
    %337 = vector.broadcast %c0_i32_112 : i32 to vector<8x128xi32>
    %338 = arith.cmpi slt, %336, %337 : vector<8x128xi32>
    %c-2147483648_i32_113 = arith.constant -2147483648 : i32
    %339 = vector.broadcast %c-2147483648_i32_113 : i32 to vector<8x128xi32>
    %340 = arith.subi %339, %336 : vector<8x128xi32>
    %341 = arith.select %338, %340, %336 : vector<8x128xi1>, vector<8x128xi32>
    %c-8_i32 = arith.constant -8 : i32
    %342 = vector.broadcast %c-8_i32 : i32 to vector<8x128xi32>
    %343 = arith.andi %341, %342 : vector<8x128xi32>
    %344 = vector.broadcast %12 : vector<1x128xi32> to vector<8x128xi32>
    %345 = arith.ori %343, %344 : vector<8x128xi32>
    %cst_114 = arith.constant 0.000000e+00 : f32
    %c0_115 = arith.constant 0 : index
    %c0_116 = arith.constant 0 : index
    %346 = memref.load %arg13[%c0_115, %c0_116] : memref<1x8xf32, #tpu.memory_space<smem>>
    memref.store %cst_114, %arg13[%c0_115, %c0_116] : memref<1x8xf32, #tpu.memory_space<smem>>
    %347 = vector.extract_strided_slice %345 {offsets = [1, 0], sizes = [1, 128], strides = [1, 1]} : vector<8x128xi32> to vector<1x128xi32>
    %348 = vector.shape_cast %347 : vector<1x128xi32> to vector<1x1x128xi32>
    %cst_117 = arith.constant dense<-2147483648> : vector<1xi32>
    %349 = vector.multi_reduction <maxsi>, %348, %cst_117 [1, 2] : vector<1x1x128xi32> to vector<1xi32>
    %350 = vector.shape_cast %349 : vector<1xi32> to vector<1x1x1xi32>
    %351 = vector.extract %350[0, 0, 0] : i32 from vector<1x1x1xi32>
    %c7_i32_118 = arith.constant 7 : i32
    %352 = arith.andi %351, %c7_i32_118 : i32
    %c7_i32_119 = arith.constant 7 : i32
    %353 = arith.subi %c7_i32_119, %352 : i32
    %354 = arith.sitofp %353 : i32 to f32
    %c0_120 = arith.constant 0 : index
    %c1_121 = arith.constant 1 : index
    %355 = memref.load %arg13[%c0_120, %c1_121] : memref<1x8xf32, #tpu.memory_space<smem>>
    memref.store %354, %arg13[%c0_120, %c1_121] : memref<1x8xf32, #tpu.memory_space<smem>>
    %356 = vector.extract_strided_slice %345 {offsets = [2, 0], sizes = [1, 128], strides = [1, 1]} : vector<8x128xi32> to vector<1x128xi32>
    %357 = vector.shape_cast %356 : vector<1x128xi32> to vector<1x1x128xi32>
    %cst_122 = arith.constant dense<-2147483648> : vector<1xi32>
    %358 = vector.multi_reduction <maxsi>, %357, %cst_122 [1, 2] : vector<1x1x128xi32> to vector<1xi32>
    %359 = vector.shape_cast %358 : vector<1xi32> to vector<1x1x1xi32>
    %360 = vector.extract %359[0, 0, 0] : i32 from vector<1x1x1xi32>
    %c7_i32_123 = arith.constant 7 : i32
    %361 = arith.andi %360, %c7_i32_123 : i32
    %c7_i32_124 = arith.constant 7 : i32
    %362 = arith.subi %c7_i32_124, %361 : i32
    %363 = arith.sitofp %362 : i32 to f32
    %c0_125 = arith.constant 0 : index
    %c2_126 = arith.constant 2 : index
    %364 = memref.load %arg13[%c0_125, %c2_126] : memref<1x8xf32, #tpu.memory_space<smem>>
    memref.store %363, %arg13[%c0_125, %c2_126] : memref<1x8xf32, #tpu.memory_space<smem>>
    %365 = vector.extract_strided_slice %345 {offsets = [3, 0], sizes = [1, 128], strides = [1, 1]} : vector<8x128xi32> to vector<1x128xi32>
    %366 = vector.shape_cast %365 : vector<1x128xi32> to vector<1x1x128xi32>
    %cst_127 = arith.constant dense<-2147483648> : vector<1xi32>
    %367 = vector.multi_reduction <maxsi>, %366, %cst_127 [1, 2] : vector<1x1x128xi32> to vector<1xi32>
    %368 = vector.shape_cast %367 : vector<1xi32> to vector<1x1x1xi32>
    %369 = vector.extract %368[0, 0, 0] : i32 from vector<1x1x1xi32>
    %c7_i32_128 = arith.constant 7 : i32
    %370 = arith.andi %369, %c7_i32_128 : i32
    %c7_i32_129 = arith.constant 7 : i32
    %371 = arith.subi %c7_i32_129, %370 : i32
    %372 = arith.sitofp %371 : i32 to f32
    %c0_130 = arith.constant 0 : index
    %c3_131 = arith.constant 3 : index
    %373 = memref.load %arg13[%c0_130, %c3_131] : memref<1x8xf32, #tpu.memory_space<smem>>
    memref.store %372, %arg13[%c0_130, %c3_131] : memref<1x8xf32, #tpu.memory_space<smem>>
    %374 = vector.extract_strided_slice %345 {offsets = [4, 0], sizes = [1, 128], strides = [1, 1]} : vector<8x128xi32> to vector<1x128xi32>
    %375 = vector.shape_cast %374 : vector<1x128xi32> to vector<1x1x128xi32>
    %cst_132 = arith.constant dense<-2147483648> : vector<1xi32>
    %376 = vector.multi_reduction <maxsi>, %375, %cst_132 [1, 2] : vector<1x1x128xi32> to vector<1xi32>
    %377 = vector.shape_cast %376 : vector<1xi32> to vector<1x1x1xi32>
    %378 = vector.extract %377[0, 0, 0] : i32 from vector<1x1x1xi32>
    %c7_i32_133 = arith.constant 7 : i32
    %379 = arith.andi %378, %c7_i32_133 : i32
    %c7_i32_134 = arith.constant 7 : i32
    %380 = arith.subi %c7_i32_134, %379 : i32
    %381 = arith.sitofp %380 : i32 to f32
    %c0_135 = arith.constant 0 : index
    %c4_136 = arith.constant 4 : index
    %382 = memref.load %arg13[%c0_135, %c4_136] : memref<1x8xf32, #tpu.memory_space<smem>>
    memref.store %381, %arg13[%c0_135, %c4_136] : memref<1x8xf32, #tpu.memory_space<smem>>
    %383 = vector.extract_strided_slice %345 {offsets = [5, 0], sizes = [1, 128], strides = [1, 1]} : vector<8x128xi32> to vector<1x128xi32>
    %384 = vector.shape_cast %383 : vector<1x128xi32> to vector<1x1x128xi32>
    %cst_137 = arith.constant dense<-2147483648> : vector<1xi32>
    %385 = vector.multi_reduction <maxsi>, %384, %cst_137 [1, 2] : vector<1x1x128xi32> to vector<1xi32>
    %386 = vector.shape_cast %385 : vector<1xi32> to vector<1x1x1xi32>
    %387 = vector.extract %386[0, 0, 0] : i32 from vector<1x1x1xi32>
    %c7_i32_138 = arith.constant 7 : i32
    %388 = arith.andi %387, %c7_i32_138 : i32
    %c7_i32_139 = arith.constant 7 : i32
    %389 = arith.subi %c7_i32_139, %388 : i32
    %390 = arith.sitofp %389 : i32 to f32
    %c0_140 = arith.constant 0 : index
    %c5_141 = arith.constant 5 : index
    %391 = memref.load %arg13[%c0_140, %c5_141] : memref<1x8xf32, #tpu.memory_space<smem>>
    memref.store %390, %arg13[%c0_140, %c5_141] : memref<1x8xf32, #tpu.memory_space<smem>>
    %392 = vector.extract_strided_slice %345 {offsets = [6, 0], sizes = [1, 128], strides = [1, 1]} : vector<8x128xi32> to vector<1x128xi32>
    %393 = vector.shape_cast %392 : vector<1x128xi32> to vector<1x1x128xi32>
    %cst_142 = arith.constant dense<-2147483648> : vector<1xi32>
    %394 = vector.multi_reduction <maxsi>, %393, %cst_142 [1, 2] : vector<1x1x128xi32> to vector<1xi32>
    %395 = vector.shape_cast %394 : vector<1xi32> to vector<1x1x1xi32>
    %396 = vector.extract %395[0, 0, 0] : i32 from vector<1x1x1xi32>
    %c7_i32_143 = arith.constant 7 : i32
    %397 = arith.andi %396, %c7_i32_143 : i32
    %c7_i32_144 = arith.constant 7 : i32
    %398 = arith.subi %c7_i32_144, %397 : i32
    %399 = arith.sitofp %398 : i32 to f32
    %c0_145 = arith.constant 0 : index
    %c6_146 = arith.constant 6 : index
    %400 = memref.load %arg13[%c0_145, %c6_146] : memref<1x8xf32, #tpu.memory_space<smem>>
    memref.store %399, %arg13[%c0_145, %c6_146] : memref<1x8xf32, #tpu.memory_space<smem>>
    %401 = vector.extract_strided_slice %345 {offsets = [7, 0], sizes = [1, 128], strides = [1, 1]} : vector<8x128xi32> to vector<1x128xi32>
    %402 = vector.shape_cast %401 : vector<1x128xi32> to vector<1x1x128xi32>
    %cst_147 = arith.constant dense<-2147483648> : vector<1xi32>
    %403 = vector.multi_reduction <maxsi>, %402, %cst_147 [1, 2] : vector<1x1x128xi32> to vector<1xi32>
    %404 = vector.shape_cast %403 : vector<1xi32> to vector<1x1x1xi32>
    %405 = vector.extract %404[0, 0, 0] : i32 from vector<1x1x1xi32>
    %c7_i32_148 = arith.constant 7 : i32
    %406 = arith.andi %405, %c7_i32_148 : i32
    %c7_i32_149 = arith.constant 7 : i32
    %407 = arith.subi %c7_i32_149, %406 : i32
    %408 = arith.sitofp %407 : i32 to f32
    %c0_150 = arith.constant 0 : index
    %c7_151 = arith.constant 7 : index
    %409 = memref.load %arg13[%c0_150, %c7_151] : memref<1x8xf32, #tpu.memory_space<smem>>
    memref.store %408, %arg13[%c0_150, %c7_151] : memref<1x8xf32, #tpu.memory_space<smem>>
    return
  }
}

</mosaic_0001>

<llo_original>
// kernel: tpu_custom_call.1
$region0: #{tpu_custom_call.1}
  #allocation0 [shape = 'u32[]', space=smem, size = 0x4, offset = 0x4, fixed_abs, tag = 'smem constant byte address 0x4 - core index']
  #allocation1 [shape = 'u32[72,128]{1,0:T(1,128)}', space=vmem, size = 0x9000, scoped, tag = 'internal scratch']
  #allocation2 [shape = 'f32[8,512]{1,0:T(8,128)}', space=vmem, size = 0x4000, scoped, tag = 'scratch operand']
  #allocation3 [shape = 'f32[8,128]{1,0:T(8,128)}', space=vmem, size = 0x1000, scoped, tag = 'scratch operand']
  %s0 = inlined_call_operand.hbm [shape: s32[5], index: 0, kind: input, shape index: {}]
  %s1 = inlined_call_operand.hbm [shape: s32[8], index: 1, kind: input, shape index: {}]
  %s2 = inlined_call_operand.hbm [shape: s32[8], index: 2, kind: input, shape index: {}]
  %s3 = inlined_call_operand.hbm [shape: f32[8,128], index: 3, kind: input, shape index: {}]
  %s4 = inlined_call_operand.hbm [shape: f32[128,512], index: 4, kind: input, shape index: {}]
  %s5 = inlined_call_operand.hbm [shape: f32[128,512], index: 5, kind: input, shape index: {}]
  %s6 = inlined_call_operand.vmem [shape: f32[1,512], index: 6, kind: input, shape index: {}]
  %s7 = inlined_call_operand.hbm [shape: f32[8,128], index: 7, kind: input, shape index: {}]
  %s8 = inlined_call_operand.hbm [shape: f32[128,512], index: 8, kind: input, shape index: {}]
  %s9 = inlined_call_operand.hbm [shape: f32[128,512], index: 9, kind: input, shape index: {}]
  %s10 = inlined_call_operand.vmem [shape: f32[1,512], index: 10, kind: input, shape index: {}]
  %s11 = inlined_call_operand.hbm [shape: f32[128,128], index: 11, kind: input, shape index: {}]
  %s12 = inlined_call_operand.vmem [shape: f32[1,128], index: 12, kind: input, shape index: {}]
  %s13 = inlined_call_operand.hbm [shape: f32[1,8], index: 13, kind: output, shape index: {}]
  %s14 = sld [smem:[#allocation0]]
  $region150: #{tpu_custom_call.1} parent=0
    _
  %s16 = ssub.s32 1, %s14
  %s17 = scalar_select 0, %s16, %s14
  $region1: #{tpu_custom_call.1} parent=0
    #allocation4 [shape = 'u8[512]{0}', space=smem, size = 0x200, scoped, tag = 'input window, operand 0, single buffered']
    #allocation5 [shape = 's32[1]{0}', space=sflag, size = 0x4, scoped, tag = 'scoped memory for tpu_custom_call.1']
    #allocation6 [shape = 's32[1]{0}', space=sflag, size = 0x4, scoped, tag = 'scoped memory for tpu_custom_call.1']
    #allocation7 [shape = 's32[1]{0}', space=sflag, size = 0x4, scoped, tag = 'scoped memory for tpu_custom_call.1']
    #allocation8 [shape = 'u8[512]{0}', space=smem, size = 0x200, scoped, tag = 'input window, operand 1, single buffered']
    #allocation9 [shape = 's32[1]{0}', space=sflag, size = 0x4, scoped, tag = 'scoped memory for tpu_custom_call.1']
    #allocation10 [shape = 'u8[512]{0}', space=smem, size = 0x200, scoped, tag = 'input window, operand 2, single buffered']
    #allocation11 [shape = 'u8[4096]{0}', space=vmem, size = 0x1000, scoped, tag = 'input window, operand 3, single buffered']
    #allocation12 [shape = 'u8[262144]{0}', space=vmem, size = 0x40000, scoped, tag = 'input window, operand 4, single buffered']
    #allocation13 [shape = 's32[1]{0}', space=sflag, size = 0x4, scoped, tag = 'scoped memory for tpu_custom_call.1']
    #allocation14 [shape = 'u8[262144]{0}', space=vmem, size = 0x40000, scoped, tag = 'input window, operand 5, single buffered']
    #allocation15 [shape = 'u8[4096]{0}', space=vmem, size = 0x1000, scoped, tag = 'input window, operand 7, single buffered']
    #allocation16 [shape = 's32[1]{0}', space=sflag, size = 0x4, scoped, tag = 'scoped memory for tpu_custom_call.1']
    #allocation17 [shape = 'u8[262144]{0}', space=vmem, size = 0x40000, scoped, tag = 'input window, operand 8, single buffered']
    #allocation18 [shape = 'u8[262144]{0}', space=vmem, size = 0x40000, scoped, tag = 'input window, operand 9, single buffered']
    #allocation19 [shape = 's32[1]{0}', space=sflag, size = 0x4, scoped, tag = 'scoped memory for tpu_custom_call.1']
    #allocation20 [shape = 'u8[65536]{0}', space=vmem, size = 0x10000, scoped, tag = 'input window, operand 11, single buffered']
    #allocation21 [shape = 'u8[512]{0}', space=smem, size = 0x200, scoped, tag = 'output window, operand 0, single buffered']
    %18 = vsyncpa [#allocation6], 0
    %19 = vsyncpa [#allocation9], 0
    %20 = vsyncpa [#allocation5], 0
    %21 = vsyncpa [#allocation13], 0
    %22 = vsyncpa [#allocation16], 0
    %23 = vsyncpa [#allocation19], 0
    %24 = vsyncpa [#allocation7], 0
    // Predicated region
    $region2: #{tpu_custom_call.1} parent=1 // pred_check
      _
    $region3: #{tpu_custom_call.1} parent=1 // pred_check_branch
      %26 = sbr.rel (0) target = $region5
    $region4: #{tpu_custom_call.1} parent=1 // pred_region
      %28 = vsyncadd [#allocation6], 0
      %s30 = sshll.u32 %s0, 4
      %s31 = int_to_ptr.hbm [resolvable:$true] %s30
      %33 = dma.hbm_to_smem %s31, 16, [#allocation4], [#allocation6]
    $region5: #{tpu_custom_call.1} parent=1 // pred_fallthru
      _
    // Predicated region
    $region6: #{tpu_custom_call.1} parent=1 // pred_check
      _
    $region7: #{tpu_custom_call.1} parent=1 // pred_check_branch
      %35 = sbr.rel (0) target = $region9
    $region8: #{tpu_custom_call.1} parent=1 // pred_region
      %37 = vsyncadd [#allocation9], 0
      %s39 = sshll.u32 %s1, 4
      %s40 = int_to_ptr.hbm [resolvable:$true] %s39
      %42 = dma.hbm_to_smem %s40, 16, [#allocation8], [#allocation9]
    $region9: #{tpu_custom_call.1} parent=1 // pred_fallthru
      _
    // Predicated region
    $region10: #{tpu_custom_call.1} parent=1 // pred_check
      _
    $region11: #{tpu_custom_call.1} parent=1 // pred_check_branch
      %44 = sbr.rel (0) target = $region13
    $region12: #{tpu_custom_call.1} parent=1 // pred_region
      %46 = vsyncadd [#allocation9], 0
      %s48 = sshll.u32 %s2, 4
      %s49 = int_to_ptr.hbm [resolvable:$true] %s48
      %51 = dma.hbm_to_smem %s49, 16, [#allocation10], [#allocation9]
    $region13: #{tpu_custom_call.1} parent=1 // pred_fallthru
      _
    // Predicated region
    $region14: #{tpu_custom_call.1} parent=1 // pred_check
      _
    $region15: #{tpu_custom_call.1} parent=1 // pred_check_branch
      %53 = sbr.rel (0) target = $region17
    $region16: #{tpu_custom_call.1} parent=1 // pred_region
      %55 = vsyncadd [#allocation5], 0
      %s57 = sshll.u32 %s3, 4
      %s58 = int_to_ptr.hbm [resolvable:$true] %s57
      %s59 = sshll.u32 [#allocation11], 4
      %s60 = int_to_ptr.vmem [resolvable:$true] %s59
      %62 = dma.hbm_to_vmem [thread:$0]  %s58, 128, %s60, [#allocation5]
    $region17: #{tpu_custom_call.1} parent=1 // pred_fallthru
      _
    // Predicated region
    $region18: #{tpu_custom_call.1} parent=1 // pred_check
      _
    $region19: #{tpu_custom_call.1} parent=1 // pred_check_branch
      %64 = sbr.rel (0) target = $region21
    $region20: #{tpu_custom_call.1} parent=1 // pred_region
      %66 = vsyncadd [#allocation13], 0
      %s67 = sshll.u32 %s4, 4
      %s68 = int_to_ptr.hbm [resolvable:$true] %s67
      %s69 = sshll.u32 [#allocation12], 4
      %s70 = int_to_ptr.vmem [resolvable:$true] %s69
      %75 = dma.hbm_to_vmem [thread:$0]  %s68, 8192, %s70, [#allocation13], 512, 512, 32
    $region21: #{tpu_custom_call.1} parent=1 // pred_fallthru
      _
    // Predicated region
    $region22: #{tpu_custom_call.1} parent=1 // pred_check
      _
    $region23: #{tpu_custom_call.1} parent=1 // pred_check_branch
      %77 = sbr.rel (0) target = $region25
    $region24: #{tpu_custom_call.1} parent=1 // pred_region
      %79 = vsyncadd [#allocation13], 0
      %s80 = sshll.u32 %s5, 4
      %s81 = int_to_ptr.hbm [resolvable:$true] %s80
      %s82 = sshll.u32 [#allocation14], 4
      %s83 = int_to_ptr.vmem [resolvable:$true] %s82
      %88 = dma.hbm_to_vmem [thread:$0]  %s81, 8192, %s83, [#allocation13], 512, 512, 32
    $region25: #{tpu_custom_call.1} parent=1 // pred_fallthru
      _
    // Predicated region
    $region26: #{tpu_custom_call.1} parent=1 // pred_check
      _
    $region27: #{tpu_custom_call.1} parent=1 // pred_check_branch
      %90 = sbr.rel (0) target = $region29
    $region28: #{tpu_custom_call.1} parent=1 // pred_region
      _
    $region29: #{tpu_custom_call.1} parent=1 // pred_fallthru
      _
    // Predicated region
    $region30: #{tpu_custom_call.1} parent=1 // pred_check
      _
    $region31: #{tpu_custom_call.1} parent=1 // pred_check_branch
      %92 = sbr.rel (0) target = $region33
    $region32: #{tpu_custom_call.1} parent=1 // pred_region
      %94 = vsyncadd [#allocation16], 0
      %s96 = sshll.u32 %s7, 4
      %s97 = int_to_ptr.hbm [resolvable:$true] %s96
      %s98 = sshll.u32 [#allocation15], 4
      %s99 = int_to_ptr.vmem [resolvable:$true] %s98
      %101 = dma.hbm_to_vmem [thread:$0]  %s97, 128, %s99, [#allocation16]
    $region33: #{tpu_custom_call.1} parent=1 // pred_fallthru
      _
    // Predicated region
    $region34: #{tpu_custom_call.1} parent=1 // pred_check
      _
    $region35: #{tpu_custom_call.1} parent=1 // pred_check_branch
      %103 = sbr.rel (0) target = $region37
    $region36: #{tpu_custom_call.1} parent=1 // pred_region
      %105 = vsyncadd [#allocation16], 0
      %s106 = sshll.u32 %s8, 4
      %s107 = int_to_ptr.hbm [resolvable:$true] %s106
      %s108 = sshll.u32 [#allocation17], 4
      %s109 = int_to_ptr.vmem [resolvable:$true] %s108
      %114 = dma.hbm_to_vmem [thread:$0]  %s107, 8192, %s109, [#allocation16], 512, 512, 32
    $region37: #{tpu_custom_call.1} parent=1 // pred_fallthru
      _
    // Predicated region
    $region38: #{tpu_custom_call.1} parent=1 // pred_check
      _
    $region39: #{tpu_custom_call.1} parent=1 // pred_check_branch
      %116 = sbr.rel (0) target = $region41
    $region40: #{tpu_custom_call.1} parent=1 // pred_region
      %118 = vsyncadd [#allocation19], 0
      %s119 = sshll.u32 %s9, 4
      %s120 = int_to_ptr.hbm [resolvable:$true] %s119
      %s121 = sshll.u32 [#allocation18], 4
      %s122 = int_to_ptr.vmem [resolvable:$true] %s121
      %127 = dma.hbm_to_vmem [thread:$0]  %s120, 8192, %s122, [#allocation19], 512, 512, 32
    $region41: #{tpu_custom_call.1} parent=1 // pred_fallthru
      _
    // Predicated region
    $region42: #{tpu_custom_call.1} parent=1 // pred_check
      _
    $region43: #{tpu_custom_call.1} parent=1 // pred_check_branch
      %129 = sbr.rel (0) target = $region45
    $region44: #{tpu_custom_call.1} parent=1 // pred_region
      _
    $region45: #{tpu_custom_call.1} parent=1 // pred_fallthru
      _
    // Predicated region
    $region46: #{tpu_custom_call.1} parent=1 // pred_check
      _
    $region47: #{tpu_custom_call.1} parent=1 // pred_check_branch
      %131 = sbr.rel (0) target = $region49
    $region48: #{tpu_custom_call.1} parent=1 // pred_region
      %133 = vsyncadd [#allocation19], 0
      %s134 = sshll.u32 %s11, 4
      %s135 = int_to_ptr.hbm [resolvable:$true] %s134
      %s136 = sshll.u32 [#allocation20], 4
      %s137 = int_to_ptr.vmem [resolvable:$true] %s136
      %142 = dma.hbm_to_vmem [thread:$0]  %s135, 2048, %s137, [#allocation19], 128, 128, 8
    $region49: #{tpu_custom_call.1} parent=1 // pred_fallthru
      _
    // Predicated region
    $region50: #{tpu_custom_call.1} parent=1 // pred_check
      _
    $region51: #{tpu_custom_call.1} parent=1 // pred_check_branch
      %144 = sbr.rel (0) target = $region53
    $region52: #{tpu_custom_call.1} parent=1 // pred_region
      _
    $region53: #{tpu_custom_call.1} parent=1 // pred_fallthru
      _
    // Predicated region
    $region54: #{tpu_custom_call.1} parent=1 // pred_check
      _
    $region55: #{tpu_custom_call.1} parent=1 // pred_check_branch
      %146 = sbr.rel (0) target = $region57
    $region56: #{tpu_custom_call.1} parent=1 // pred_region
      %148 = dma.done [#allocation6], 16
    $region57: #{tpu_custom_call.1} parent=1 // pred_fallthru
      _
    // Predicated region
    $region58: #{tpu_custom_call.1} parent=1 // pred_check
      _
    $region59: #{tpu_custom_call.1} parent=1 // pred_check_branch
      %150 = sbr.rel (0) target = $region61
    $region60: #{tpu_custom_call.1} parent=1 // pred_region
      %152 = dma.done [#allocation9], 16
    $region61: #{tpu_custom_call.1} parent=1 // pred_fallthru
      _
    // Predicated region
    $region62: #{tpu_custom_call.1} parent=1 // pred_check
      _
    $region63: #{tpu_custom_call.1} parent=1 // pred_check_branch
      %154 = sbr.rel (0) target = $region65
    $region64: #{tpu_custom_call.1} parent=1 // pred_region
      %156 = dma.done [#allocation9], 16
    $region65: #{tpu_custom_call.1} parent=1 // pred_fallthru
      _
    // Predicated region
    $region66: #{tpu_custom_call.1} parent=1 // pred_check
      _
    $region67: #{tpu_custom_call.1} parent=1 // pred_check_branch
      %158 = sbr.rel (0) target = $region69
    $region68: #{tpu_custom_call.1} parent=1 // pred_region
      %160 = dma.done [#allocation5], 128
    $region69: #{tpu_custom_call.1} parent=1 // pred_fallthru
      _
    // Predicated region
    $region70: #{tpu_custom_call.1} parent=1 // pred_check
      _
    $region71: #{tpu_custom_call.1} parent=1 // pred_check_branch
      %162 = sbr.rel (0) target = $region73
    $region72: #{tpu_custom_call.1} parent=1 // pred_region
      %164 = dma.done [#allocation13], 8192
    $region73: #{tpu_custom_call.1} parent=1 // pred_fallthru
      _
    // Predicated region
    $region74: #{tpu_custom_call.1} parent=1 // pred_check
      _
    $region75: #{tpu_custom_call.1} parent=1 // pred_check_branch
      %166 = sbr.rel (0) target = $region77
    $region76: #{tpu_custom_call.1} parent=1 // pred_region
      %168 = dma.done [#allocation13], 8192
    $region77: #{tpu_custom_call.1} parent=1 // pred_fallthru
      _
    // Predicated region
    $region78: #{tpu_custom_call.1} parent=1 // pred_check
      _
    $region79: #{tpu_custom_call.1} parent=1 // pred_check_branch
      %170 = sbr.rel (0) target = $region81
    $region80: #{tpu_custom_call.1} parent=1 // pred_region
      %172 = dma.done [#allocation16], 128
    $region81: #{tpu_custom_call.1} parent=1 // pred_fallthru
      _
    // Predicated region
    $region82: #{tpu_custom_call.1} parent=1 // pred_check
      _
    $region83: #{tpu_custom_call.1} parent=1 // pred_check_branch
      %174 = sbr.rel (0) target = $region85
    $region84: #{tpu_custom_call.1} parent=1 // pred_region
      %176 = dma.done [#allocation16], 8192
    $region85: #{tpu_custom_call.1} parent=1 // pred_fallthru
      _
    // Predicated region
    $region86: #{tpu_custom_call.1} parent=1 // pred_check
      _
    $region87: #{tpu_custom_call.1} parent=1 // pred_check_branch
      %178 = sbr.rel (0) target = $region89
    $region88: #{tpu_custom_call.1} parent=1 // pred_region
      %180 = dma.done [#allocation19], 8192
    $region89: #{tpu_custom_call.1} parent=1 // pred_fallthru
      _
    // Predicated region
    $region90: #{tpu_custom_call.1} parent=1 // pred_check
      _
    $region91: #{tpu_custom_call.1} parent=1 // pred_check_branch
      %182 = sbr.rel (0) target = $region93
    $region92: #{tpu_custom_call.1} parent=1 // pred_region
      %184 = dma.done [#allocation19], 2048
    $region93: #{tpu_custom_call.1} parent=1 // pred_fallthru
      _
    %185 = sfence
    %v186 = vld [vmem:[#allocation12] sm:$0xff]
    %v187 = vld [vmem:[#allocation12 + $0x8] sm:$0xff]
    %v188 = vld [vmem:[#allocation12 + $0x10] sm:$0xff]
    %v189 = vld [vmem:[#allocation12 + $0x18] sm:$0xff]
    %v190 = vld [vmem:[#allocation12 + $0x20] sm:$0xff]
    %v191 = vld [vmem:[#allocation12 + $0x28] sm:$0xff]
    %v192 = vld [vmem:[#allocation12 + $0x30] sm:$0xff]
    %v193 = vld [vmem:[#allocation12 + $0x38] sm:$0xff]
    %v194 = vld [vmem:[#allocation12 + $0x40] sm:$0xff]
    %v195 = vld [vmem:[#allocation12 + $0x48] sm:$0xff]
    %v196 = vld [vmem:[#allocation12 + $0x50] sm:$0xff]
    %v197 = vld [vmem:[#allocation12 + $0x58] sm:$0xff]
    %v198 = vld [vmem:[#allocation12 + $0x60] sm:$0xff]
    %v199 = vld [vmem:[#allocation12 + $0x68] sm:$0xff]
    %v200 = vld [vmem:[#allocation12 + $0x70] sm:$0xff]
    %v201 = vld [vmem:[#allocation12 + $0x78] sm:$0xff]
    %v202 = vld [vmem:[#allocation12 + $0x80] sm:$0xff]
    %v203 = vld [vmem:[#allocation12 + $0x88] sm:$0xff]
    %v204 = vld [vmem:[#allocation12 + $0x90] sm:$0xff]
    %v205 = vld [vmem:[#allocation12 + $0x98] sm:$0xff]
    %v206 = vld [vmem:[#allocation12 + $0xa0] sm:$0xff]
    %v207 = vld [vmem:[#allocation12 + $0xa8] sm:$0xff]
    %v208 = vld [vmem:[#allocation12 + $0xb0] sm:$0xff]
    %v209 = vld [vmem:[#allocation12 + $0xb8] sm:$0xff]
    %v210 = vld [vmem:[#allocation12 + $0xc0] sm:$0xff]
    %v211 = vld [vmem:[#allocation12 + $0xc8] sm:$0xff]
    %v212 = vld [vmem:[#allocation12 + $0xd0] sm:$0xff]
    %v213 = vld [vmem:[#allocation12 + $0xd8] sm:$0xff]
    %v214 = vld [vmem:[#allocation12 + $0xe0] sm:$0xff]
    %v215 = vld [vmem:[#allocation12 + $0xe8] sm:$0xff]
    %v216 = vld [vmem:[#allocation12 + $0xf0] sm:$0xff]
    %v217 = vld [vmem:[#allocation12 + $0xf8] sm:$0xff]
    %v218 = vld [vmem:[#allocation12 + $0x100] sm:$0xff]
    %v219 = vld [vmem:[#allocation12 + $0x108] sm:$0xff]
    %v220 = vld [vmem:[#allocation12 + $0x110] sm:$0xff]
    %v221 = vld [vmem:[#allocation12 + $0x118] sm:$0xff]
    %v222 = vld [vmem:[#allocation12 + $0x120] sm:$0xff]
    %v223 = vld [vmem:[#allocation12 + $0x128] sm:$0xff]
    %v224 = vld [vmem:[#allocation12 + $0x130] sm:$0xff]
    %v225 = vld [vmem:[#allocation12 + $0x138] sm:$0xff]
    %v226 = vld [vmem:[#allocation12 + $0x140] sm:$0xff]
    %v227 = vld [vmem:[#allocation12 + $0x148] sm:$0xff]
    %v228 = vld [vmem:[#allocation12 + $0x150] sm:$0xff]
    %v229 = vld [vmem:[#allocation12 + $0x158] sm:$0xff]
    %v230 = vld [vmem:[#allocation12 + $0x160] sm:$0xff]
    %v231 = vld [vmem:[#allocation12 + $0x168] sm:$0xff]
    %v232 = vld [vmem:[#allocation12 + $0x170] sm:$0xff]
    %v233 = vld [vmem:[#allocation12 + $0x178] sm:$0xff]
    %v234 = vld [vmem:[#allocation12 + $0x180] sm:$0xff]
    %v235 = vld [vmem:[#allocation12 + $0x188] sm:$0xff]
    %v236 = vld [vmem:[#allocation12 + $0x190] sm:$0xff]
    %v237 = vld [vmem:[#allocation12 + $0x198] sm:$0xff]
    %v238 = vld [vmem:[#allocation12 + $0x1a0] sm:$0xff]
    %v239 = vld [vmem:[#allocation12 + $0x1a8] sm:$0xff]
    %v240 = vld [vmem:[#allocation12 + $0x1b0] sm:$0xff]
    %v241 = vld [vmem:[#allocation12 + $0x1b8] sm:$0xff]
    %v242 = vld [vmem:[#allocation12 + $0x1c0] sm:$0xff]
    %v243 = vld [vmem:[#allocation12 + $0x1c8] sm:$0xff]
    %v244 = vld [vmem:[#allocation12 + $0x1d0] sm:$0xff]
    %v245 = vld [vmem:[#allocation12 + $0x1d8] sm:$0xff]
    %v246 = vld [vmem:[#allocation12 + $0x1e0] sm:$0xff]
    %v247 = vld [vmem:[#allocation12 + $0x1e8] sm:$0xff]
    %v248 = vld [vmem:[#allocation12 + $0x1f0] sm:$0xff]
    %v249 = vld [vmem:[#allocation12 + $0x1f8] sm:$0xff]
    %v250 = vld [vmem:[#allocation14] sm:$0xff]
    %v251 = vld [vmem:[#allocation14 + $0x8] sm:$0xff]
    %v252 = vld [vmem:[#allocation14 + $0x10] sm:$0xff]
    %v253 = vld [vmem:[#allocation14 + $0x18] sm:$0xff]
    %v254 = vld [vmem:[#allocation14 + $0x20] sm:$0xff]
    %v255 = vld [vmem:[#allocation14 + $0x28] sm:$0xff]
    %v256 = vld [vmem:[#allocation14 + $0x30] sm:$0xff]
    %v257 = vld [vmem:[#allocation14 + $0x38] sm:$0xff]
    %v258 = vld [vmem:[#allocation14 + $0x40] sm:$0xff]
    %v259 = vld [vmem:[#allocation14 + $0x48] sm:$0xff]
    %v260 = vld [vmem:[#allocation14 + $0x50] sm:$0xff]
    %v261 = vld [vmem:[#allocation14 + $0x58] sm:$0xff]
    %v262 = vld [vmem:[#allocation14 + $0x60] sm:$0xff]
    %v263 = vld [vmem:[#allocation14 + $0x68] sm:$0xff]
    %v264 = vld [vmem:[#allocation14 + $0x70] sm:$0xff]
    %v265 = vld [vmem:[#allocation14 + $0x78] sm:$0xff]
    %v266 = vld [vmem:[#allocation14 + $0x80] sm:$0xff]
    %v267 = vld [vmem:[#allocation14 + $0x88] sm:$0xff]
    %v268 = vld [vmem:[#allocation14 + $0x90] sm:$0xff]
    %v269 = vld [vmem:[#allocation14 + $0x98] sm:$0xff]
    %v270 = vld [vmem:[#allocation14 + $0xa0] sm:$0xff]
    %v271 = vld [vmem:[#allocation14 + $0xa8] sm:$0xff]
    %v272 = vld [vmem:[#allocation14 + $0xb0] sm:$0xff]
    %v273 = vld [vmem:[#allocation14 + $0xb8] sm:$0xff]
    %v274 = vld [vmem:[#allocation14 + $0xc0] sm:$0xff]
    %v275 = vld [vmem:[#allocation14 + $0xc8] sm:$0xff]
    %v276 = vld [vmem:[#allocation14 + $0xd0] sm:$0xff]
    %v277 = vld [vmem:[#allocation14 + $0xd8] sm:$0xff]
    %v278 = vld [vmem:[#allocation14 + $0xe0] sm:$0xff]
    %v279 = vld [vmem:[#allocation14 + $0xe8] sm:$0xff]
    %v280 = vld [vmem:[#allocation14 + $0xf0] sm:$0xff]
    %v281 = vld [vmem:[#allocation14 + $0xf8] sm:$0xff]
    %v282 = vld [vmem:[#allocation14 + $0x100] sm:$0xff]
    %v283 = vld [vmem:[#allocation14 + $0x108] sm:$0xff]
    %v284 = vld [vmem:[#allocation14 + $0x110] sm:$0xff]
    %v285 = vld [vmem:[#allocation14 + $0x118] sm:$0xff]
    %v286 = vld [vmem:[#allocation14 + $0x120] sm:$0xff]
    %v287 = vld [vmem:[#allocation14 + $0x128] sm:$0xff]
    %v288 = vld [vmem:[#allocation14 + $0x130] sm:$0xff]
    %v289 = vld [vmem:[#allocation14 + $0x138] sm:$0xff]
    %v290 = vld [vmem:[#allocation14 + $0x140] sm:$0xff]
    %v291 = vld [vmem:[#allocation14 + $0x148] sm:$0xff]
    %v292 = vld [vmem:[#allocation14 + $0x150] sm:$0xff]
    %v293 = vld [vmem:[#allocation14 + $0x158] sm:$0xff]
    %v294 = vld [vmem:[#allocation14 + $0x160] sm:$0xff]
    %v295 = vld [vmem:[#allocation14 + $0x168] sm:$0xff]
    %v296 = vld [vmem:[#allocation14 + $0x170] sm:$0xff]
    %v297 = vld [vmem:[#allocation14 + $0x178] sm:$0xff]
    %v298 = vld [vmem:[#allocation14 + $0x180] sm:$0xff]
    %v299 = vld [vmem:[#allocation14 + $0x188] sm:$0xff]
    %v300 = vld [vmem:[#allocation14 + $0x190] sm:$0xff]
    %v301 = vld [vmem:[#allocation14 + $0x198] sm:$0xff]
    %v302 = vld [vmem:[#allocation14 + $0x1a0] sm:$0xff]
    %v303 = vld [vmem:[#allocation14 + $0x1a8] sm:$0xff]
    %v304 = vld [vmem:[#allocation14 + $0x1b0] sm:$0xff]
    %v305 = vld [vmem:[#allocation14 + $0x1b8] sm:$0xff]
    %v306 = vld [vmem:[#allocation14 + $0x1c0] sm:$0xff]
    %v307 = vld [vmem:[#allocation14 + $0x1c8] sm:$0xff]
    %v308 = vld [vmem:[#allocation14 + $0x1d0] sm:$0xff]
    %v309 = vld [vmem:[#allocation14 + $0x1d8] sm:$0xff]
    %v310 = vld [vmem:[#allocation14 + $0x1e0] sm:$0xff]
    %v311 = vld [vmem:[#allocation14 + $0x1e8] sm:$0xff]
    %v312 = vld [vmem:[#allocation14 + $0x1f0] sm:$0xff]
    %v313 = vld [vmem:[#allocation14 + $0x1f8] sm:$0xff]
    %v314 = vld [vmem:[%s6] sm:$0xf]
    %v315 = vld [vmem:[#allocation18] sm:$0xff]
    %v316 = vld [vmem:[#allocation18 + $0x8] sm:$0xff]
    %v317 = vld [vmem:[#allocation18 + $0x10] sm:$0xff]
    %v318 = vld [vmem:[#allocation18 + $0x18] sm:$0xff]
    %v319 = vld [vmem:[#allocation18 + $0x20] sm:$0xff]
    %v320 = vld [vmem:[#allocation18 + $0x28] sm:$0xff]
    %v321 = vld [vmem:[#allocation18 + $0x30] sm:$0xff]
    %v322 = vld [vmem:[#allocation18 + $0x38] sm:$0xff]
    %v323 = vld [vmem:[#allocation18 + $0x40] sm:$0xff]
    %v324 = vld [vmem:[#allocation18 + $0x48] sm:$0xff]
    %v325 = vld [vmem:[#allocation18 + $0x50] sm:$0xff]
    %v326 = vld [vmem:[#allocation18 + $0x58] sm:$0xff]
    %v327 = vld [vmem:[#allocation18 + $0x60] sm:$0xff]
    %v328 = vld [vmem:[#allocation18 + $0x68] sm:$0xff]
    %v329 = vld [vmem:[#allocation18 + $0x70] sm:$0xff]
    %v330 = vld [vmem:[#allocation18 + $0x78] sm:$0xff]
    %v331 = vld [vmem:[#allocation18 + $0x80] sm:$0xff]
    %v332 = vld [vmem:[#allocation18 + $0x88] sm:$0xff]
    %v333 = vld [vmem:[#allocation18 + $0x90] sm:$0xff]
    %v334 = vld [vmem:[#allocation18 + $0x98] sm:$0xff]
    %v335 = vld [vmem:[#allocation18 + $0xa0] sm:$0xff]
    %v336 = vld [vmem:[#allocation18 + $0xa8] sm:$0xff]
    %v337 = vld [vmem:[#allocation18 + $0xb0] sm:$0xff]
    %v338 = vld [vmem:[#allocation18 + $0xb8] sm:$0xff]
    %v339 = vld [vmem:[#allocation18 + $0xc0] sm:$0xff]
    %v340 = vld [vmem:[#allocation18 + $0xc8] sm:$0xff]
    %v341 = vld [vmem:[#allocation18 + $0xd0] sm:$0xff]
    %v342 = vld [vmem:[#allocation18 + $0xd8] sm:$0xff]
    %v343 = vld [vmem:[#allocation18 + $0xe0] sm:$0xff]
    %v344 = vld [vmem:[#allocation18 + $0xe8] sm:$0xff]
    %v345 = vld [vmem:[#allocation18 + $0xf0] sm:$0xff]
    %v346 = vld [vmem:[#allocation18 + $0xf8] sm:$0xff]
    %v347 = vld [vmem:[#allocation18 + $0x100] sm:$0xff]
    %v348 = vld [vmem:[#allocation18 + $0x108] sm:$0xff]
    %v349 = vld [vmem:[#allocation18 + $0x110] sm:$0xff]
    %v350 = vld [vmem:[#allocation18 + $0x118] sm:$0xff]
    %v351 = vld [vmem:[#allocation18 + $0x120] sm:$0xff]
    %v352 = vld [vmem:[#allocation18 + $0x128] sm:$0xff]
    %v353 = vld [vmem:[#allocation18 + $0x130] sm:$0xff]
    %v354 = vld [vmem:[#allocation18 + $0x138] sm:$0xff]
    %v355 = vld [vmem:[#allocation18 + $0x140] sm:$0xff]
    %v356 = vld [vmem:[#allocation18 + $0x148] sm:$0xff]
    %v357 = vld [vmem:[#allocation18 + $0x150] sm:$0xff]
    %v358 = vld [vmem:[#allocation18 + $0x158] sm:$0xff]
    %v359 = vld [vmem:[#allocation18 + $0x160] sm:$0xff]
    %v360 = vld [vmem:[#allocation18 + $0x168] sm:$0xff]
    %v361 = vld [vmem:[#allocation18 + $0x170] sm:$0xff]
    %v362 = vld [vmem:[#allocation18 + $0x178] sm:$0xff]
    %v363 = vld [vmem:[#allocation18 + $0x180] sm:$0xff]
    %v364 = vld [vmem:[#allocation18 + $0x188] sm:$0xff]
    %v365 = vld [vmem:[#allocation18 + $0x190] sm:$0xff]
    %v366 = vld [vmem:[#allocation18 + $0x198] sm:$0xff]
    %v367 = vld [vmem:[#allocation18 + $0x1a0] sm:$0xff]
    %v368 = vld [vmem:[#allocation18 + $0x1a8] sm:$0xff]
    %v369 = vld [vmem:[#allocation18 + $0x1b0] sm:$0xff]
    %v370 = vld [vmem:[#allocation18 + $0x1b8] sm:$0xff]
    %v371 = vld [vmem:[#allocation18 + $0x1c0] sm:$0xff]
    %v372 = vld [vmem:[#allocation18 + $0x1c8] sm:$0xff]
    %v373 = vld [vmem:[#allocation18 + $0x1d0] sm:$0xff]
    %v374 = vld [vmem:[#allocation18 + $0x1d8] sm:$0xff]
    %v375 = vld [vmem:[#allocation18 + $0x1e0] sm:$0xff]
    %v376 = vld [vmem:[#allocation18 + $0x1e8] sm:$0xff]
    %v377 = vld [vmem:[#allocation18 + $0x1f0] sm:$0xff]
    %v378 = vld [vmem:[#allocation18 + $0x1f8] sm:$0xff]
    %v379 = vld [vmem:[#allocation20] sm:$0xff]
    %v380 = vld [vmem:[#allocation20 + $0x8] sm:$0xff]
    %v381 = vld [vmem:[#allocation20 + $0x10] sm:$0xff]
    %v382 = vld [vmem:[#allocation20 + $0x18] sm:$0xff]
    %v383 = vld [vmem:[#allocation20 + $0x20] sm:$0xff]
    %v384 = vld [vmem:[#allocation20 + $0x28] sm:$0xff]
    %v385 = vld [vmem:[#allocation20 + $0x30] sm:$0xff]
    %v386 = vld [vmem:[#allocation20 + $0x38] sm:$0xff]
    %v387 = vld [vmem:[#allocation20 + $0x40] sm:$0xff]
    %v388 = vld [vmem:[#allocation20 + $0x48] sm:$0xff]
    %v389 = vld [vmem:[#allocation20 + $0x50] sm:$0xff]
    %v390 = vld [vmem:[#allocation20 + $0x58] sm:$0xff]
    %v391 = vld [vmem:[#allocation20 + $0x60] sm:$0xff]
    %v392 = vld [vmem:[#allocation20 + $0x68] sm:$0xff]
    %v393 = vld [vmem:[#allocation20 + $0x70] sm:$0xff]
    %v394 = vld [vmem:[#allocation20 + $0x78] sm:$0xff]
    %v395 = vld [vmem:[%s12] sm:$0x1]
    %v396 = vlaneseq
    %v397 = vand.u32 %v396, 127
    %vm398 = vcmp.lt.s32.totalorder %v397, 8
    %v399 = vsub.s32 7, %v397
    %v400 = vsel %vm398, %v399, 0
    %s401 = sld [smem:[#allocation4]]
    %s402 = scalar_lea.vmem [#allocation11], %s401
    %v403 = vld [vmem:[%s402] sm:$0x1]
    %v405 = vperm.slane %v314, 0
    %v406 = vperm.slane %v314, 1
    %v407 = vperm.slane %v314, 2
    %v408 = vperm.slane %v314, 3
    %413 = vmatpush.msra.mxu0 %v246
    %414 = vmatpush.msra.mxu0 %v242
    %415 = vmatpush.msra.mxu0 %v238
    %416 = vmatpush.msra.mxu0 %v234
    %417 = vmatpush.msra.mxu0 %v230
    %418 = vmatpush.msra.mxu0 %v226
    %419 = vmatpush.msra.mxu0 %v222
    %420 = vmatpush.msra.mxu0 %v218
    %421 = vmatpush.msra.mxu0 %v214
    %422 = vmatpush.msra.mxu0 %v210
    %423 = vmatpush.msra.mxu0 %v206
    %424 = vmatpush.msra.mxu0 %v202
    %425 = vmatpush.msra.mxu0 %v198
    %426 = vmatpush.msra.mxu0 %v194
    %427 = vmatpush.msra.mxu0 %v190
    %428 = vmatpush.msra.mxu0 %v186
    %429 = vmatmul.f32.gmra.mxu0 %v403
    %v430 = vpop.f32.mrf.mxu0
    %v431 = vadd.f32 %v405, %v430
    %432 = vdwg.mxu0
    %433 = vmatpush.msra.mxu0 %v247
    %434 = vmatpush.msra.mxu0 %v243
    %435 = vmatpush.msra.mxu0 %v239
    %436 = vmatpush.msra.mxu0 %v235
    %437 = vmatpush.msra.mxu0 %v231
    %438 = vmatpush.msra.mxu0 %v227
    %439 = vmatpush.msra.mxu0 %v223
    %440 = vmatpush.msra.mxu0 %v219
    %441 = vmatpush.msra.mxu0 %v215
    %442 = vmatpush.msra.mxu0 %v211
    %443 = vmatpush.msra.mxu0 %v207
    %444 = vmatpush.msra.mxu0 %v203
    %445 = vmatpush.msra.mxu0 %v199
    %446 = vmatpush.msra.mxu0 %v195
    %447 = vmatpush.msra.mxu0 %v191
    %448 = vmatpush.msra.mxu0 %v187
    %449 = vmatmul.f32.gmra.mxu0 %v403
    %v450 = vpop.f32.mrf.mxu0
    %v451 = vadd.f32 %v406, %v450
    %452 = vdwg.mxu0
    %453 = vmatpush.msra.mxu0 %v248
    %454 = vmatpush.msra.mxu0 %v244
    %455 = vmatpush.msra.mxu0 %v240
    %456 = vmatpush.msra.mxu0 %v236
    %457 = vmatpush.msra.mxu0 %v232
    %458 = vmatpush.msra.mxu0 %v228
    %459 = vmatpush.msra.mxu0 %v224
    %460 = vmatpush.msra.mxu0 %v220
    %461 = vmatpush.msra.mxu0 %v216
    %462 = vmatpush.msra.mxu0 %v212
    %463 = vmatpush.msra.mxu0 %v208
    %464 = vmatpush.msra.mxu0 %v204
    %465 = vmatpush.msra.mxu0 %v200
    %466 = vmatpush.msra.mxu0 %v196
    %467 = vmatpush.msra.mxu0 %v192
    %468 = vmatpush.msra.mxu0 %v188
    %469 = vmatmul.f32.gmra.mxu0 %v403
    %v470 = vpop.f32.mrf.mxu0
    %v471 = vadd.f32 %v407, %v470
    %472 = vdwg.mxu0
    %473 = vmatpush.msra.mxu0 %v249
    %474 = vmatpush.msra.mxu0 %v245
    %475 = vmatpush.msra.mxu0 %v241
    %476 = vmatpush.msra.mxu0 %v237
    %477 = vmatpush.msra.mxu0 %v233
    %478 = vmatpush.msra.mxu0 %v229
    %479 = vmatpush.msra.mxu0 %v225
    %480 = vmatpush.msra.mxu0 %v221
    %481 = vmatpush.msra.mxu0 %v217
    %482 = vmatpush.msra.mxu0 %v213
    %483 = vmatpush.msra.mxu0 %v209
    %484 = vmatpush.msra.mxu0 %v205
    %485 = vmatpush.msra.mxu0 %v201
    %486 = vmatpush.msra.mxu0 %v197
    %487 = vmatpush.msra.mxu0 %v193
    %488 = vmatpush.msra.mxu0 %v189
    %489 = vmatmul.f32.gmra.mxu0 %v403
    %v490 = vpop.f32.mrf.mxu0
    %v491 = vadd.f32 %v408, %v490
    %492 = vdwg.mxu0
    %493 = vmatpush.msra.mxu0 %v310
    %494 = vmatpush.msra.mxu0 %v306
    %495 = vmatpush.msra.mxu0 %v302
    %496 = vmatpush.msra.mxu0 %v298
    %497 = vmatpush.msra.mxu0 %v294
    %498 = vmatpush.msra.mxu0 %v290
    %499 = vmatpush.msra.mxu0 %v286
    %500 = vmatpush.msra.mxu0 %v282
    %501 = vmatpush.msra.mxu0 %v278
    %502 = vmatpush.msra.mxu0 %v274
    %503 = vmatpush.msra.mxu0 %v270
    %504 = vmatpush.msra.mxu0 %v266
    %505 = vmatpush.msra.mxu0 %v262
    %506 = vmatpush.msra.mxu0 %v258
    %507 = vmatpush.msra.mxu0 %v254
    %508 = vmatpush.msra.mxu0 %v250
    %509 = vmatmul.f32.gmra.mxu0 0.0
    %v510 = vpop.f32.mrf.mxu0
    %v511 = vadd.f32 0.0, %v510
    %512 = vdwg.mxu0
    %513 = vmatpush.msra.mxu0 %v311
    %514 = vmatpush.msra.mxu0 %v307
    %515 = vmatpush.msra.mxu0 %v303
    %516 = vmatpush.msra.mxu0 %v299
    %517 = vmatpush.msra.mxu0 %v295
    %518 = vmatpush.msra.mxu0 %v291
    %519 = vmatpush.msra.mxu0 %v287
    %520 = vmatpush.msra.mxu0 %v283
    %521 = vmatpush.msra.mxu0 %v279
    %522 = vmatpush.msra.mxu0 %v275
    %523 = vmatpush.msra.mxu0 %v271
    %524 = vmatpush.msra.mxu0 %v267
    %525 = vmatpush.msra.mxu0 %v263
    %526 = vmatpush.msra.mxu0 %v259
    %527 = vmatpush.msra.mxu0 %v255
    %528 = vmatpush.msra.mxu0 %v251
    %529 = vmatmul.f32.gmra.mxu0 0.0
    %v530 = vpop.f32.mrf.mxu0
    %v531 = vadd.f32 0.0, %v530
    %532 = vdwg.mxu0
    %533 = vmatpush.msra.mxu0 %v312
    %534 = vmatpush.msra.mxu0 %v308
    %535 = vmatpush.msra.mxu0 %v304
    %536 = vmatpush.msra.mxu0 %v300
    %537 = vmatpush.msra.mxu0 %v296
    %538 = vmatpush.msra.mxu0 %v292
    %539 = vmatpush.msra.mxu0 %v288
    %540 = vmatpush.msra.mxu0 %v284
    %541 = vmatpush.msra.mxu0 %v280
    %542 = vmatpush.msra.mxu0 %v276
    %543 = vmatpush.msra.mxu0 %v272
    %544 = vmatpush.msra.mxu0 %v268
    %545 = vmatpush.msra.mxu0 %v264
    %546 = vmatpush.msra.mxu0 %v260
    %547 = vmatpush.msra.mxu0 %v256
    %548 = vmatpush.msra.mxu0 %v252
    %549 = vmatmul.f32.gmra.mxu0 0.0
    %v550 = vpop.f32.mrf.mxu0
    %v551 = vadd.f32 0.0, %v550
    %552 = vdwg.mxu0
    %553 = vmatpush.msra.mxu0 %v313
    %554 = vmatpush.msra.mxu0 %v309
    %555 = vmatpush.msra.mxu0 %v305
    %556 = vmatpush.msra.mxu0 %v301
    %557 = vmatpush.msra.mxu0 %v297
    %558 = vmatpush.msra.mxu0 %v293
    %559 = vmatpush.msra.mxu0 %v289
    %560 = vmatpush.msra.mxu0 %v285
    %561 = vmatpush.msra.mxu0 %v281
    %562 = vmatpush.msra.mxu0 %v277
    %563 = vmatpush.msra.mxu0 %v273
    %564 = vmatpush.msra.mxu0 %v269
    %565 = vmatpush.msra.mxu0 %v265
    %566 = vmatpush.msra.mxu0 %v261
    %567 = vmatpush.msra.mxu0 %v257
    %568 = vmatpush.msra.mxu0 %v253
    %569 = vmatmul.f32.gmra.mxu0 0.0
    %v570 = vpop.f32.mrf.mxu0
    %v571 = vadd.f32 0.0, %v570
    %572 = vdwg.mxu0
    %v573 = vadd.f32 %v431, %v511
    %v574 = vadd.f32 %v451, %v531
    %v575 = vadd.f32 %v471, %v551
    %v576 = vadd.f32 %v491, %v571
    %v577 = vxor.u32 %v573, 2147483648
    %v578 = vxor.u32 %v574, 2147483648
    %v579 = vxor.u32 %v575, 2147483648
    %v580 = vmul.f32 %v577, 1.442695
    %v581 = vpow.pop %v580
    %v582 = vmul.f32 %v578, 1.442695
    %v583 = vpow.pop %v582
    %v584 = vmul.f32 %v579, 1.442695
    %v585 = vpow.pop %v584
    %v586 = vadd.f32 %v581, 1.0
    %v587 = vadd.f32 %v583, 1.0
    %v588 = vadd.f32 %v585, 1.0
    %v589 = vrcp.pop %v586
    %v590 = vmul.f32 %v586, %v589
    %v591 = vsub.f32 1.0, %v590
    %v592 = vmul.f32 %v589, %v591
    %v593 = vadd.f32 %v589, %v592
    %vm594 = vweird.f32 %v586
    %vm595 = vweird.f32 %v589
    %vm596 = vmor %vm594, %vm595
    %v597 = vsel %vm596, %v589, %v593
    %v598 = vand.u32 2147483647, %v586
    %vm599 = vcmp.eq.f32.partialorder %v598, 8.507059e+37
    %v600 = vand.u32 %v586, 2147483648
    %v601 = vor.u32 1.1754944e-38, %v600
    %v602 = vsel %vm599, %v601, %v597
    %v603 = vmul.f32 1.0, %v602
    %v604 = vrcp.pop %v587
    %v605 = vmul.f32 %v587, %v604
    %v606 = vsub.f32 1.0, %v605
    %v607 = vmul.f32 %v604, %v606
    %v608 = vadd.f32 %v604, %v607
    %vm609 = vweird.f32 %v587
    %vm610 = vweird.f32 %v604
    %vm611 = vmor %vm609, %vm610
    %v612 = vsel %vm611, %v604, %v608
    %v613 = vand.u32 2147483647, %v587
    %vm614 = vcmp.eq.f32.partialorder %v613, 8.507059e+37
    %v615 = vand.u32 %v587, 2147483648
    %v616 = vor.u32 1.1754944e-38, %v615
    %v617 = vsel %vm614, %v616, %v612
    %v618 = vmul.f32 1.0, %v617
    %v619 = vrcp.pop %v588
    %v620 = vmul.f32 %v588, %v619
    %v621 = vsub.f32 1.0, %v620
    %v622 = vmul.f32 %v619, %v621
    %v623 = vadd.f32 %v619, %v622
    %vm624 = vweird.f32 %v588
    %vm625 = vweird.f32 %v619
    %vm626 = vmor %vm624, %vm625
    %v627 = vsel %vm626, %v619, %v623
    %v628 = vand.u32 2147483647, %v588
    %vm629 = vcmp.eq.f32.partialorder %v628, 8.507059e+37
    %v630 = vand.u32 %v588, 2147483648
    %v631 = vor.u32 1.1754944e-38, %v630
    %v632 = vsel %vm629, %v631, %v627
    %v633 = vmul.f32 1.0, %v632
    %v634 = vtanh.pop %v576
    %v635 = vmul.f32 %v618, 0.0
    %v636 = vmul.f32 %v603, %v634
    %v637 = vadd.f32 %v635, %v636
    %v638 = vtanh.pop %v637
    %v639 = vmul.f32 %v633, %v638
    %s640 = sld [smem:[#allocation4 + $0x1]]
    %s641 = scalar_lea.vmem [#allocation11], %s640
    %v642 = vld [vmem:[%s641] sm:$0x1]
    %643 = vmatpush.msra.mxu0 %v246
    %644 = vmatpush.msra.mxu0 %v242
    %645 = vmatpush.msra.mxu0 %v238
    %646 = vmatpush.msra.mxu0 %v234
    %647 = vmatpush.msra.mxu0 %v230
    %648 = vmatpush.msra.mxu0 %v226
    %649 = vmatpush.msra.mxu0 %v222
    %650 = vmatpush.msra.mxu0 %v218
    %651 = vmatpush.msra.mxu0 %v214
    %652 = vmatpush.msra.mxu0 %v210
    %653 = vmatpush.msra.mxu0 %v206
    %654 = vmatpush.msra.mxu0 %v202
    %655 = vmatpush.msra.mxu0 %v198
    %656 = vmatpush.msra.mxu0 %v194
    %657 = vmatpush.msra.mxu0 %v190
    %658 = vmatpush.msra.mxu0 %v186
    %659 = vmatmul.f32.gmra.mxu0 %v642
    %v660 = vpop.f32.mrf.mxu0
    %v661 = vadd.f32 %v405, %v660
    %662 = vdwg.mxu0
    %663 = vmatpush.msra.mxu0 %v247
    %664 = vmatpush.msra.mxu0 %v243
    %665 = vmatpush.msra.mxu0 %v239
    %666 = vmatpush.msra.mxu0 %v235
    %667 = vmatpush.msra.mxu0 %v231
    %668 = vmatpush.msra.mxu0 %v227
    %669 = vmatpush.msra.mxu0 %v223
    %670 = vmatpush.msra.mxu0 %v219
    %671 = vmatpush.msra.mxu0 %v215
    %672 = vmatpush.msra.mxu0 %v211
    %673 = vmatpush.msra.mxu0 %v207
    %674 = vmatpush.msra.mxu0 %v203
    %675 = vmatpush.msra.mxu0 %v199
    %676 = vmatpush.msra.mxu0 %v195
    %677 = vmatpush.msra.mxu0 %v191
    %678 = vmatpush.msra.mxu0 %v187
    %679 = vmatmul.f32.gmra.mxu0 %v642
    %v680 = vpop.f32.mrf.mxu0
    %v681 = vadd.f32 %v406, %v680
    %682 = vdwg.mxu0
    %683 = vmatpush.msra.mxu0 %v248
    %684 = vmatpush.msra.mxu0 %v244
    %685 = vmatpush.msra.mxu0 %v240
    %686 = vmatpush.msra.mxu0 %v236
    %687 = vmatpush.msra.mxu0 %v232
    %688 = vmatpush.msra.mxu0 %v228
    %689 = vmatpush.msra.mxu0 %v224
    %690 = vmatpush.msra.mxu0 %v220
    %691 = vmatpush.msra.mxu0 %v216
    %692 = vmatpush.msra.mxu0 %v212
    %693 = vmatpush.msra.mxu0 %v208
    %694 = vmatpush.msra.mxu0 %v204
    %695 = vmatpush.msra.mxu0 %v200
    %696 = vmatpush.msra.mxu0 %v196
    %697 = vmatpush.msra.mxu0 %v192
    %698 = vmatpush.msra.mxu0 %v188
    %699 = vmatmul.f32.gmra.mxu0 %v642
    %v700 = vpop.f32.mrf.mxu0
    %v701 = vadd.f32 %v407, %v700
    %702 = vdwg.mxu0
    %703 = vmatpush.msra.mxu0 %v249
    %704 = vmatpush.msra.mxu0 %v245
    %705 = vmatpush.msra.mxu0 %v241
    %706 = vmatpush.msra.mxu0 %v237
    %707 = vmatpush.msra.mxu0 %v233
    %708 = vmatpush.msra.mxu0 %v229
    %709 = vmatpush.msra.mxu0 %v225
    %710 = vmatpush.msra.mxu0 %v221
    %711 = vmatpush.msra.mxu0 %v217
    %712 = vmatpush.msra.mxu0 %v213
    %713 = vmatpush.msra.mxu0 %v209
    %714 = vmatpush.msra.mxu0 %v205
    %715 = vmatpush.msra.mxu0 %v201
    %716 = vmatpush.msra.mxu0 %v197
    %717 = vmatpush.msra.mxu0 %v193
    %718 = vmatpush.msra.mxu0 %v189
    %719 = vmatmul.f32.gmra.mxu0 %v642
    %v720 = vpop.f32.mrf.mxu0
    %v721 = vadd.f32 %v408, %v720
    %722 = vdwg.mxu0
    %723 = vmatpush.msra.mxu0 %v310
    %724 = vmatpush.msra.mxu0 %v306
    %725 = vmatpush.msra.mxu0 %v302
    %726 = vmatpush.msra.mxu0 %v298
    %727 = vmatpush.msra.mxu0 %v294
    %728 = vmatpush.msra.mxu0 %v290
    %729 = vmatpush.msra.mxu0 %v286
    %730 = vmatpush.msra.mxu0 %v282
    %731 = vmatpush.msra.mxu0 %v278
    %732 = vmatpush.msra.mxu0 %v274
    %733 = vmatpush.msra.mxu0 %v270
    %734 = vmatpush.msra.mxu0 %v266
    %735 = vmatpush.msra.mxu0 %v262
    %736 = vmatpush.msra.mxu0 %v258
    %737 = vmatpush.msra.mxu0 %v254
    %738 = vmatpush.msra.mxu0 %v250
    %739 = vmatmul.f32.gmra.mxu0 %v639
    %v740 = vpop.f32.mrf.mxu0
    %v741 = vadd.f32 0.0, %v740
    %742 = vdwg.mxu0
    %743 = vmatpush.msra.mxu0 %v311
    %744 = vmatpush.msra.mxu0 %v307
    %745 = vmatpush.msra.mxu0 %v303
    %746 = vmatpush.msra.mxu0 %v299
    %747 = vmatpush.msra.mxu0 %v295
    %748 = vmatpush.msra.mxu0 %v291
    %749 = vmatpush.msra.mxu0 %v287
    %750 = vmatpush.msra.mxu0 %v283
    %751 = vmatpush.msra.mxu0 %v279
    %752 = vmatpush.msra.mxu0 %v275
    %753 = vmatpush.msra.mxu0 %v271
    %754 = vmatpush.msra.mxu0 %v267
    %755 = vmatpush.msra.mxu0 %v263
    %756 = vmatpush.msra.mxu0 %v259
    %757 = vmatpush.msra.mxu0 %v255
    %758 = vmatpush.msra.mxu0 %v251
    %759 = vmatmul.f32.gmra.mxu0 %v639
    %v760 = vpop.f32.mrf.mxu0
    %v761 = vadd.f32 0.0, %v760
    %762 = vdwg.mxu0
    %763 = vmatpush.msra.mxu0 %v312
    %764 = vmatpush.msra.mxu0 %v308
    %765 = vmatpush.msra.mxu0 %v304
    %766 = vmatpush.msra.mxu0 %v300
    %767 = vmatpush.msra.mxu0 %v296
    %768 = vmatpush.msra.mxu0 %v292
    %769 = vmatpush.msra.mxu0 %v288
    %770 = vmatpush.msra.mxu0 %v284
    %771 = vmatpush.msra.mxu0 %v280
    %772 = vmatpush.msra.mxu0 %v276
    %773 = vmatpush.msra.mxu0 %v272
    %774 = vmatpush.msra.mxu0 %v268
    %775 = vmatpush.msra.mxu0 %v264
    %776 = vmatpush.msra.mxu0 %v260
    %777 = vmatpush.msra.mxu0 %v256
    %778 = vmatpush.msra.mxu0 %v252
    %779 = vmatmul.f32.gmra.mxu0 %v639
    %v780 = vpop.f32.mrf.mxu0
    %v781 = vadd.f32 0.0, %v780
    %782 = vdwg.mxu0
    %783 = vmatpush.msra.mxu0 %v313
    %784 = vmatpush.msra.mxu0 %v309
    %785 = vmatpush.msra.mxu0 %v305
    %786 = vmatpush.msra.mxu0 %v301
    %787 = vmatpush.msra.mxu0 %v297
    %788 = vmatpush.msra.mxu0 %v293
    %789 = vmatpush.msra.mxu0 %v289
    %790 = vmatpush.msra.mxu0 %v285
    %791 = vmatpush.msra.mxu0 %v281
    %792 = vmatpush.msra.mxu0 %v277
    %793 = vmatpush.msra.mxu0 %v273
    %794 = vmatpush.msra.mxu0 %v269
    %795 = vmatpush.msra.mxu0 %v265
    %796 = vmatpush.msra.mxu0 %v261
    %797 = vmatpush.msra.mxu0 %v257
    %798 = vmatpush.msra.mxu0 %v253
    %799 = vmatmul.f32.gmra.mxu0 %v639
    %v800 = vpop.f32.mrf.mxu0
    %v801 = vadd.f32 0.0, %v800
    %802 = vdwg.mxu0
    %v803 = vadd.f32 %v661, %v741
    %v804 = vadd.f32 %v681, %v761
    %v805 = vadd.f32 %v701, %v781
    %v806 = vadd.f32 %v721, %v801
    %v807 = vxor.u32 %v803, 2147483648
    %v808 = vxor.u32 %v804, 2147483648
    %v809 = vxor.u32 %v805, 2147483648
    %v810 = vmul.f32 %v807, 1.442695
    %v811 = vpow.pop %v810
    %v812 = vmul.f32 %v808, 1.442695
    %v813 = vpow.pop %v812
    %v814 = vmul.f32 %v809, 1.442695
    %v815 = vpow.pop %v814
    %v816 = vadd.f32 %v811, 1.0
    %v817 = vadd.f32 %v813, 1.0
    %v818 = vadd.f32 %v815, 1.0
    %v819 = vrcp.pop %v816
    %v820 = vmul.f32 %v816, %v819
    %v821 = vsub.f32 1.0, %v820
    %v822 = vmul.f32 %v819, %v821
    %v823 = vadd.f32 %v819, %v822
    %vm824 = vweird.f32 %v816
    %vm825 = vweird.f32 %v819
    %vm826 = vmor %vm824, %vm825
    %v827 = vsel %vm826, %v819, %v823
    %v828 = vand.u32 2147483647, %v816
    %vm829 = vcmp.eq.f32.partialorder %v828, 8.507059e+37
    %v830 = vand.u32 %v816, 2147483648
    %v831 = vor.u32 1.1754944e-38, %v830
    %v832 = vsel %vm829, %v831, %v827
    %v833 = vmul.f32 1.0, %v832
    %v834 = vrcp.pop %v817
    %v835 = vmul.f32 %v817, %v834
    %v836 = vsub.f32 1.0, %v835
    %v837 = vmul.f32 %v834, %v836
    %v838 = vadd.f32 %v834, %v837
    %vm839 = vweird.f32 %v817
    %vm840 = vweird.f32 %v834
    %vm841 = vmor %vm839, %vm840
    %v842 = vsel %vm841, %v834, %v838
    %v843 = vand.u32 2147483647, %v817
    %vm844 = vcmp.eq.f32.partialorder %v843, 8.507059e+37
    %v845 = vand.u32 %v817, 2147483648
    %v846 = vor.u32 1.1754944e-38, %v845
    %v847 = vsel %vm844, %v846, %v842
    %v848 = vmul.f32 1.0, %v847
    %v849 = vrcp.pop %v818
    %v850 = vmul.f32 %v818, %v849
    %v851 = vsub.f32 1.0, %v850
    %v852 = vmul.f32 %v849, %v851
    %v853 = vadd.f32 %v849, %v852
    %vm854 = vweird.f32 %v818
    %vm855 = vweird.f32 %v849
    %vm856 = vmor %vm854, %vm855
    %v857 = vsel %vm856, %v849, %v853
    %v858 = vand.u32 2147483647, %v818
    %vm859 = vcmp.eq.f32.partialorder %v858, 8.507059e+37
    %v860 = vand.u32 %v818, 2147483648
    %v861 = vor.u32 1.1754944e-38, %v860
    %v862 = vsel %vm859, %v861, %v857
    %v863 = vmul.f32 1.0, %v862
    %v864 = vtanh.pop %v806
    %v865 = vmul.f32 %v848, %v637
    %v866 = vmul.f32 %v833, %v864
    %v867 = vadd.f32 %v865, %v866
    %v868 = vtanh.pop %v867
    %v869 = vmul.f32 %v863, %v868
    %s870 = sld [smem:[#allocation4 + $0x2]]
    %s871 = scalar_lea.vmem [#allocation11], %s870
    %v872 = vld [vmem:[%s871] sm:$0x1]
    %873 = vmatpush.msra.mxu0 %v246
    %874 = vmatpush.msra.mxu0 %v242
    %875 = vmatpush.msra.mxu0 %v238
    %876 = vmatpush.msra.mxu0 %v234
    %877 = vmatpush.msra.mxu0 %v230
    %878 = vmatpush.msra.mxu0 %v226
    %879 = vmatpush.msra.mxu0 %v222
    %880 = vmatpush.msra.mxu0 %v218
    %881 = vmatpush.msra.mxu0 %v214
    %882 = vmatpush.msra.mxu0 %v210
    %883 = vmatpush.msra.mxu0 %v206
    %884 = vmatpush.msra.mxu0 %v202
    %885 = vmatpush.msra.mxu0 %v198
    %886 = vmatpush.msra.mxu0 %v194
    %887 = vmatpush.msra.mxu0 %v190
    %888 = vmatpush.msra.mxu0 %v186
    %889 = vmatmul.f32.gmra.mxu0 %v872
    %v890 = vpop.f32.mrf.mxu0
    %v891 = vadd.f32 %v405, %v890
    %892 = vdwg.mxu0
    %893 = vmatpush.msra.mxu0 %v247
    %894 = vmatpush.msra.mxu0 %v243
    %895 = vmatpush.msra.mxu0 %v239
    %896 = vmatpush.msra.mxu0 %v235
    %897 = vmatpush.msra.mxu0 %v231
    %898 = vmatpush.msra.mxu0 %v227
    %899 = vmatpush.msra.mxu0 %v223
    %900 = vmatpush.msra.mxu0 %v219
    %901 = vmatpush.msra.mxu0 %v215
    %902 = vmatpush.msra.mxu0 %v211
    %903 = vmatpush.msra.mxu0 %v207
    %904 = vmatpush.msra.mxu0 %v203
    %905 = vmatpush.msra.mxu0 %v199
    %906 = vmatpush.msra.mxu0 %v195
    %907 = vmatpush.msra.mxu0 %v191
    %908 = vmatpush.msra.mxu0 %v187
    %909 = vmatmul.f32.gmra.mxu0 %v872
    %v910 = vpop.f32.mrf.mxu0
    %v911 = vadd.f32 %v406, %v910
    %912 = vdwg.mxu0
    %913 = vmatpush.msra.mxu0 %v248
    %914 = vmatpush.msra.mxu0 %v244
    %915 = vmatpush.msra.mxu0 %v240
    %916 = vmatpush.msra.mxu0 %v236
    %917 = vmatpush.msra.mxu0 %v232
    %918 = vmatpush.msra.mxu0 %v228
    %919 = vmatpush.msra.mxu0 %v224
    %920 = vmatpush.msra.mxu0 %v220
    %921 = vmatpush.msra.mxu0 %v216
    %922 = vmatpush.msra.mxu0 %v212
    %923 = vmatpush.msra.mxu0 %v208
    %924 = vmatpush.msra.mxu0 %v204
    %925 = vmatpush.msra.mxu0 %v200
    %926 = vmatpush.msra.mxu0 %v196
    %927 = vmatpush.msra.mxu0 %v192
    %928 = vmatpush.msra.mxu0 %v188
    %929 = vmatmul.f32.gmra.mxu0 %v872
    %v930 = vpop.f32.mrf.mxu0
    %v931 = vadd.f32 %v407, %v930
    %932 = vdwg.mxu0
    %933 = vmatpush.msra.mxu0 %v249
    %934 = vmatpush.msra.mxu0 %v245
    %935 = vmatpush.msra.mxu0 %v241
    %936 = vmatpush.msra.mxu0 %v237
    %937 = vmatpush.msra.mxu0 %v233
    %938 = vmatpush.msra.mxu0 %v229
    %939 = vmatpush.msra.mxu0 %v225
    %940 = vmatpush.msra.mxu0 %v221
    %941 = vmatpush.msra.mxu0 %v217
    %942 = vmatpush.msra.mxu0 %v213
    %943 = vmatpush.msra.mxu0 %v209
    %944 = vmatpush.msra.mxu0 %v205
    %945 = vmatpush.msra.mxu0 %v201
    %946 = vmatpush.msra.mxu0 %v197
    %947 = vmatpush.msra.mxu0 %v193
    %948 = vmatpush.msra.mxu0 %v189
    %949 = vmatmul.f32.gmra.mxu0 %v872
    %v950 = vpop.f32.mrf.mxu0
    %v951 = vadd.f32 %v408, %v950
    %952 = vdwg.mxu0
    %953 = vmatpush.msra.mxu0 %v310
    %954 = vmatpush.msra.mxu0 %v306
    %955 = vmatpush.msra.mxu0 %v302
    %956 = vmatpush.msra.mxu0 %v298
    %957 = vmatpush.msra.mxu0 %v294
    %958 = vmatpush.msra.mxu0 %v290
    %959 = vmatpush.msra.mxu0 %v286
    %960 = vmatpush.msra.mxu0 %v282
    %961 = vmatpush.msra.mxu0 %v278
    %962 = vmatpush.msra.mxu0 %v274
    %963 = vmatpush.msra.mxu0 %v270
    %964 = vmatpush.msra.mxu0 %v266
    %965 = vmatpush.msra.mxu0 %v262
    %966 = vmatpush.msra.mxu0 %v258
    %967 = vmatpush.msra.mxu0 %v254
    %968 = vmatpush.msra.mxu0 %v250
    %969 = vmatmul.f32.gmra.mxu0 %v869
    %v970 = vpop.f32.mrf.mxu0
    %v971 = vadd.f32 0.0, %v970
    %972 = vdwg.mxu0
    %973 = vmatpush.msra.mxu0 %v311
    %974 = vmatpush.msra.mxu0 %v307
    %975 = vmatpush.msra.mxu0 %v303
    %976 = vmatpush.msra.mxu0 %v299
    %977 = vmatpush.msra.mxu0 %v295
    %978 = vmatpush.msra.mxu0 %v291
    %979 = vmatpush.msra.mxu0 %v287
    %980 = vmatpush.msra.mxu0 %v283
    %981 = vmatpush.msra.mxu0 %v279
    %982 = vmatpush.msra.mxu0 %v275
    %983 = vmatpush.msra.mxu0 %v271
    %984 = vmatpush.msra.mxu0 %v267
    %985 = vmatpush.msra.mxu0 %v263
    %986 = vmatpush.msra.mxu0 %v259
    %987 = vmatpush.msra.mxu0 %v255
    %988 = vmatpush.msra.mxu0 %v251
    %989 = vmatmul.f32.gmra.mxu0 %v869
    %v990 = vpop.f32.mrf.mxu0
    %v991 = vadd.f32 0.0, %v990
    %992 = vdwg.mxu0
    %993 = vmatpush.msra.mxu0 %v312
    %994 = vmatpush.msra.mxu0 %v308
    %995 = vmatpush.msra.mxu0 %v304
    %996 = vmatpush.msra.mxu0 %v300
    %997 = vmatpush.msra.mxu0 %v296
    %998 = vmatpush.msra.mxu0 %v292
    %999 = vmatpush.msra.mxu0 %v288
    %1000 = vmatpush.msra.mxu0 %v284
    %1001 = vmatpush.msra.mxu0 %v280
    %1002 = vmatpush.msra.mxu0 %v276
    %1003 = vmatpush.msra.mxu0 %v272
    %1004 = vmatpush.msra.mxu0 %v268
    %1005 = vmatpush.msra.mxu0 %v264
    %1006 = vmatpush.msra.mxu0 %v260
    %1007 = vmatpush.msra.mxu0 %v256
    %1008 = vmatpush.msra.mxu0 %v252
    %1009 = vmatmul.f32.gmra.mxu0 %v869
    %v1010 = vpop.f32.mrf.mxu0
    %v1011 = vadd.f32 0.0, %v1010
    %1012 = vdwg.mxu0
    %1013 = vmatpush.msra.mxu0 %v313
    %1014 = vmatpush.msra.mxu0 %v309
    %1015 = vmatpush.msra.mxu0 %v305
    %1016 = vmatpush.msra.mxu0 %v301
    %1017 = vmatpush.msra.mxu0 %v297
    %1018 = vmatpush.msra.mxu0 %v293
    %1019 = vmatpush.msra.mxu0 %v289
    %1020 = vmatpush.msra.mxu0 %v285
    %1021 = vmatpush.msra.mxu0 %v281
    %1022 = vmatpush.msra.mxu0 %v277
    %1023 = vmatpush.msra.mxu0 %v273
    %1024 = vmatpush.msra.mxu0 %v269
    %1025 = vmatpush.msra.mxu0 %v265
    %1026 = vmatpush.msra.mxu0 %v261
    %1027 = vmatpush.msra.mxu0 %v257
    %1028 = vmatpush.msra.mxu0 %v253
    %1029 = vmatmul.f32.gmra.mxu0 %v869
    %v1030 = vpop.f32.mrf.mxu0
    %v1031 = vadd.f32 0.0, %v1030
    %1032 = vdwg.mxu0
    %v1033 = vadd.f32 %v891, %v971
    %v1034 = vadd.f32 %v911, %v991
    %v1035 = vadd.f32 %v931, %v1011
    %v1036 = vadd.f32 %v951, %v1031
    %v1037 = vxor.u32 %v1033, 2147483648
    %v1038 = vxor.u32 %v1034, 2147483648
    %v1039 = vxor.u32 %v1035, 2147483648
    %v1040 = vmul.f32 %v1037, 1.442695
    %v1041 = vpow.pop %v1040
    %v1042 = vmul.f32 %v1038, 1.442695
    %v1043 = vpow.pop %v1042
    %v1044 = vmul.f32 %v1039, 1.442695
    %v1045 = vpow.pop %v1044
    %v1046 = vadd.f32 %v1041, 1.0
    %v1047 = vadd.f32 %v1043, 1.0
    %v1048 = vadd.f32 %v1045, 1.0
    %v1049 = vrcp.pop %v1046
    %v1050 = vmul.f32 %v1046, %v1049
    %v1051 = vsub.f32 1.0, %v1050
    %v1052 = vmul.f32 %v1049, %v1051
    %v1053 = vadd.f32 %v1049, %v1052
    %vm1054 = vweird.f32 %v1046
    %vm1055 = vweird.f32 %v1049
    %vm1056 = vmor %vm1054, %vm1055
    %v1057 = vsel %vm1056, %v1049, %v1053
    %v1058 = vand.u32 2147483647, %v1046
    %vm1059 = vcmp.eq.f32.partialorder %v1058, 8.507059e+37
    %v1060 = vand.u32 %v1046, 2147483648
    %v1061 = vor.u32 1.1754944e-38, %v1060
    %v1062 = vsel %vm1059, %v1061, %v1057
    %v1063 = vmul.f32 1.0, %v1062
    %v1064 = vrcp.pop %v1047
    %v1065 = vmul.f32 %v1047, %v1064
    %v1066 = vsub.f32 1.0, %v1065
    %v1067 = vmul.f32 %v1064, %v1066
    %v1068 = vadd.f32 %v1064, %v1067
    %vm1069 = vweird.f32 %v1047
    %vm1070 = vweird.f32 %v1064
    %vm1071 = vmor %vm1069, %vm1070
    %v1072 = vsel %vm1071, %v1064, %v1068
    %v1073 = vand.u32 2147483647, %v1047
    %vm1074 = vcmp.eq.f32.partialorder %v1073, 8.507059e+37
    %v1075 = vand.u32 %v1047, 2147483648
    %v1076 = vor.u32 1.1754944e-38, %v1075
    %v1077 = vsel %vm1074, %v1076, %v1072
    %v1078 = vmul.f32 1.0, %v1077
    %v1079 = vrcp.pop %v1048
    %v1080 = vmul.f32 %v1048, %v1079
    %v1081 = vsub.f32 1.0, %v1080
    %v1082 = vmul.f32 %v1079, %v1081
    %v1083 = vadd.f32 %v1079, %v1082
    %vm1084 = vweird.f32 %v1048
    %vm1085 = vweird.f32 %v1079
    %vm1086 = vmor %vm1084, %vm1085
    %v1087 = vsel %vm1086, %v1079, %v1083
    %v1088 = vand.u32 2147483647, %v1048
    %vm1089 = vcmp.eq.f32.partialorder %v1088, 8.507059e+37
    %v1090 = vand.u32 %v1048, 2147483648
    %v1091 = vor.u32 1.1754944e-38, %v1090
    %v1092 = vsel %vm1089, %v1091, %v1087
    %v1093 = vmul.f32 1.0, %v1092
    %v1094 = vtanh.pop %v1036
    %v1095 = vmul.f32 %v1078, %v867
    %v1096 = vmul.f32 %v1063, %v1094
    %v1097 = vadd.f32 %v1095, %v1096
    %v1098 = vtanh.pop %v1097
    %v1099 = vmul.f32 %v1093, %v1098
    %s1100 = sld [smem:[#allocation4 + $0x3]]
    %s1101 = scalar_lea.vmem [#allocation11], %s1100
    %v1102 = vld [vmem:[%s1101] sm:$0x1]
    %1103 = vmatpush.msra.mxu0 %v246
    %1104 = vmatpush.msra.mxu0 %v242
    %1105 = vmatpush.msra.mxu0 %v238
    %1106 = vmatpush.msra.mxu0 %v234
    %1107 = vmatpush.msra.mxu0 %v230
    %1108 = vmatpush.msra.mxu0 %v226
    %1109 = vmatpush.msra.mxu0 %v222
    %1110 = vmatpush.msra.mxu0 %v218
    %1111 = vmatpush.msra.mxu0 %v214
    %1112 = vmatpush.msra.mxu0 %v210
    %1113 = vmatpush.msra.mxu0 %v206
    %1114 = vmatpush.msra.mxu0 %v202
    %1115 = vmatpush.msra.mxu0 %v198
    %1116 = vmatpush.msra.mxu0 %v194
    %1117 = vmatpush.msra.mxu0 %v190
    %1118 = vmatpush.msra.mxu0 %v186
    %1119 = vmatmul.f32.gmra.mxu0 %v1102
    %v1120 = vpop.f32.mrf.mxu0
    %v1121 = vadd.f32 %v405, %v1120
    %1122 = vdwg.mxu0
    %1123 = vmatpush.msra.mxu0 %v247
    %1124 = vmatpush.msra.mxu0 %v243
    %1125 = vmatpush.msra.mxu0 %v239
    %1126 = vmatpush.msra.mxu0 %v235
    %1127 = vmatpush.msra.mxu0 %v231
    %1128 = vmatpush.msra.mxu0 %v227
    %1129 = vmatpush.msra.mxu0 %v223
    %1130 = vmatpush.msra.mxu0 %v219
    %1131 = vmatpush.msra.mxu0 %v215
    %1132 = vmatpush.msra.mxu0 %v211
    %1133 = vmatpush.msra.mxu0 %v207
    %1134 = vmatpush.msra.mxu0 %v203
    %1135 = vmatpush.msra.mxu0 %v199
    %1136 = vmatpush.msra.mxu0 %v195
    %1137 = vmatpush.msra.mxu0 %v191
    %1138 = vmatpush.msra.mxu0 %v187
    %1139 = vmatmul.f32.gmra.mxu0 %v1102
    %v1140 = vpop.f32.mrf.mxu0
    %v1141 = vadd.f32 %v406, %v1140
    %1142 = vdwg.mxu0
    %1143 = vmatpush.msra.mxu0 %v248
    %1144 = vmatpush.msra.mxu0 %v244
    %1145 = vmatpush.msra.mxu0 %v240
    %1146 = vmatpush.msra.mxu0 %v236
    %1147 = vmatpush.msra.mxu0 %v232
    %1148 = vmatpush.msra.mxu0 %v228
    %1149 = vmatpush.msra.mxu0 %v224
    %1150 = vmatpush.msra.mxu0 %v220
    %1151 = vmatpush.msra.mxu0 %v216
    %1152 = vmatpush.msra.mxu0 %v212
    %1153 = vmatpush.msra.mxu0 %v208
    %1154 = vmatpush.msra.mxu0 %v204
    %1155 = vmatpush.msra.mxu0 %v200
    %1156 = vmatpush.msra.mxu0 %v196
    %1157 = vmatpush.msra.mxu0 %v192
    %1158 = vmatpush.msra.mxu0 %v188
    %1159 = vmatmul.f32.gmra.mxu0 %v1102
    %v1160 = vpop.f32.mrf.mxu0
    %v1161 = vadd.f32 %v407, %v1160
    %1162 = vdwg.mxu0
    %1163 = vmatpush.msra.mxu0 %v249
    %1164 = vmatpush.msra.mxu0 %v245
    %1165 = vmatpush.msra.mxu0 %v241
    %1166 = vmatpush.msra.mxu0 %v237
    %1167 = vmatpush.msra.mxu0 %v233
    %1168 = vmatpush.msra.mxu0 %v229
    %1169 = vmatpush.msra.mxu0 %v225
    %1170 = vmatpush.msra.mxu0 %v221
    %1171 = vmatpush.msra.mxu0 %v217
    %1172 = vmatpush.msra.mxu0 %v213
    %1173 = vmatpush.msra.mxu0 %v209
    %1174 = vmatpush.msra.mxu0 %v205
    %1175 = vmatpush.msra.mxu0 %v201
    %1176 = vmatpush.msra.mxu0 %v197
    %1177 = vmatpush.msra.mxu0 %v193
    %1178 = vmatpush.msra.mxu0 %v189
    %1179 = vmatmul.f32.gmra.mxu0 %v1102
    %v1180 = vpop.f32.mrf.mxu0
    %v1181 = vadd.f32 %v408, %v1180
    %1182 = vdwg.mxu0
    %1183 = vmatpush.msra.mxu0 %v310
    %1184 = vmatpush.msra.mxu0 %v306
    %1185 = vmatpush.msra.mxu0 %v302
    %1186 = vmatpush.msra.mxu0 %v298
    %1187 = vmatpush.msra.mxu0 %v294
    %1188 = vmatpush.msra.mxu0 %v290
    %1189 = vmatpush.msra.mxu0 %v286
    %1190 = vmatpush.msra.mxu0 %v282
    %1191 = vmatpush.msra.mxu0 %v278
    %1192 = vmatpush.msra.mxu0 %v274
    %1193 = vmatpush.msra.mxu0 %v270
    %1194 = vmatpush.msra.mxu0 %v266
    %1195 = vmatpush.msra.mxu0 %v262
    %1196 = vmatpush.msra.mxu0 %v258
    %1197 = vmatpush.msra.mxu0 %v254
    %1198 = vmatpush.msra.mxu0 %v250
    %1199 = vmatmul.f32.gmra.mxu0 %v1099
    %v1200 = vpop.f32.mrf.mxu0
    %v1201 = vadd.f32 0.0, %v1200
    %1202 = vdwg.mxu0
    %1203 = vmatpush.msra.mxu0 %v311
    %1204 = vmatpush.msra.mxu0 %v307
    %1205 = vmatpush.msra.mxu0 %v303
    %1206 = vmatpush.msra.mxu0 %v299
    %1207 = vmatpush.msra.mxu0 %v295
    %1208 = vmatpush.msra.mxu0 %v291
    %1209 = vmatpush.msra.mxu0 %v287
    %1210 = vmatpush.msra.mxu0 %v283
    %1211 = vmatpush.msra.mxu0 %v279
    %1212 = vmatpush.msra.mxu0 %v275
    %1213 = vmatpush.msra.mxu0 %v271
    %1214 = vmatpush.msra.mxu0 %v267
    %1215 = vmatpush.msra.mxu0 %v263
    %1216 = vmatpush.msra.mxu0 %v259
    %1217 = vmatpush.msra.mxu0 %v255
    %1218 = vmatpush.msra.mxu0 %v251
    %1219 = vmatmul.f32.gmra.mxu0 %v1099
    %v1220 = vpop.f32.mrf.mxu0
    %v1221 = vadd.f32 0.0, %v1220
    %1222 = vdwg.mxu0
    %1223 = vmatpush.msra.mxu0 %v312
    %1224 = vmatpush.msra.mxu0 %v308
    %1225 = vmatpush.msra.mxu0 %v304
    %1226 = vmatpush.msra.mxu0 %v300
    %1227 = vmatpush.msra.mxu0 %v296
    %1228 = vmatpush.msra.mxu0 %v292
    %1229 = vmatpush.msra.mxu0 %v288
    %1230 = vmatpush.msra.mxu0 %v284
    %1231 = vmatpush.msra.mxu0 %v280
    %1232 = vmatpush.msra.mxu0 %v276
    %1233 = vmatpush.msra.mxu0 %v272
    %1234 = vmatpush.msra.mxu0 %v268
    %1235 = vmatpush.msra.mxu0 %v264
    %1236 = vmatpush.msra.mxu0 %v260
    %1237 = vmatpush.msra.mxu0 %v256
    %1238 = vmatpush.msra.mxu0 %v252
    %1239 = vmatmul.f32.gmra.mxu0 %v1099
    %v1240 = vpop.f32.mrf.mxu0
    %v1241 = vadd.f32 0.0, %v1240
    %1242 = vdwg.mxu0
    %1243 = vmatpush.msra.mxu0 %v313
    %1244 = vmatpush.msra.mxu0 %v309
    %1245 = vmatpush.msra.mxu0 %v305
    %1246 = vmatpush.msra.mxu0 %v301
    %1247 = vmatpush.msra.mxu0 %v297
    %1248 = vmatpush.msra.mxu0 %v293
    %1249 = vmatpush.msra.mxu0 %v289
    %1250 = vmatpush.msra.mxu0 %v285
    %1251 = vmatpush.msra.mxu0 %v281
    %1252 = vmatpush.msra.mxu0 %v277
    %1253 = vmatpush.msra.mxu0 %v273
    %1254 = vmatpush.msra.mxu0 %v269
    %1255 = vmatpush.msra.mxu0 %v265
    %1256 = vmatpush.msra.mxu0 %v261
    %1257 = vmatpush.msra.mxu0 %v257
    %1258 = vmatpush.msra.mxu0 %v253
    %1259 = vmatmul.f32.gmra.mxu0 %v1099
    %v1260 = vpop.f32.mrf.mxu0
    %v1261 = vadd.f32 0.0, %v1260
    %1262 = vdwg.mxu0
    %v1263 = vadd.f32 %v1121, %v1201
    %v1264 = vadd.f32 %v1141, %v1221
    %v1265 = vadd.f32 %v1161, %v1241
    %v1266 = vadd.f32 %v1181, %v1261
    %v1267 = vxor.u32 %v1263, 2147483648
    %v1268 = vxor.u32 %v1264, 2147483648
    %v1269 = vxor.u32 %v1265, 2147483648
    %v1270 = vmul.f32 %v1267, 1.442695
    %v1271 = vpow.pop %v1270
    %v1272 = vmul.f32 %v1268, 1.442695
    %v1273 = vpow.pop %v1272
    %v1274 = vmul.f32 %v1269, 1.442695
    %v1275 = vpow.pop %v1274
    %v1276 = vadd.f32 %v1271, 1.0
    %v1277 = vadd.f32 %v1273, 1.0
    %v1278 = vadd.f32 %v1275, 1.0
    %v1279 = vrcp.pop %v1276
    %v1280 = vmul.f32 %v1276, %v1279
    %v1281 = vsub.f32 1.0, %v1280
    %v1282 = vmul.f32 %v1279, %v1281
    %v1283 = vadd.f32 %v1279, %v1282
    %vm1284 = vweird.f32 %v1276
    %vm1285 = vweird.f32 %v1279
    %vm1286 = vmor %vm1284, %vm1285
    %v1287 = vsel %vm1286, %v1279, %v1283
    %v1288 = vand.u32 2147483647, %v1276
    %vm1289 = vcmp.eq.f32.partialorder %v1288, 8.507059e+37
    %v1290 = vand.u32 %v1276, 2147483648
    %v1291 = vor.u32 1.1754944e-38, %v1290
    %v1292 = vsel %vm1289, %v1291, %v1287
    %v1293 = vmul.f32 1.0, %v1292
    %v1294 = vrcp.pop %v1277
    %v1295 = vmul.f32 %v1277, %v1294
    %v1296 = vsub.f32 1.0, %v1295
    %v1297 = vmul.f32 %v1294, %v1296
    %v1298 = vadd.f32 %v1294, %v1297
    %vm1299 = vweird.f32 %v1277
    %vm1300 = vweird.f32 %v1294
    %vm1301 = vmor %vm1299, %vm1300
    %v1302 = vsel %vm1301, %v1294, %v1298
    %v1303 = vand.u32 2147483647, %v1277
    %vm1304 = vcmp.eq.f32.partialorder %v1303, 8.507059e+37
    %v1305 = vand.u32 %v1277, 2147483648
    %v1306 = vor.u32 1.1754944e-38, %v1305
    %v1307 = vsel %vm1304, %v1306, %v1302
    %v1308 = vmul.f32 1.0, %v1307
    %v1309 = vrcp.pop %v1278
    %v1310 = vmul.f32 %v1278, %v1309
    %v1311 = vsub.f32 1.0, %v1310
    %v1312 = vmul.f32 %v1309, %v1311
    %v1313 = vadd.f32 %v1309, %v1312
    %vm1314 = vweird.f32 %v1278
    %vm1315 = vweird.f32 %v1309
    %vm1316 = vmor %vm1314, %vm1315
    %v1317 = vsel %vm1316, %v1309, %v1313
    %v1318 = vand.u32 2147483647, %v1278
    %vm1319 = vcmp.eq.f32.partialorder %v1318, 8.507059e+37
    %v1320 = vand.u32 %v1278, 2147483648
    %v1321 = vor.u32 1.1754944e-38, %v1320
    %v1322 = vsel %vm1319, %v1321, %v1317
    %v1323 = vmul.f32 1.0, %v1322
    %v1324 = vtanh.pop %v1266
    %v1325 = vmul.f32 %v1308, %v1097
    %v1326 = vmul.f32 %v1293, %v1324
    %v1327 = vadd.f32 %v1325, %v1326
    %v1328 = vtanh.pop %v1327
    %v1329 = vmul.f32 %v1323, %v1328
    %s1330 = sld [smem:[#allocation4 + $0x4]]
    %s1331 = scalar_lea.vmem [#allocation11], %s1330
    %v1332 = vld [vmem:[%s1331] sm:$0x1]
    %1333 = vmatpush.msra.mxu0 %v246
    %1334 = vmatpush.msra.mxu0 %v242
    %1335 = vmatpush.msra.mxu0 %v238
    %1336 = vmatpush.msra.mxu0 %v234
    %1337 = vmatpush.msra.mxu0 %v230
    %1338 = vmatpush.msra.mxu0 %v226
    %1339 = vmatpush.msra.mxu0 %v222
    %1340 = vmatpush.msra.mxu0 %v218
    %1341 = vmatpush.msra.mxu0 %v214
    %1342 = vmatpush.msra.mxu0 %v210
    %1343 = vmatpush.msra.mxu0 %v206
    %1344 = vmatpush.msra.mxu0 %v202
    %1345 = vmatpush.msra.mxu0 %v198
    %1346 = vmatpush.msra.mxu0 %v194
    %1347 = vmatpush.msra.mxu0 %v190
    %1348 = vmatpush.msra.mxu0 %v186
    %1349 = vmatmul.f32.gmra.mxu0 %v1332
    %v1350 = vpop.f32.mrf.mxu0
    %v1351 = vadd.f32 %v405, %v1350
    %1352 = vdwg.mxu0
    %1353 = vmatpush.msra.mxu0 %v247
    %1354 = vmatpush.msra.mxu0 %v243
    %1355 = vmatpush.msra.mxu0 %v239
    %1356 = vmatpush.msra.mxu0 %v235
    %1357 = vmatpush.msra.mxu0 %v231
    %1358 = vmatpush.msra.mxu0 %v227
    %1359 = vmatpush.msra.mxu0 %v223
    %1360 = vmatpush.msra.mxu0 %v219
    %1361 = vmatpush.msra.mxu0 %v215
    %1362 = vmatpush.msra.mxu0 %v211
    %1363 = vmatpush.msra.mxu0 %v207
    %1364 = vmatpush.msra.mxu0 %v203
    %1365 = vmatpush.msra.mxu0 %v199
    %1366 = vmatpush.msra.mxu0 %v195
    %1367 = vmatpush.msra.mxu0 %v191
    %1368 = vmatpush.msra.mxu0 %v187
    %1369 = vmatmul.f32.gmra.mxu0 %v1332
    %v1370 = vpop.f32.mrf.mxu0
    %v1371 = vadd.f32 %v406, %v1370
    %1372 = vdwg.mxu0
    %1373 = vmatpush.msra.mxu0 %v248
    %1374 = vmatpush.msra.mxu0 %v244
    %1375 = vmatpush.msra.mxu0 %v240
    %1376 = vmatpush.msra.mxu0 %v236
    %1377 = vmatpush.msra.mxu0 %v232
    %1378 = vmatpush.msra.mxu0 %v228
    %1379 = vmatpush.msra.mxu0 %v224
    %1380 = vmatpush.msra.mxu0 %v220
    %1381 = vmatpush.msra.mxu0 %v216
    %1382 = vmatpush.msra.mxu0 %v212
    %1383 = vmatpush.msra.mxu0 %v208
    %1384 = vmatpush.msra.mxu0 %v204
    %1385 = vmatpush.msra.mxu0 %v200
    %1386 = vmatpush.msra.mxu0 %v196
    %1387 = vmatpush.msra.mxu0 %v192
    %1388 = vmatpush.msra.mxu0 %v188
    %1389 = vmatmul.f32.gmra.mxu0 %v1332
    %v1390 = vpop.f32.mrf.mxu0
    %v1391 = vadd.f32 %v407, %v1390
    %1392 = vdwg.mxu0
    %1393 = vmatpush.msra.mxu0 %v249
    %1394 = vmatpush.msra.mxu0 %v245
    %1395 = vmatpush.msra.mxu0 %v241
    %1396 = vmatpush.msra.mxu0 %v237
    %1397 = vmatpush.msra.mxu0 %v233
    %1398 = vmatpush.msra.mxu0 %v229
    %1399 = vmatpush.msra.mxu0 %v225
    %1400 = vmatpush.msra.mxu0 %v221
    %1401 = vmatpush.msra.mxu0 %v217
    %1402 = vmatpush.msra.mxu0 %v213
    %1403 = vmatpush.msra.mxu0 %v209
    %1404 = vmatpush.msra.mxu0 %v205
    %1405 = vmatpush.msra.mxu0 %v201
    %1406 = vmatpush.msra.mxu0 %v197
    %1407 = vmatpush.msra.mxu0 %v193
    %1408 = vmatpush.msra.mxu0 %v189
    %1409 = vmatmul.f32.gmra.mxu0 %v1332
    %v1410 = vpop.f32.mrf.mxu0
    %v1411 = vadd.f32 %v408, %v1410
    %1412 = vdwg.mxu0
    %1413 = vmatpush.msra.mxu0 %v310
    %1414 = vmatpush.msra.mxu0 %v306
    %1415 = vmatpush.msra.mxu0 %v302
    %1416 = vmatpush.msra.mxu0 %v298
    %1417 = vmatpush.msra.mxu0 %v294
    %1418 = vmatpush.msra.mxu0 %v290
    %1419 = vmatpush.msra.mxu0 %v286
    %1420 = vmatpush.msra.mxu0 %v282
    %1421 = vmatpush.msra.mxu0 %v278
    %1422 = vmatpush.msra.mxu0 %v274
    %1423 = vmatpush.msra.mxu0 %v270
    %1424 = vmatpush.msra.mxu0 %v266
    %1425 = vmatpush.msra.mxu0 %v262
    %1426 = vmatpush.msra.mxu0 %v258
    %1427 = vmatpush.msra.mxu0 %v254
    %1428 = vmatpush.msra.mxu0 %v250
    %1429 = vmatmul.f32.gmra.mxu0 %v1329
    %v1430 = vpop.f32.mrf.mxu0
    %v1431 = vadd.f32 0.0, %v1430
    %1432 = vdwg.mxu0
    %1433 = vmatpush.msra.mxu0 %v311
    %1434 = vmatpush.msra.mxu0 %v307
    %1435 = vmatpush.msra.mxu0 %v303
    %1436 = vmatpush.msra.mxu0 %v299
    %1437 = vmatpush.msra.mxu0 %v295
    %1438 = vmatpush.msra.mxu0 %v291
    %1439 = vmatpush.msra.mxu0 %v287
    %1440 = vmatpush.msra.mxu0 %v283
    %1441 = vmatpush.msra.mxu0 %v279
    %1442 = vmatpush.msra.mxu0 %v275
    %1443 = vmatpush.msra.mxu0 %v271
    %1444 = vmatpush.msra.mxu0 %v267
    %1445 = vmatpush.msra.mxu0 %v263
    %1446 = vmatpush.msra.mxu0 %v259
    %1447 = vmatpush.msra.mxu0 %v255
    %1448 = vmatpush.msra.mxu0 %v251
    %1449 = vmatmul.f32.gmra.mxu0 %v1329
    %v1450 = vpop.f32.mrf.mxu0
    %v1451 = vadd.f32 0.0, %v1450
    %1452 = vdwg.mxu0
    %1453 = vmatpush.msra.mxu0 %v312
    %1454 = vmatpush.msra.mxu0 %v308
    %1455 = vmatpush.msra.mxu0 %v304
    %1456 = vmatpush.msra.mxu0 %v300
    %1457 = vmatpush.msra.mxu0 %v296
    %1458 = vmatpush.msra.mxu0 %v292
    %1459 = vmatpush.msra.mxu0 %v288
    %1460 = vmatpush.msra.mxu0 %v284
    %1461 = vmatpush.msra.mxu0 %v280
    %1462 = vmatpush.msra.mxu0 %v276
    %1463 = vmatpush.msra.mxu0 %v272
    %1464 = vmatpush.msra.mxu0 %v268
    %1465 = vmatpush.msra.mxu0 %v264
    %1466 = vmatpush.msra.mxu0 %v260
    %1467 = vmatpush.msra.mxu0 %v256
    %1468 = vmatpush.msra.mxu0 %v252
    %1469 = vmatmul.f32.gmra.mxu0 %v1329
    %v1470 = vpop.f32.mrf.mxu0
    %v1471 = vadd.f32 0.0, %v1470
    %1472 = vdwg.mxu0
    %1473 = vmatpush.msra.mxu0 %v313
    %1474 = vmatpush.msra.mxu0 %v309
    %1475 = vmatpush.msra.mxu0 %v305
    %1476 = vmatpush.msra.mxu0 %v301
    %1477 = vmatpush.msra.mxu0 %v297
    %1478 = vmatpush.msra.mxu0 %v293
    %1479 = vmatpush.msra.mxu0 %v289
    %1480 = vmatpush.msra.mxu0 %v285
    %1481 = vmatpush.msra.mxu0 %v281
    %1482 = vmatpush.msra.mxu0 %v277
    %1483 = vmatpush.msra.mxu0 %v273
    %1484 = vmatpush.msra.mxu0 %v269
    %1485 = vmatpush.msra.mxu0 %v265
    %1486 = vmatpush.msra.mxu0 %v261
    %1487 = vmatpush.msra.mxu0 %v257
    %1488 = vmatpush.msra.mxu0 %v253
    %1489 = vmatmul.f32.gmra.mxu0 %v1329
    %v1490 = vpop.f32.mrf.mxu0
    %v1491 = vadd.f32 0.0, %v1490
    %1492 = vdwg.mxu0
    %v1493 = vadd.f32 %v1351, %v1431
    %v1494 = vadd.f32 %v1371, %v1451
    %v1495 = vadd.f32 %v1391, %v1471
    %v1496 = vadd.f32 %v1411, %v1491
    %v1497 = vxor.u32 %v1493, 2147483648
    %v1498 = vxor.u32 %v1494, 2147483648
    %v1499 = vxor.u32 %v1495, 2147483648
    %v1500 = vmul.f32 %v1497, 1.442695
    %v1501 = vpow.pop %v1500
    %v1502 = vmul.f32 %v1498, 1.442695
    %v1503 = vpow.pop %v1502
    %v1504 = vmul.f32 %v1499, 1.442695
    %v1505 = vpow.pop %v1504
    %v1506 = vadd.f32 %v1501, 1.0
    %v1507 = vadd.f32 %v1503, 1.0
    %v1508 = vadd.f32 %v1505, 1.0
    %v1509 = vrcp.pop %v1506
    %v1510 = vmul.f32 %v1506, %v1509
    %v1511 = vsub.f32 1.0, %v1510
    %v1512 = vmul.f32 %v1509, %v1511
    %v1513 = vadd.f32 %v1509, %v1512
    %vm1514 = vweird.f32 %v1506
    %vm1515 = vweird.f32 %v1509
    %vm1516 = vmor %vm1514, %vm1515
    %v1517 = vsel %vm1516, %v1509, %v1513
    %v1518 = vand.u32 2147483647, %v1506
    %vm1519 = vcmp.eq.f32.partialorder %v1518, 8.507059e+37
    %v1520 = vand.u32 %v1506, 2147483648
    %v1521 = vor.u32 1.1754944e-38, %v1520
    %v1522 = vsel %vm1519, %v1521, %v1517
    %v1523 = vmul.f32 1.0, %v1522
    %v1524 = vrcp.pop %v1507
    %v1525 = vmul.f32 %v1507, %v1524
    %v1526 = vsub.f32 1.0, %v1525
    %v1527 = vmul.f32 %v1524, %v1526
    %v1528 = vadd.f32 %v1524, %v1527
    %vm1529 = vweird.f32 %v1507
    %vm1530 = vweird.f32 %v1524
    %vm1531 = vmor %vm1529, %vm1530
    %v1532 = vsel %vm1531, %v1524, %v1528
    %v1533 = vand.u32 2147483647, %v1507
    %vm1534 = vcmp.eq.f32.partialorder %v1533, 8.507059e+37
    %v1535 = vand.u32 %v1507, 2147483648
    %v1536 = vor.u32 1.1754944e-38, %v1535
    %v1537 = vsel %vm1534, %v1536, %v1532
    %v1538 = vmul.f32 1.0, %v1537
    %v1539 = vrcp.pop %v1508
    %v1540 = vmul.f32 %v1508, %v1539
    %v1541 = vsub.f32 1.0, %v1540
    %v1542 = vmul.f32 %v1539, %v1541
    %v1543 = vadd.f32 %v1539, %v1542
    %vm1544 = vweird.f32 %v1508
    %vm1545 = vweird.f32 %v1539
    %vm1546 = vmor %vm1544, %vm1545
    %v1547 = vsel %vm1546, %v1539, %v1543
    %v1548 = vand.u32 2147483647, %v1508
    %vm1549 = vcmp.eq.f32.partialorder %v1548, 8.507059e+37
    %v1550 = vand.u32 %v1508, 2147483648
    %v1551 = vor.u32 1.1754944e-38, %v1550
    %v1552 = vsel %vm1549, %v1551, %v1547
    %v1553 = vmul.f32 1.0, %v1552
    %v1554 = vtanh.pop %v1496
    %v1555 = vmul.f32 %v1538, %v1327
    %v1556 = vmul.f32 %v1523, %v1554
    %v1557 = vadd.f32 %v1555, %v1556
    %v1558 = vtanh.pop %v1557
    %v1559 = vmul.f32 %v1553, %v1558
    %v1560 = vld [vmem:[#allocation15] sm:$0xff]
    %v1561 = vld [vmem:[#allocation17] sm:$0xff]
    %v1562 = vld [vmem:[#allocation17 + $0x8] sm:$0xff]
    %v1563 = vld [vmem:[#allocation17 + $0x10] sm:$0xff]
    %v1564 = vld [vmem:[#allocation17 + $0x18] sm:$0xff]
    %v1565 = vld [vmem:[#allocation17 + $0x20] sm:$0xff]
    %v1566 = vld [vmem:[#allocation17 + $0x28] sm:$0xff]
    %v1567 = vld [vmem:[#allocation17 + $0x30] sm:$0xff]
    %v1568 = vld [vmem:[#allocation17 + $0x38] sm:$0xff]
    %v1569 = vld [vmem:[#allocation17 + $0x40] sm:$0xff]
    %v1570 = vld [vmem:[#allocation17 + $0x48] sm:$0xff]
    %v1571 = vld [vmem:[#allocation17 + $0x50] sm:$0xff]
    %v1572 = vld [vmem:[#allocation17 + $0x58] sm:$0xff]
    %v1573 = vld [vmem:[#allocation17 + $0x60] sm:$0xff]
    %v1574 = vld [vmem:[#allocation17 + $0x68] sm:$0xff]
    %v1575 = vld [vmem:[#allocation17 + $0x70] sm:$0xff]
    %v1576 = vld [vmem:[#allocation17 + $0x78] sm:$0xff]
    %v1577 = vld [vmem:[#allocation17 + $0x80] sm:$0xff]
    %v1578 = vld [vmem:[#allocation17 + $0x88] sm:$0xff]
    %v1579 = vld [vmem:[#allocation17 + $0x90] sm:$0xff]
    %v1580 = vld [vmem:[#allocation17 + $0x98] sm:$0xff]
    %v1581 = vld [vmem:[#allocation17 + $0xa0] sm:$0xff]
    %v1582 = vld [vmem:[#allocation17 + $0xa8] sm:$0xff]
    %v1583 = vld [vmem:[#allocation17 + $0xb0] sm:$0xff]
    %v1584 = vld [vmem:[#allocation17 + $0xb8] sm:$0xff]
    %v1585 = vld [vmem:[#allocation17 + $0xc0] sm:$0xff]
    %v1586 = vld [vmem:[#allocation17 + $0xc8] sm:$0xff]
    %v1587 = vld [vmem:[#allocation17 + $0xd0] sm:$0xff]
    %v1588 = vld [vmem:[#allocation17 + $0xd8] sm:$0xff]
    %v1589 = vld [vmem:[#allocation17 + $0xe0] sm:$0xff]
    %v1590 = vld [vmem:[#allocation17 + $0xe8] sm:$0xff]
    %v1591 = vld [vmem:[#allocation17 + $0xf0] sm:$0xff]
    %v1592 = vld [vmem:[#allocation17 + $0xf8] sm:$0xff]
    %v1593 = vld [vmem:[#allocation17 + $0x100] sm:$0xff]
    %v1594 = vld [vmem:[#allocation17 + $0x108] sm:$0xff]
    %v1595 = vld [vmem:[#allocation17 + $0x110] sm:$0xff]
    %v1596 = vld [vmem:[#allocation17 + $0x118] sm:$0xff]
    %v1597 = vld [vmem:[#allocation17 + $0x120] sm:$0xff]
    %v1598 = vld [vmem:[#allocation17 + $0x128] sm:$0xff]
    %v1599 = vld [vmem:[#allocation17 + $0x130] sm:$0xff]
    %v1600 = vld [vmem:[#allocation17 + $0x138] sm:$0xff]
    %v1601 = vld [vmem:[#allocation17 + $0x140] sm:$0xff]
    %v1602 = vld [vmem:[#allocation17 + $0x148] sm:$0xff]
    %v1603 = vld [vmem:[#allocation17 + $0x150] sm:$0xff]
    %v1604 = vld [vmem:[#allocation17 + $0x158] sm:$0xff]
    %v1605 = vld [vmem:[#allocation17 + $0x160] sm:$0xff]
    %v1606 = vld [vmem:[#allocation17 + $0x168] sm:$0xff]
    %v1607 = vld [vmem:[#allocation17 + $0x170] sm:$0xff]
    %v1608 = vld [vmem:[#allocation17 + $0x178] sm:$0xff]
    %v1609 = vld [vmem:[#allocation17 + $0x180] sm:$0xff]
    %v1610 = vld [vmem:[#allocation17 + $0x188] sm:$0xff]
    %v1611 = vld [vmem:[#allocation17 + $0x190] sm:$0xff]
    %v1612 = vld [vmem:[#allocation17 + $0x198] sm:$0xff]
    %v1613 = vld [vmem:[#allocation17 + $0x1a0] sm:$0xff]
    %v1614 = vld [vmem:[#allocation17 + $0x1a8] sm:$0xff]
    %v1615 = vld [vmem:[#allocation17 + $0x1b0] sm:$0xff]
    %v1616 = vld [vmem:[#allocation17 + $0x1b8] sm:$0xff]
    %v1617 = vld [vmem:[#allocation17 + $0x1c0] sm:$0xff]
    %v1618 = vld [vmem:[#allocation17 + $0x1c8] sm:$0xff]
    %v1619 = vld [vmem:[#allocation17 + $0x1d0] sm:$0xff]
    %v1620 = vld [vmem:[#allocation17 + $0x1d8] sm:$0xff]
    %v1621 = vld [vmem:[#allocation17 + $0x1e0] sm:$0xff]
    %v1622 = vld [vmem:[#allocation17 + $0x1e8] sm:$0xff]
    %v1623 = vld [vmem:[#allocation17 + $0x1f0] sm:$0xff]
    %v1624 = vld [vmem:[#allocation17 + $0x1f8] sm:$0xff]
    %v1625 = vld [vmem:[%s10] sm:$0xf]
    %v1627 = vperm.slane %v1625, 0
    %v1628 = vperm.slane %v1625, 1
    %v1629 = vperm.slane %v1625, 2
    %v1630 = vperm.slane %v1625, 3
    %1635 = vmatpush.msra.mxu0 %v1621
    %1636 = vmatpush.msra.mxu0 %v1617
    %1637 = vmatpush.msra.mxu0 %v1613
    %1638 = vmatpush.msra.mxu0 %v1609
    %1639 = vmatpush.msra.mxu0 %v1605
    %1640 = vmatpush.msra.mxu0 %v1601
    %1641 = vmatpush.msra.mxu0 %v1597
    %1642 = vmatpush.msra.mxu0 %v1593
    %1643 = vmatpush.msra.mxu0 %v1589
    %1644 = vmatpush.msra.mxu0 %v1585
    %1645 = vmatpush.msra.mxu0 %v1581
    %1646 = vmatpush.msra.mxu0 %v1577
    %1647 = vmatpush.msra.mxu0 %v1573
    %1648 = vmatpush.msra.mxu0 %v1569
    %1649 = vmatpush.msra.mxu0 %v1565
    %1650 = vmatpush.msra.mxu0 %v1561
    %1651 = vmatmul.f32.gmra.mxu0 %v1560
    %v1652 = vpop.f32.mrf.mxu0
    %v1653 = vadd.f32 %v1627, %v1652
    %1654 = vdwg.mxu0
    %1655 = vmatpush.msra.mxu0 %v1622
    %1656 = vmatpush.msra.mxu0 %v1618
    %1657 = vmatpush.msra.mxu0 %v1614
    %1658 = vmatpush.msra.mxu0 %v1610
    %1659 = vmatpush.msra.mxu0 %v1606
    %1660 = vmatpush.msra.mxu0 %v1602
    %1661 = vmatpush.msra.mxu0 %v1598
    %1662 = vmatpush.msra.mxu0 %v1594
    %1663 = vmatpush.msra.mxu0 %v1590
    %1664 = vmatpush.msra.mxu0 %v1586
    %1665 = vmatpush.msra.mxu0 %v1582
    %1666 = vmatpush.msra.mxu0 %v1578
    %1667 = vmatpush.msra.mxu0 %v1574
    %1668 = vmatpush.msra.mxu0 %v1570
    %1669 = vmatpush.msra.mxu0 %v1566
    %1670 = vmatpush.msra.mxu0 %v1562
    %1671 = vmatmul.f32.gmra.mxu0 %v1560
    %v1672 = vpop.f32.mrf.mxu0
    %v1673 = vadd.f32 %v1628, %v1672
    %1674 = vdwg.mxu0
    %1675 = vmatpush.msra.mxu0 %v1623
    %1676 = vmatpush.msra.mxu0 %v1619
    %1677 = vmatpush.msra.mxu0 %v1615
    %1678 = vmatpush.msra.mxu0 %v1611
    %1679 = vmatpush.msra.mxu0 %v1607
    %1680 = vmatpush.msra.mxu0 %v1603
    %1681 = vmatpush.msra.mxu0 %v1599
    %1682 = vmatpush.msra.mxu0 %v1595
    %1683 = vmatpush.msra.mxu0 %v1591
    %1684 = vmatpush.msra.mxu0 %v1587
    %1685 = vmatpush.msra.mxu0 %v1583
    %1686 = vmatpush.msra.mxu0 %v1579
    %1687 = vmatpush.msra.mxu0 %v1575
    %1688 = vmatpush.msra.mxu0 %v1571
    %1689 = vmatpush.msra.mxu0 %v1567
    %1690 = vmatpush.msra.mxu0 %v1563
    %1691 = vmatmul.f32.gmra.mxu0 %v1560
    %v1692 = vpop.f32.mrf.mxu0
    %v1693 = vadd.f32 %v1629, %v1692
    %1694 = vdwg.mxu0
    %1695 = vmatpush.msra.mxu0 %v1624
    %1696 = vmatpush.msra.mxu0 %v1620
    %1697 = vmatpush.msra.mxu0 %v1616
    %1698 = vmatpush.msra.mxu0 %v1612
    %1699 = vmatpush.msra.mxu0 %v1608
    %1700 = vmatpush.msra.mxu0 %v1604
    %1701 = vmatpush.msra.mxu0 %v1600
    %1702 = vmatpush.msra.mxu0 %v1596
    %1703 = vmatpush.msra.mxu0 %v1592
    %1704 = vmatpush.msra.mxu0 %v1588
    %1705 = vmatpush.msra.mxu0 %v1584
    %1706 = vmatpush.msra.mxu0 %v1580
    %1707 = vmatpush.msra.mxu0 %v1576
    %1708 = vmatpush.msra.mxu0 %v1572
    %1709 = vmatpush.msra.mxu0 %v1568
    %1710 = vmatpush.msra.mxu0 %v1564
    %1711 = vmatmul.f32.gmra.mxu0 %v1560
    %v1712 = vpop.f32.mrf.mxu0
    %v1713 = vadd.f32 %v1630, %v1712
    %1714 = vdwg.mxu0
    %1715 = vst [vmem:[#allocation2] sm:$0xff] %v1653
    %1716 = vst [vmem:[#allocation2 + $0x8] sm:$0xff] %v1673
    %1717 = vst [vmem:[#allocation2 + $0x10] sm:$0xff] %v1693
    %1718 = vst [vmem:[#allocation2 + $0x18] sm:$0xff] %v1713
    %s1719 = sld [smem:[#allocation8]]
    %s1720 = sld [smem:[#allocation8 + $0x1]]
    %s1721 = sld [smem:[#allocation8 + $0x2]]
    %s1722 = sld [smem:[#allocation8 + $0x3]]
    %s1723 = sld [smem:[#allocation8 + $0x4]]
    %s1724 = sld [smem:[#allocation8 + $0x5]]
    %s1725 = sld [smem:[#allocation8 + $0x6]]
    %s1726 = sld [smem:[#allocation10 + $0x1]]
    %s1727 = sld [smem:[#allocation10 + $0x2]]
    %s1728 = sld [smem:[#allocation10 + $0x3]]
    %s1729 = sld [smem:[#allocation10 + $0x4]]
    %s1730 = sld [smem:[#allocation10 + $0x5]]
    %s1731 = sld [smem:[#allocation10 + $0x6]]
    %s1732 = sshra.s32 %s1719, 3
    %s1733 = sand.u32 %s1719, 7
    %s1734 = sshra.s32 %s1719, 3
    %s1735 = sand.u32 %s1719, 7
    %s1736 = smul.u32 %s1732, 4
    %s1737 = smul.u32 %s1736, 8
    %s1738 = sadd.s32 %s1737, %s1735
    %s1739 = scalar_lea.vmem [#allocation2], %s1738
    %v1740 = vld [vmem:[%s1739] ss:$8 sm:$0xf]
    %1741 = vmatpush.msra.mxu0 %v375
    %1742 = vmatpush.msra.mxu0 %v371
    %1743 = vmatpush.msra.mxu0 %v367
    %1744 = vmatpush.msra.mxu0 %v363
    %1745 = vmatpush.msra.mxu0 %v359
    %1746 = vmatpush.msra.mxu0 %v355
    %1747 = vmatpush.msra.mxu0 %v351
    %1748 = vmatpush.msra.mxu0 %v347
    %1749 = vmatpush.msra.mxu0 %v343
    %1750 = vmatpush.msra.mxu0 %v339
    %1751 = vmatpush.msra.mxu0 %v335
    %1752 = vmatpush.msra.mxu0 %v331
    %1753 = vmatpush.msra.mxu0 %v327
    %1754 = vmatpush.msra.mxu0 %v323
    %1755 = vmatpush.msra.mxu0 %v319
    %1756 = vmatpush.msra.mxu0 %v315
    %1757 = vmatmul.f32.gmra.mxu0 %v1559
    %v1758 = vpop.f32.mrf.mxu0
    %v1759 = vadd.f32 0.0, %v1758
    %1760 = vdwg.mxu0
    %1761 = vmatpush.msra.mxu0 %v376
    %1762 = vmatpush.msra.mxu0 %v372
    %1763 = vmatpush.msra.mxu0 %v368
    %1764 = vmatpush.msra.mxu0 %v364
    %1765 = vmatpush.msra.mxu0 %v360
    %1766 = vmatpush.msra.mxu0 %v356
    %1767 = vmatpush.msra.mxu0 %v352
    %1768 = vmatpush.msra.mxu0 %v348
    %1769 = vmatpush.msra.mxu0 %v344
    %1770 = vmatpush.msra.mxu0 %v340
    %1771 = vmatpush.msra.mxu0 %v336
    %1772 = vmatpush.msra.mxu0 %v332
    %1773 = vmatpush.msra.mxu0 %v328
    %1774 = vmatpush.msra.mxu0 %v324
    %1775 = vmatpush.msra.mxu0 %v320
    %1776 = vmatpush.msra.mxu0 %v316
    %1777 = vmatmul.f32.gmra.mxu0 %v1559
    %v1778 = vpop.f32.mrf.mxu0
    %v1779 = vadd.f32 0.0, %v1778
    %1780 = vdwg.mxu0
    %1781 = vmatpush.msra.mxu0 %v377
    %1782 = vmatpush.msra.mxu0 %v373
    %1783 = vmatpush.msra.mxu0 %v369
    %1784 = vmatpush.msra.mxu0 %v365
    %1785 = vmatpush.msra.mxu0 %v361
    %1786 = vmatpush.msra.mxu0 %v357
    %1787 = vmatpush.msra.mxu0 %v353
    %1788 = vmatpush.msra.mxu0 %v349
    %1789 = vmatpush.msra.mxu0 %v345
    %1790 = vmatpush.msra.mxu0 %v341
    %1791 = vmatpush.msra.mxu0 %v337
    %1792 = vmatpush.msra.mxu0 %v333
    %1793 = vmatpush.msra.mxu0 %v329
    %1794 = vmatpush.msra.mxu0 %v325
    %1795 = vmatpush.msra.mxu0 %v321
    %1796 = vmatpush.msra.mxu0 %v317
    %1797 = vmatmul.f32.gmra.mxu0 %v1559
    %v1798 = vpop.f32.mrf.mxu0
    %v1799 = vadd.f32 0.0, %v1798
    %1800 = vdwg.mxu0
    %1801 = vmatpush.msra.mxu0 %v378
    %1802 = vmatpush.msra.mxu0 %v374
    %1803 = vmatpush.msra.mxu0 %v370
    %1804 = vmatpush.msra.mxu0 %v366
    %1805 = vmatpush.msra.mxu0 %v362
    %1806 = vmatpush.msra.mxu0 %v358
    %1807 = vmatpush.msra.mxu0 %v354
    %1808 = vmatpush.msra.mxu0 %v350
    %1809 = vmatpush.msra.mxu0 %v346
    %1810 = vmatpush.msra.mxu0 %v342
    %1811 = vmatpush.msra.mxu0 %v338
    %1812 = vmatpush.msra.mxu0 %v334
    %1813 = vmatpush.msra.mxu0 %v330
    %1814 = vmatpush.msra.mxu0 %v326
    %1815 = vmatpush.msra.mxu0 %v322
    %1816 = vmatpush.msra.mxu0 %v318
    %1817 = vmatmul.f32.gmra.mxu0 %v1559
    %v1818 = vpop.f32.mrf.mxu0
    %v1819 = vadd.f32 0.0, %v1818
    %1820 = vdwg.mxu0
    %v1825 = vrot.slane %v1779, 7
    %v1826 = vrot.slane %v1799, 6
    %v1827 = vrot.slane %v1819, 5
    %vm1828 = vcmask 1040384
    %v1829 = vsel %vm1828, %v1759, %v1825
    %vm1830 = vcmask 1042434
    %v1831 = vsel %vm1830, %v1826, %v1827
    %vm1832 = vcmask 1041408
    %v1833 = vsel %vm1832, %v1829, %v1831
    %v1835 = vadd.f32 %v1740, %v1833
    %v1836 = vxor.u32 %v1835, 2147483648
    %v1837 = vmul.f32 %v1836, 1.442695
    %v1838 = vpow.pop %v1837
    %v1839 = vadd.f32 %v1838, 1.0
    %v1840 = vrcp.pop %v1839
    %v1841 = vmul.f32 %v1839, %v1840
    %v1842 = vsub.f32 1.0, %v1841
    %v1843 = vmul.f32 %v1840, %v1842
    %v1844 = vadd.f32 %v1840, %v1843
    %vm1845 = vweird.f32 %v1839
    %vm1846 = vweird.f32 %v1840
    %vm1847 = vmor %vm1845, %vm1846
    %v1848 = vsel %vm1847, %v1840, %v1844
    %v1849 = vand.u32 2147483647, %v1839
    %vm1850 = vcmp.eq.f32.partialorder %v1849, 8.507059e+37
    %v1851 = vand.u32 %v1839, 2147483648
    %v1852 = vor.u32 1.1754944e-38, %v1851
    %v1853 = vsel %vm1850, %v1852, %v1848
    %v1854 = vmul.f32 1.0, %v1853
    %v1856 = vrot.slane %v1835, 3
    %v1858 = vtanh.pop %v1856
    %v1860 = vrot.slane %v1854, 1
    %v1862 = vmul.f32 %v1860, %v1557
    %v1863 = vmul.f32 %v1854, %v1858
    %v1864 = vadd.f32 %v1862, %v1863
    %v1865 = vtanh.pop %v1864
    %v1866 = vrot.slane %v1854, 2
    %v1868 = vmul.f32 %v1866, %v1865
    %p1869 = scmp.eq.s32.totalorder %s1726, 1
    // Predicated region
    $region94: #{tpu_custom_call.1} parent=1 // pred_check
      %p1870 = pneg %p1869
    $region95: #{tpu_custom_call.1} parent=1 // pred_check_branch
      %1872 = sbr.rel (%p1870) target = $region97
    $region96: #{tpu_custom_call.1} parent=1 // pred_region
      _
    $region97: #{tpu_custom_call.1} parent=1 // pred_fallthru
      _
    %p1873 = pneg %p1869
    // Predicated region
    $region98: #{tpu_custom_call.1} parent=1 // pred_check
      _
    $region99: #{tpu_custom_call.1} parent=1 // pred_check_branch
      %1875 = sbr.rel (%p1869) target = $region101
    $region100: #{tpu_custom_call.1} parent=1 // pred_region
      %1876 = vmatpush.msra.mxu0 %v394
      %1877 = vmatpush.msra.mxu0 %v393
      %1878 = vmatpush.msra.mxu0 %v392
      %1879 = vmatpush.msra.mxu0 %v391
      %1880 = vmatpush.msra.mxu0 %v390
      %1881 = vmatpush.msra.mxu0 %v389
      %1882 = vmatpush.msra.mxu0 %v388
      %1883 = vmatpush.msra.mxu0 %v387
      %1884 = vmatpush.msra.mxu0 %v386
      %1885 = vmatpush.msra.mxu0 %v385
      %1886 = vmatpush.msra.mxu0 %v384
      %1887 = vmatpush.msra.mxu0 %v383
      %1888 = vmatpush.msra.mxu0 %v382
      %1889 = vmatpush.msra.mxu0 %v381
      %1890 = vmatpush.msra.mxu0 %v380
      %1891 = vmatpush.msra.mxu0 %v379
      %1892 = vmatmul.f32.gmra.mxu0 %v1868
      %v1893 = vpop.f32.mrf.mxu0
      %v1894 = vadd.f32 %v395, %v1893
      %1895 = vdwg.mxu0
      %vm1897 = vcmp.lt.s32.totalorder %v1894, 0
      %v1898 = vsub.s32 2147483648, %v1894
      %v1899 = vsel %vm1897, %v1898, %v1894
      %v1900 = vand.u32 %v1899, 4294967288
      %v1901 = vor.u32 %v1900, %v400
      %v1902 = vsel %vm1828, %v1901, 2147483648
      %v1903 = vand.u32 %v1902, 65535
      %v1904 = vshra.s32 %v1902, 16
      %v1905 = vcvt.s32.f32 %v1903
      %v1906 = vcvt.s32.f32 %v1904
      %1907 = vmax.xlane.f32.xlu0 %v1906
      %v1908 = vpop.xlane.xlu0 %1907
      %vm1909 = vcmp.eq.f32.partialorder %v1906, %v1908
      %v1910 = vsel %vm1909, %v1905, -inf
      %1911 = vmax.xlane.f32.xlu0 %v1910
      %v1912 = vpop.xlane.xlu0 %1911
      %v1913 = vcvt.f32.s32 %v1912
      %v1914 = vcvt.f32.s32 %v1908
      %v1915 = vshll.u32 %v1914, 16
      %v1916 = vadd.s32 %v1915, %v1913
      %v1917 = vrot.slane %v1916, 4
      %vm1918 = vcmp.gt.s32.totalorder %v1916, %v1917
      %v1919 = vsel %vm1918, %v1916, %v1917
      %v1920 = vrot.slane %v1919, 2
      %vm1921 = vcmp.gt.s32.totalorder %v1919, %v1920
      %v1922 = vsel %vm1921, %v1919, %v1920
      %v1923 = vrot.slane %v1922, 1
      %vm1924 = vcmp.gt.s32.totalorder %v1922, %v1923
      %v1925 = vsel %vm1924, %v1922, %v1923
      %s1926 = vtos %v1925
      %s1927 = sand.u32 %s1926, 7
      %s1928 = ssub.s32 7, %s1927
    $region101: #{tpu_custom_call.1} parent=1 // pred_fallthru
      %s1929 = sphi %s1720, %s1928
    %s1930 = sshra.s32 %s1929, 3
    %s1931 = sand.u32 %s1929, 7
    %s1932 = sshra.s32 %s1929, 3
    %s1933 = sand.u32 %s1929, 7
    %s1934 = smul.u32 %s1930, 4
    %s1935 = smul.u32 %s1934, 8
    %s1936 = sadd.s32 %s1935, %s1933
    %s1937 = scalar_lea.vmem [#allocation2], %s1936
    %v1938 = vld [vmem:[%s1937] ss:$8 sm:$0xf]
    %1939 = vmatpush.msra.mxu0 %v394
    %1940 = vmatpush.msra.mxu0 %v393
    %1941 = vmatpush.msra.mxu0 %v392
    %1942 = vmatpush.msra.mxu0 %v391
    %1943 = vmatpush.msra.mxu0 %v390
    %1944 = vmatpush.msra.mxu0 %v389
    %1945 = vmatpush.msra.mxu0 %v388
    %1946 = vmatpush.msra.mxu0 %v387
    %1947 = vmatpush.msra.mxu0 %v386
    %1948 = vmatpush.msra.mxu0 %v385
    %1949 = vmatpush.msra.mxu0 %v384
    %1950 = vmatpush.msra.mxu0 %v383
    %1951 = vmatpush.msra.mxu0 %v382
    %1952 = vmatpush.msra.mxu0 %v381
    %1953 = vmatpush.msra.mxu0 %v380
    %1954 = vmatpush.msra.mxu0 %v379
    %1955 = vmatmul.f32.gmra.mxu0 %v1868
    %v1956 = vpop.f32.mrf.mxu0
    %v1957 = vadd.f32 %v395, %v1956
    %1958 = vdwg.mxu0
    %1959 = vst [vmem:[#allocation3 + $0x1] sm:$0x1] %v1957
    %1960 = vmatpush.msra.mxu0 %v375
    %1961 = vmatpush.msra.mxu0 %v371
    %1962 = vmatpush.msra.mxu0 %v367
    %1963 = vmatpush.msra.mxu0 %v363
    %1964 = vmatpush.msra.mxu0 %v359
    %1965 = vmatpush.msra.mxu0 %v355
    %1966 = vmatpush.msra.mxu0 %v351
    %1967 = vmatpush.msra.mxu0 %v347
    %1968 = vmatpush.msra.mxu0 %v343
    %1969 = vmatpush.msra.mxu0 %v339
    %1970 = vmatpush.msra.mxu0 %v335
    %1971 = vmatpush.msra.mxu0 %v331
    %1972 = vmatpush.msra.mxu0 %v327
    %1973 = vmatpush.msra.mxu0 %v323
    %1974 = vmatpush.msra.mxu0 %v319
    %1975 = vmatpush.msra.mxu0 %v315
    %1976 = vmatmul.f32.gmra.mxu0 %v1868
    %v1977 = vpop.f32.mrf.mxu0
    %v1978 = vadd.f32 0.0, %v1977
    %1979 = vdwg.mxu0
    %1980 = vmatpush.msra.mxu0 %v376
    %1981 = vmatpush.msra.mxu0 %v372
    %1982 = vmatpush.msra.mxu0 %v368
    %1983 = vmatpush.msra.mxu0 %v364
    %1984 = vmatpush.msra.mxu0 %v360
    %1985 = vmatpush.msra.mxu0 %v356
    %1986 = vmatpush.msra.mxu0 %v352
    %1987 = vmatpush.msra.mxu0 %v348
    %1988 = vmatpush.msra.mxu0 %v344
    %1989 = vmatpush.msra.mxu0 %v340
    %1990 = vmatpush.msra.mxu0 %v336
    %1991 = vmatpush.msra.mxu0 %v332
    %1992 = vmatpush.msra.mxu0 %v328
    %1993 = vmatpush.msra.mxu0 %v324
    %1994 = vmatpush.msra.mxu0 %v320
    %1995 = vmatpush.msra.mxu0 %v316
    %1996 = vmatmul.f32.gmra.mxu0 %v1868
    %v1997 = vpop.f32.mrf.mxu0
    %v1998 = vadd.f32 0.0, %v1997
    %1999 = vdwg.mxu0
    %2000 = vmatpush.msra.mxu0 %v377
    %2001 = vmatpush.msra.mxu0 %v373
    %2002 = vmatpush.msra.mxu0 %v369
    %2003 = vmatpush.msra.mxu0 %v365
    %2004 = vmatpush.msra.mxu0 %v361
    %2005 = vmatpush.msra.mxu0 %v357
    %2006 = vmatpush.msra.mxu0 %v353
    %2007 = vmatpush.msra.mxu0 %v349
    %2008 = vmatpush.msra.mxu0 %v345
    %2009 = vmatpush.msra.mxu0 %v341
    %2010 = vmatpush.msra.mxu0 %v337
    %2011 = vmatpush.msra.mxu0 %v333
    %2012 = vmatpush.msra.mxu0 %v329
    %2013 = vmatpush.msra.mxu0 %v325
    %2014 = vmatpush.msra.mxu0 %v321
    %2015 = vmatpush.msra.mxu0 %v317
    %2016 = vmatmul.f32.gmra.mxu0 %v1868
    %v2017 = vpop.f32.mrf.mxu0
    %v2018 = vadd.f32 0.0, %v2017
    %2019 = vdwg.mxu0
    %2020 = vmatpush.msra.mxu0 %v378
    %2021 = vmatpush.msra.mxu0 %v374
    %2022 = vmatpush.msra.mxu0 %v370
    %2023 = vmatpush.msra.mxu0 %v366
    %2024 = vmatpush.msra.mxu0 %v362
    %2025 = vmatpush.msra.mxu0 %v358
    %2026 = vmatpush.msra.mxu0 %v354
    %2027 = vmatpush.msra.mxu0 %v350
    %2028 = vmatpush.msra.mxu0 %v346
    %2029 = vmatpush.msra.mxu0 %v342
    %2030 = vmatpush.msra.mxu0 %v338
    %2031 = vmatpush.msra.mxu0 %v334
    %2032 = vmatpush.msra.mxu0 %v330
    %2033 = vmatpush.msra.mxu0 %v326
    %2034 = vmatpush.msra.mxu0 %v322
    %2035 = vmatpush.msra.mxu0 %v318
    %2036 = vmatmul.f32.gmra.mxu0 %v1868
    %v2037 = vpop.f32.mrf.mxu0
    %v2038 = vadd.f32 0.0, %v2037
    %2039 = vdwg.mxu0
    %v2044 = vrot.slane %v1998, 7
    %v2045 = vrot.slane %v2018, 6
    %v2046 = vrot.slane %v2038, 5
    %v2047 = vsel %vm1828, %v1978, %v2044
    %v2048 = vsel %vm1830, %v2045, %v2046
    %v2049 = vsel %vm1832, %v2047, %v2048
    %v2051 = vadd.f32 %v1938, %v2049
    %v2052 = vxor.u32 %v2051, 2147483648
    %v2053 = vmul.f32 %v2052, 1.442695
    %v2054 = vpow.pop %v2053
    %v2055 = vadd.f32 %v2054, 1.0
    %v2056 = vrcp.pop %v2055
    %v2057 = vmul.f32 %v2055, %v2056
    %v2058 = vsub.f32 1.0, %v2057
    %v2059 = vmul.f32 %v2056, %v2058
    %v2060 = vadd.f32 %v2056, %v2059
    %vm2061 = vweird.f32 %v2055
    %vm2062 = vweird.f32 %v2056
    %vm2063 = vmor %vm2061, %vm2062
    %v2064 = vsel %vm2063, %v2056, %v2060
    %v2065 = vand.u32 2147483647, %v2055
    %vm2066 = vcmp.eq.f32.partialorder %v2065, 8.507059e+37
    %v2067 = vand.u32 %v2055, 2147483648
    %v2068 = vor.u32 1.1754944e-38, %v2067
    %v2069 = vsel %vm2066, %v2068, %v2064
    %v2070 = vmul.f32 1.0, %v2069
    %v2072 = vrot.slane %v2051, 3
    %v2074 = vtanh.pop %v2072
    %v2076 = vrot.slane %v2070, 1
    %v2078 = vmul.f32 %v2076, %v1864
    %v2079 = vmul.f32 %v2070, %v2074
    %v2080 = vadd.f32 %v2078, %v2079
    %v2081 = vtanh.pop %v2080
    %v2082 = vrot.slane %v2070, 2
    %v2084 = vmul.f32 %v2082, %v2081
    %p2085 = scmp.eq.s32.totalorder %s1727, 1
    // Predicated region
    $region102: #{tpu_custom_call.1} parent=1 // pred_check
      %p2086 = pneg %p2085
    $region103: #{tpu_custom_call.1} parent=1 // pred_check_branch
      %2088 = sbr.rel (%p2086) target = $region105
    $region104: #{tpu_custom_call.1} parent=1 // pred_region
      _
    $region105: #{tpu_custom_call.1} parent=1 // pred_fallthru
      _
    %p2089 = pneg %p2085
    // Predicated region
    $region106: #{tpu_custom_call.1} parent=1 // pred_check
      _
    $region107: #{tpu_custom_call.1} parent=1 // pred_check_branch
      %2091 = sbr.rel (%p2085) target = $region109
    $region108: #{tpu_custom_call.1} parent=1 // pred_region
      %2092 = vmatpush.msra.mxu0 %v394
      %2093 = vmatpush.msra.mxu0 %v393
      %2094 = vmatpush.msra.mxu0 %v392
      %2095 = vmatpush.msra.mxu0 %v391
      %2096 = vmatpush.msra.mxu0 %v390
      %2097 = vmatpush.msra.mxu0 %v389
      %2098 = vmatpush.msra.mxu0 %v388
      %2099 = vmatpush.msra.mxu0 %v387
      %2100 = vmatpush.msra.mxu0 %v386
      %2101 = vmatpush.msra.mxu0 %v385
      %2102 = vmatpush.msra.mxu0 %v384
      %2103 = vmatpush.msra.mxu0 %v383
      %2104 = vmatpush.msra.mxu0 %v382
      %2105 = vmatpush.msra.mxu0 %v381
      %2106 = vmatpush.msra.mxu0 %v380
      %2107 = vmatpush.msra.mxu0 %v379
      %2108 = vmatmul.f32.gmra.mxu0 %v2084
      %v2109 = vpop.f32.mrf.mxu0
      %v2110 = vadd.f32 %v395, %v2109
      %2111 = vdwg.mxu0
      %vm2113 = vcmp.lt.s32.totalorder %v2110, 0
      %v2114 = vsub.s32 2147483648, %v2110
      %v2115 = vsel %vm2113, %v2114, %v2110
      %v2116 = vand.u32 %v2115, 4294967288
      %v2117 = vor.u32 %v2116, %v400
      %v2118 = vsel %vm1828, %v2117, 2147483648
      %v2119 = vand.u32 %v2118, 65535
      %v2120 = vshra.s32 %v2118, 16
      %v2121 = vcvt.s32.f32 %v2119
      %v2122 = vcvt.s32.f32 %v2120
      %2123 = vmax.xlane.f32.xlu0 %v2122
      %v2124 = vpop.xlane.xlu0 %2123
      %vm2125 = vcmp.eq.f32.partialorder %v2122, %v2124
      %v2126 = vsel %vm2125, %v2121, -inf
      %2127 = vmax.xlane.f32.xlu0 %v2126
      %v2128 = vpop.xlane.xlu0 %2127
      %v2129 = vcvt.f32.s32 %v2128
      %v2130 = vcvt.f32.s32 %v2124
      %v2131 = vshll.u32 %v2130, 16
      %v2132 = vadd.s32 %v2131, %v2129
      %v2133 = vrot.slane %v2132, 4
      %vm2134 = vcmp.gt.s32.totalorder %v2132, %v2133
      %v2135 = vsel %vm2134, %v2132, %v2133
      %v2136 = vrot.slane %v2135, 2
      %vm2137 = vcmp.gt.s32.totalorder %v2135, %v2136
      %v2138 = vsel %vm2137, %v2135, %v2136
      %v2139 = vrot.slane %v2138, 1
      %vm2140 = vcmp.gt.s32.totalorder %v2138, %v2139
      %v2141 = vsel %vm2140, %v2138, %v2139
      %s2142 = vtos %v2141
      %s2143 = sand.u32 %s2142, 7
      %s2144 = ssub.s32 7, %s2143
    $region109: #{tpu_custom_call.1} parent=1 // pred_fallthru
      %s2145 = sphi %s1721, %s2144
    %s2146 = sshra.s32 %s2145, 3
    %s2147 = sand.u32 %s2145, 7
    %s2148 = sshra.s32 %s2145, 3
    %s2149 = sand.u32 %s2145, 7
    %s2150 = smul.u32 %s2146, 4
    %s2151 = smul.u32 %s2150, 8
    %s2152 = sadd.s32 %s2151, %s2149
    %s2153 = scalar_lea.vmem [#allocation2], %s2152
    %v2154 = vld [vmem:[%s2153] ss:$8 sm:$0xf]
    %2155 = vmatpush.msra.mxu0 %v394
    %2156 = vmatpush.msra.mxu0 %v393
    %2157 = vmatpush.msra.mxu0 %v392
    %2158 = vmatpush.msra.mxu0 %v391
    %2159 = vmatpush.msra.mxu0 %v390
    %2160 = vmatpush.msra.mxu0 %v389
    %2161 = vmatpush.msra.mxu0 %v388
    %2162 = vmatpush.msra.mxu0 %v387
    %2163 = vmatpush.msra.mxu0 %v386
    %2164 = vmatpush.msra.mxu0 %v385
    %2165 = vmatpush.msra.mxu0 %v384
    %2166 = vmatpush.msra.mxu0 %v383
    %2167 = vmatpush.msra.mxu0 %v382
    %2168 = vmatpush.msra.mxu0 %v381
    %2169 = vmatpush.msra.mxu0 %v380
    %2170 = vmatpush.msra.mxu0 %v379
    %2171 = vmatmul.f32.gmra.mxu0 %v2084
    %v2172 = vpop.f32.mrf.mxu0
    %v2173 = vadd.f32 %v395, %v2172
    %2174 = vdwg.mxu0
    %2175 = vst [vmem:[#allocation3 + $0x2] sm:$0x1] %v2173
    %2176 = vmatpush.msra.mxu0 %v375
    %2177 = vmatpush.msra.mxu0 %v371
    %2178 = vmatpush.msra.mxu0 %v367
    %2179 = vmatpush.msra.mxu0 %v363
    %2180 = vmatpush.msra.mxu0 %v359
    %2181 = vmatpush.msra.mxu0 %v355
    %2182 = vmatpush.msra.mxu0 %v351
    %2183 = vmatpush.msra.mxu0 %v347
    %2184 = vmatpush.msra.mxu0 %v343
    %2185 = vmatpush.msra.mxu0 %v339
    %2186 = vmatpush.msra.mxu0 %v335
    %2187 = vmatpush.msra.mxu0 %v331
    %2188 = vmatpush.msra.mxu0 %v327
    %2189 = vmatpush.msra.mxu0 %v323
    %2190 = vmatpush.msra.mxu0 %v319
    %2191 = vmatpush.msra.mxu0 %v315
    %2192 = vmatmul.f32.gmra.mxu0 %v2084
    %v2193 = vpop.f32.mrf.mxu0
    %v2194 = vadd.f32 0.0, %v2193
    %2195 = vdwg.mxu0
    %2196 = vmatpush.msra.mxu0 %v376
    %2197 = vmatpush.msra.mxu0 %v372
    %2198 = vmatpush.msra.mxu0 %v368
    %2199 = vmatpush.msra.mxu0 %v364
    %2200 = vmatpush.msra.mxu0 %v360
    %2201 = vmatpush.msra.mxu0 %v356
    %2202 = vmatpush.msra.mxu0 %v352
    %2203 = vmatpush.msra.mxu0 %v348
    %2204 = vmatpush.msra.mxu0 %v344
    %2205 = vmatpush.msra.mxu0 %v340
    %2206 = vmatpush.msra.mxu0 %v336
    %2207 = vmatpush.msra.mxu0 %v332
    %2208 = vmatpush.msra.mxu0 %v328
    %2209 = vmatpush.msra.mxu0 %v324
    %2210 = vmatpush.msra.mxu0 %v320
    %2211 = vmatpush.msra.mxu0 %v316
    %2212 = vmatmul.f32.gmra.mxu0 %v2084
    %v2213 = vpop.f32.mrf.mxu0
    %v2214 = vadd.f32 0.0, %v2213
    %2215 = vdwg.mxu0
    %2216 = vmatpush.msra.mxu0 %v377
    %2217 = vmatpush.msra.mxu0 %v373
    %2218 = vmatpush.msra.mxu0 %v369
    %2219 = vmatpush.msra.mxu0 %v365
    %2220 = vmatpush.msra.mxu0 %v361
    %2221 = vmatpush.msra.mxu0 %v357
    %2222 = vmatpush.msra.mxu0 %v353
    %2223 = vmatpush.msra.mxu0 %v349
    %2224 = vmatpush.msra.mxu0 %v345
    %2225 = vmatpush.msra.mxu0 %v341
    %2226 = vmatpush.msra.mxu0 %v337
    %2227 = vmatpush.msra.mxu0 %v333
    %2228 = vmatpush.msra.mxu0 %v329
    %2229 = vmatpush.msra.mxu0 %v325
    %2230 = vmatpush.msra.mxu0 %v321
    %2231 = vmatpush.msra.mxu0 %v317
    %2232 = vmatmul.f32.gmra.mxu0 %v2084
    %v2233 = vpop.f32.mrf.mxu0
    %v2234 = vadd.f32 0.0, %v2233
    %2235 = vdwg.mxu0
    %2236 = vmatpush.msra.mxu0 %v378
    %2237 = vmatpush.msra.mxu0 %v374
    %2238 = vmatpush.msra.mxu0 %v370
    %2239 = vmatpush.msra.mxu0 %v366
    %2240 = vmatpush.msra.mxu0 %v362
    %2241 = vmatpush.msra.mxu0 %v358
    %2242 = vmatpush.msra.mxu0 %v354
    %2243 = vmatpush.msra.mxu0 %v350
    %2244 = vmatpush.msra.mxu0 %v346
    %2245 = vmatpush.msra.mxu0 %v342
    %2246 = vmatpush.msra.mxu0 %v338
    %2247 = vmatpush.msra.mxu0 %v334
    %2248 = vmatpush.msra.mxu0 %v330
    %2249 = vmatpush.msra.mxu0 %v326
    %2250 = vmatpush.msra.mxu0 %v322
    %2251 = vmatpush.msra.mxu0 %v318
    %2252 = vmatmul.f32.gmra.mxu0 %v2084
    %v2253 = vpop.f32.mrf.mxu0
    %v2254 = vadd.f32 0.0, %v2253
    %2255 = vdwg.mxu0
    %v2260 = vrot.slane %v2214, 7
    %v2261 = vrot.slane %v2234, 6
    %v2262 = vrot.slane %v2254, 5
    %v2263 = vsel %vm1828, %v2194, %v2260
    %v2264 = vsel %vm1830, %v2261, %v2262
    %v2265 = vsel %vm1832, %v2263, %v2264
    %v2267 = vadd.f32 %v2154, %v2265
    %v2268 = vxor.u32 %v2267, 2147483648
    %v2269 = vmul.f32 %v2268, 1.442695
    %v2270 = vpow.pop %v2269
    %v2271 = vadd.f32 %v2270, 1.0
    %v2272 = vrcp.pop %v2271
    %v2273 = vmul.f32 %v2271, %v2272
    %v2274 = vsub.f32 1.0, %v2273
    %v2275 = vmul.f32 %v2272, %v2274
    %v2276 = vadd.f32 %v2272, %v2275
    %vm2277 = vweird.f32 %v2271
    %vm2278 = vweird.f32 %v2272
    %vm2279 = vmor %vm2277, %vm2278
    %v2280 = vsel %vm2279, %v2272, %v2276
    %v2281 = vand.u32 2147483647, %v2271
    %vm2282 = vcmp.eq.f32.partialorder %v2281, 8.507059e+37
    %v2283 = vand.u32 %v2271, 2147483648
    %v2284 = vor.u32 1.1754944e-38, %v2283
    %v2285 = vsel %vm2282, %v2284, %v2280
    %v2286 = vmul.f32 1.0, %v2285
    %v2288 = vrot.slane %v2267, 3
    %v2290 = vtanh.pop %v2288
    %v2292 = vrot.slane %v2286, 1
    %v2294 = vmul.f32 %v2292, %v2080
    %v2295 = vmul.f32 %v2286, %v2290
    %v2296 = vadd.f32 %v2294, %v2295
    %v2297 = vtanh.pop %v2296
    %v2298 = vrot.slane %v2286, 2
    %v2300 = vmul.f32 %v2298, %v2297
    %p2301 = scmp.eq.s32.totalorder %s1728, 1
    // Predicated region
    $region110: #{tpu_custom_call.1} parent=1 // pred_check
      %p2302 = pneg %p2301
    $region111: #{tpu_custom_call.1} parent=1 // pred_check_branch
      %2304 = sbr.rel (%p2302) target = $region113
    $region112: #{tpu_custom_call.1} parent=1 // pred_region
      _
    $region113: #{tpu_custom_call.1} parent=1 // pred_fallthru
      _
    %p2305 = pneg %p2301
    // Predicated region
    $region114: #{tpu_custom_call.1} parent=1 // pred_check
      _
    $region115: #{tpu_custom_call.1} parent=1 // pred_check_branch
      %2307 = sbr.rel (%p2301) target = $region117
    $region116: #{tpu_custom_call.1} parent=1 // pred_region
      %2308 = vmatpush.msra.mxu0 %v394
      %2309 = vmatpush.msra.mxu0 %v393
      %2310 = vmatpush.msra.mxu0 %v392
      %2311 = vmatpush.msra.mxu0 %v391
      %2312 = vmatpush.msra.mxu0 %v390
      %2313 = vmatpush.msra.mxu0 %v389
      %2314 = vmatpush.msra.mxu0 %v388
      %2315 = vmatpush.msra.mxu0 %v387
      %2316 = vmatpush.msra.mxu0 %v386
      %2317 = vmatpush.msra.mxu0 %v385
      %2318 = vmatpush.msra.mxu0 %v384
      %2319 = vmatpush.msra.mxu0 %v383
      %2320 = vmatpush.msra.mxu0 %v382
      %2321 = vmatpush.msra.mxu0 %v381
      %2322 = vmatpush.msra.mxu0 %v380
      %2323 = vmatpush.msra.mxu0 %v379
      %2324 = vmatmul.f32.gmra.mxu0 %v2300
      %v2325 = vpop.f32.mrf.mxu0
      %v2326 = vadd.f32 %v395, %v2325
      %2327 = vdwg.mxu0
      %vm2329 = vcmp.lt.s32.totalorder %v2326, 0
      %v2330 = vsub.s32 2147483648, %v2326
      %v2331 = vsel %vm2329, %v2330, %v2326
      %v2332 = vand.u32 %v2331, 4294967288
      %v2333 = vor.u32 %v2332, %v400
      %v2334 = vsel %vm1828, %v2333, 2147483648
      %v2335 = vand.u32 %v2334, 65535
      %v2336 = vshra.s32 %v2334, 16
      %v2337 = vcvt.s32.f32 %v2335
      %v2338 = vcvt.s32.f32 %v2336
      %2339 = vmax.xlane.f32.xlu0 %v2338
      %v2340 = vpop.xlane.xlu0 %2339
      %vm2341 = vcmp.eq.f32.partialorder %v2338, %v2340
      %v2342 = vsel %vm2341, %v2337, -inf
      %2343 = vmax.xlane.f32.xlu0 %v2342
      %v2344 = vpop.xlane.xlu0 %2343
      %v2345 = vcvt.f32.s32 %v2344
      %v2346 = vcvt.f32.s32 %v2340
      %v2347 = vshll.u32 %v2346, 16
      %v2348 = vadd.s32 %v2347, %v2345
      %v2349 = vrot.slane %v2348, 4
      %vm2350 = vcmp.gt.s32.totalorder %v2348, %v2349
      %v2351 = vsel %vm2350, %v2348, %v2349
      %v2352 = vrot.slane %v2351, 2
      %vm2353 = vcmp.gt.s32.totalorder %v2351, %v2352
      %v2354 = vsel %vm2353, %v2351, %v2352
      %v2355 = vrot.slane %v2354, 1
      %vm2356 = vcmp.gt.s32.totalorder %v2354, %v2355
      %v2357 = vsel %vm2356, %v2354, %v2355
      %s2358 = vtos %v2357
      %s2359 = sand.u32 %s2358, 7
      %s2360 = ssub.s32 7, %s2359
    $region117: #{tpu_custom_call.1} parent=1 // pred_fallthru
      %s2361 = sphi %s1722, %s2360
    %s2362 = sshra.s32 %s2361, 3
    %s2363 = sand.u32 %s2361, 7
    %s2364 = sshra.s32 %s2361, 3
    %s2365 = sand.u32 %s2361, 7
    %s2366 = smul.u32 %s2362, 4
    %s2367 = smul.u32 %s2366, 8
    %s2368 = sadd.s32 %s2367, %s2365
    %s2369 = scalar_lea.vmem [#allocation2], %s2368
    %v2370 = vld [vmem:[%s2369] ss:$8 sm:$0xf]
    %2371 = vmatpush.msra.mxu0 %v394
    %2372 = vmatpush.msra.mxu0 %v393
    %2373 = vmatpush.msra.mxu0 %v392
    %2374 = vmatpush.msra.mxu0 %v391
    %2375 = vmatpush.msra.mxu0 %v390
    %2376 = vmatpush.msra.mxu0 %v389
    %2377 = vmatpush.msra.mxu0 %v388
    %2378 = vmatpush.msra.mxu0 %v387
    %2379 = vmatpush.msra.mxu0 %v386
    %2380 = vmatpush.msra.mxu0 %v385
    %2381 = vmatpush.msra.mxu0 %v384
    %2382 = vmatpush.msra.mxu0 %v383
    %2383 = vmatpush.msra.mxu0 %v382
    %2384 = vmatpush.msra.mxu0 %v381
    %2385 = vmatpush.msra.mxu0 %v380
    %2386 = vmatpush.msra.mxu0 %v379
    %2387 = vmatmul.f32.gmra.mxu0 %v2300
    %v2388 = vpop.f32.mrf.mxu0
    %v2389 = vadd.f32 %v395, %v2388
    %2390 = vdwg.mxu0
    %2391 = vst [vmem:[#allocation3 + $0x3] sm:$0x1] %v2389
    %2392 = vmatpush.msra.mxu0 %v375
    %2393 = vmatpush.msra.mxu0 %v371
    %2394 = vmatpush.msra.mxu0 %v367
    %2395 = vmatpush.msra.mxu0 %v363
    %2396 = vmatpush.msra.mxu0 %v359
    %2397 = vmatpush.msra.mxu0 %v355
    %2398 = vmatpush.msra.mxu0 %v351
    %2399 = vmatpush.msra.mxu0 %v347
    %2400 = vmatpush.msra.mxu0 %v343
    %2401 = vmatpush.msra.mxu0 %v339
    %2402 = vmatpush.msra.mxu0 %v335
    %2403 = vmatpush.msra.mxu0 %v331
    %2404 = vmatpush.msra.mxu0 %v327
    %2405 = vmatpush.msra.mxu0 %v323
    %2406 = vmatpush.msra.mxu0 %v319
    %2407 = vmatpush.msra.mxu0 %v315
    %2408 = vmatmul.f32.gmra.mxu0 %v2300
    %v2409 = vpop.f32.mrf.mxu0
    %v2410 = vadd.f32 0.0, %v2409
    %2411 = vdwg.mxu0
    %2412 = vmatpush.msra.mxu0 %v376
    %2413 = vmatpush.msra.mxu0 %v372
    %2414 = vmatpush.msra.mxu0 %v368
    %2415 = vmatpush.msra.mxu0 %v364
    %2416 = vmatpush.msra.mxu0 %v360
    %2417 = vmatpush.msra.mxu0 %v356
    %2418 = vmatpush.msra.mxu0 %v352
    %2419 = vmatpush.msra.mxu0 %v348
    %2420 = vmatpush.msra.mxu0 %v344
    %2421 = vmatpush.msra.mxu0 %v340
    %2422 = vmatpush.msra.mxu0 %v336
    %2423 = vmatpush.msra.mxu0 %v332
    %2424 = vmatpush.msra.mxu0 %v328
    %2425 = vmatpush.msra.mxu0 %v324
    %2426 = vmatpush.msra.mxu0 %v320
    %2427 = vmatpush.msra.mxu0 %v316
    %2428 = vmatmul.f32.gmra.mxu0 %v2300
    %v2429 = vpop.f32.mrf.mxu0
    %v2430 = vadd.f32 0.0, %v2429
    %2431 = vdwg.mxu0
    %2432 = vmatpush.msra.mxu0 %v377
    %2433 = vmatpush.msra.mxu0 %v373
    %2434 = vmatpush.msra.mxu0 %v369
    %2435 = vmatpush.msra.mxu0 %v365
    %2436 = vmatpush.msra.mxu0 %v361
    %2437 = vmatpush.msra.mxu0 %v357
    %2438 = vmatpush.msra.mxu0 %v353
    %2439 = vmatpush.msra.mxu0 %v349
    %2440 = vmatpush.msra.mxu0 %v345
    %2441 = vmatpush.msra.mxu0 %v341
    %2442 = vmatpush.msra.mxu0 %v337
    %2443 = vmatpush.msra.mxu0 %v333
    %2444 = vmatpush.msra.mxu0 %v329
    %2445 = vmatpush.msra.mxu0 %v325
    %2446 = vmatpush.msra.mxu0 %v321
    %2447 = vmatpush.msra.mxu0 %v317
    %2448 = vmatmul.f32.gmra.mxu0 %v2300
    %v2449 = vpop.f32.mrf.mxu0
    %v2450 = vadd.f32 0.0, %v2449
    %2451 = vdwg.mxu0
    %2452 = vmatpush.msra.mxu0 %v378
    %2453 = vmatpush.msra.mxu0 %v374
    %2454 = vmatpush.msra.mxu0 %v370
    %2455 = vmatpush.msra.mxu0 %v366
    %2456 = vmatpush.msra.mxu0 %v362
    %2457 = vmatpush.msra.mxu0 %v358
    %2458 = vmatpush.msra.mxu0 %v354
    %2459 = vmatpush.msra.mxu0 %v350
    %2460 = vmatpush.msra.mxu0 %v346
    %2461 = vmatpush.msra.mxu0 %v342
    %2462 = vmatpush.msra.mxu0 %v338
    %2463 = vmatpush.msra.mxu0 %v334
    %2464 = vmatpush.msra.mxu0 %v330
    %2465 = vmatpush.msra.mxu0 %v326
    %2466 = vmatpush.msra.mxu0 %v322
    %2467 = vmatpush.msra.mxu0 %v318
    %2468 = vmatmul.f32.gmra.mxu0 %v2300
    %v2469 = vpop.f32.mrf.mxu0
    %v2470 = vadd.f32 0.0, %v2469
    %2471 = vdwg.mxu0
    %v2476 = vrot.slane %v2430, 7
    %v2477 = vrot.slane %v2450, 6
    %v2478 = vrot.slane %v2470, 5
    %v2479 = vsel %vm1828, %v2410, %v2476
    %v2480 = vsel %vm1830, %v2477, %v2478
    %v2481 = vsel %vm1832, %v2479, %v2480
    %v2483 = vadd.f32 %v2370, %v2481
    %v2484 = vxor.u32 %v2483, 2147483648
    %v2485 = vmul.f32 %v2484, 1.442695
    %v2486 = vpow.pop %v2485
    %v2487 = vadd.f32 %v2486, 1.0
    %v2488 = vrcp.pop %v2487
    %v2489 = vmul.f32 %v2487, %v2488
    %v2490 = vsub.f32 1.0, %v2489
    %v2491 = vmul.f32 %v2488, %v2490
    %v2492 = vadd.f32 %v2488, %v2491
    %vm2493 = vweird.f32 %v2487
    %vm2494 = vweird.f32 %v2488
    %vm2495 = vmor %vm2493, %vm2494
    %v2496 = vsel %vm2495, %v2488, %v2492
    %v2497 = vand.u32 2147483647, %v2487
    %vm2498 = vcmp.eq.f32.partialorder %v2497, 8.507059e+37
    %v2499 = vand.u32 %v2487, 2147483648
    %v2500 = vor.u32 1.1754944e-38, %v2499
    %v2501 = vsel %vm2498, %v2500, %v2496
    %v2502 = vmul.f32 1.0, %v2501
    %v2504 = vrot.slane %v2483, 3
    %v2506 = vtanh.pop %v2504
    %v2508 = vrot.slane %v2502, 1
    %v2510 = vmul.f32 %v2508, %v2296
    %v2511 = vmul.f32 %v2502, %v2506
    %v2512 = vadd.f32 %v2510, %v2511
    %v2513 = vtanh.pop %v2512
    %v2514 = vrot.slane %v2502, 2
    %v2516 = vmul.f32 %v2514, %v2513
    %p2517 = scmp.eq.s32.totalorder %s1729, 1
    // Predicated region
    $region118: #{tpu_custom_call.1} parent=1 // pred_check
      %p2518 = pneg %p2517
    $region119: #{tpu_custom_call.1} parent=1 // pred_check_branch
      %2520 = sbr.rel (%p2518) target = $region121
    $region120: #{tpu_custom_call.1} parent=1 // pred_region
      _
    $region121: #{tpu_custom_call.1} parent=1 // pred_fallthru
      _
    %p2521 = pneg %p2517
    // Predicated region
    $region122: #{tpu_custom_call.1} parent=1 // pred_check
      _
    $region123: #{tpu_custom_call.1} parent=1 // pred_check_branch
      %2523 = sbr.rel (%p2517) target = $region125
    $region124: #{tpu_custom_call.1} parent=1 // pred_region
      %2524 = vmatpush.msra.mxu0 %v394
      %2525 = vmatpush.msra.mxu0 %v393
      %2526 = vmatpush.msra.mxu0 %v392
      %2527 = vmatpush.msra.mxu0 %v391
      %2528 = vmatpush.msra.mxu0 %v390
      %2529 = vmatpush.msra.mxu0 %v389
      %2530 = vmatpush.msra.mxu0 %v388
      %2531 = vmatpush.msra.mxu0 %v387
      %2532 = vmatpush.msra.mxu0 %v386
      %2533 = vmatpush.msra.mxu0 %v385
      %2534 = vmatpush.msra.mxu0 %v384
      %2535 = vmatpush.msra.mxu0 %v383
      %2536 = vmatpush.msra.mxu0 %v382
      %2537 = vmatpush.msra.mxu0 %v381
      %2538 = vmatpush.msra.mxu0 %v380
      %2539 = vmatpush.msra.mxu0 %v379
      %2540 = vmatmul.f32.gmra.mxu0 %v2516
      %v2541 = vpop.f32.mrf.mxu0
      %v2542 = vadd.f32 %v395, %v2541
      %2543 = vdwg.mxu0
      %vm2545 = vcmp.lt.s32.totalorder %v2542, 0
      %v2546 = vsub.s32 2147483648, %v2542
      %v2547 = vsel %vm2545, %v2546, %v2542
      %v2548 = vand.u32 %v2547, 4294967288
      %v2549 = vor.u32 %v2548, %v400
      %v2550 = vsel %vm1828, %v2549, 2147483648
      %v2551 = vand.u32 %v2550, 65535
      %v2552 = vshra.s32 %v2550, 16
      %v2553 = vcvt.s32.f32 %v2551
      %v2554 = vcvt.s32.f32 %v2552
      %2555 = vmax.xlane.f32.xlu0 %v2554
      %v2556 = vpop.xlane.xlu0 %2555
      %vm2557 = vcmp.eq.f32.partialorder %v2554, %v2556
      %v2558 = vsel %vm2557, %v2553, -inf
      %2559 = vmax.xlane.f32.xlu0 %v2558
      %v2560 = vpop.xlane.xlu0 %2559
      %v2561 = vcvt.f32.s32 %v2560
      %v2562 = vcvt.f32.s32 %v2556
      %v2563 = vshll.u32 %v2562, 16
      %v2564 = vadd.s32 %v2563, %v2561
      %v2565 = vrot.slane %v2564, 4
      %vm2566 = vcmp.gt.s32.totalorder %v2564, %v2565
      %v2567 = vsel %vm2566, %v2564, %v2565
      %v2568 = vrot.slane %v2567, 2
      %vm2569 = vcmp.gt.s32.totalorder %v2567, %v2568
      %v2570 = vsel %vm2569, %v2567, %v2568
      %v2571 = vrot.slane %v2570, 1
      %vm2572 = vcmp.gt.s32.totalorder %v2570, %v2571
      %v2573 = vsel %vm2572, %v2570, %v2571
      %s2574 = vtos %v2573
      %s2575 = sand.u32 %s2574, 7
      %s2576 = ssub.s32 7, %s2575
    $region125: #{tpu_custom_call.1} parent=1 // pred_fallthru
      %s2577 = sphi %s1723, %s2576
    %s2578 = sshra.s32 %s2577, 3
    %s2579 = sand.u32 %s2577, 7
    %s2580 = sshra.s32 %s2577, 3
    %s2581 = sand.u32 %s2577, 7
    %s2582 = smul.u32 %s2578, 4
    %s2583 = smul.u32 %s2582, 8
    %s2584 = sadd.s32 %s2583, %s2581
    %s2585 = scalar_lea.vmem [#allocation2], %s2584
    %v2586 = vld [vmem:[%s2585] ss:$8 sm:$0xf]
    %2587 = vmatpush.msra.mxu0 %v394
    %2588 = vmatpush.msra.mxu0 %v393
    %2589 = vmatpush.msra.mxu0 %v392
    %2590 = vmatpush.msra.mxu0 %v391
    %2591 = vmatpush.msra.mxu0 %v390
    %2592 = vmatpush.msra.mxu0 %v389
    %2593 = vmatpush.msra.mxu0 %v388
    %2594 = vmatpush.msra.mxu0 %v387
    %2595 = vmatpush.msra.mxu0 %v386
    %2596 = vmatpush.msra.mxu0 %v385
    %2597 = vmatpush.msra.mxu0 %v384
    %2598 = vmatpush.msra.mxu0 %v383
    %2599 = vmatpush.msra.mxu0 %v382
    %2600 = vmatpush.msra.mxu0 %v381
    %2601 = vmatpush.msra.mxu0 %v380
    %2602 = vmatpush.msra.mxu0 %v379
    %2603 = vmatmul.f32.gmra.mxu0 %v2516
    %v2604 = vpop.f32.mrf.mxu0
    %v2605 = vadd.f32 %v395, %v2604
    %2606 = vdwg.mxu0
    %2607 = vst [vmem:[#allocation3 + $0x4] sm:$0x1] %v2605
    %2608 = vmatpush.msra.mxu0 %v375
    %2609 = vmatpush.msra.mxu0 %v371
    %2610 = vmatpush.msra.mxu0 %v367
    %2611 = vmatpush.msra.mxu0 %v363
    %2612 = vmatpush.msra.mxu0 %v359
    %2613 = vmatpush.msra.mxu0 %v355
    %2614 = vmatpush.msra.mxu0 %v351
    %2615 = vmatpush.msra.mxu0 %v347
    %2616 = vmatpush.msra.mxu0 %v343
    %2617 = vmatpush.msra.mxu0 %v339
    %2618 = vmatpush.msra.mxu0 %v335
    %2619 = vmatpush.msra.mxu0 %v331
    %2620 = vmatpush.msra.mxu0 %v327
    %2621 = vmatpush.msra.mxu0 %v323
    %2622 = vmatpush.msra.mxu0 %v319
    %2623 = vmatpush.msra.mxu0 %v315
    %2624 = vmatmul.f32.gmra.mxu0 %v2516
    %v2625 = vpop.f32.mrf.mxu0
    %v2626 = vadd.f32 0.0, %v2625
    %2627 = vdwg.mxu0
    %2628 = vmatpush.msra.mxu0 %v376
    %2629 = vmatpush.msra.mxu0 %v372
    %2630 = vmatpush.msra.mxu0 %v368
    %2631 = vmatpush.msra.mxu0 %v364
    %2632 = vmatpush.msra.mxu0 %v360
    %2633 = vmatpush.msra.mxu0 %v356
    %2634 = vmatpush.msra.mxu0 %v352
    %2635 = vmatpush.msra.mxu0 %v348
    %2636 = vmatpush.msra.mxu0 %v344
    %2637 = vmatpush.msra.mxu0 %v340
    %2638 = vmatpush.msra.mxu0 %v336
    %2639 = vmatpush.msra.mxu0 %v332
    %2640 = vmatpush.msra.mxu0 %v328
    %2641 = vmatpush.msra.mxu0 %v324
    %2642 = vmatpush.msra.mxu0 %v320
    %2643 = vmatpush.msra.mxu0 %v316
    %2644 = vmatmul.f32.gmra.mxu0 %v2516
    %v2645 = vpop.f32.mrf.mxu0
    %v2646 = vadd.f32 0.0, %v2645
    %2647 = vdwg.mxu0
    %2648 = vmatpush.msra.mxu0 %v377
    %2649 = vmatpush.msra.mxu0 %v373
    %2650 = vmatpush.msra.mxu0 %v369
    %2651 = vmatpush.msra.mxu0 %v365
    %2652 = vmatpush.msra.mxu0 %v361
    %2653 = vmatpush.msra.mxu0 %v357
    %2654 = vmatpush.msra.mxu0 %v353
    %2655 = vmatpush.msra.mxu0 %v349
    %2656 = vmatpush.msra.mxu0 %v345
    %2657 = vmatpush.msra.mxu0 %v341
    %2658 = vmatpush.msra.mxu0 %v337
    %2659 = vmatpush.msra.mxu0 %v333
    %2660 = vmatpush.msra.mxu0 %v329
    %2661 = vmatpush.msra.mxu0 %v325
    %2662 = vmatpush.msra.mxu0 %v321
    %2663 = vmatpush.msra.mxu0 %v317
    %2664 = vmatmul.f32.gmra.mxu0 %v2516
    %v2665 = vpop.f32.mrf.mxu0
    %v2666 = vadd.f32 0.0, %v2665
    %2667 = vdwg.mxu0
    %2668 = vmatpush.msra.mxu0 %v378
    %2669 = vmatpush.msra.mxu0 %v374
    %2670 = vmatpush.msra.mxu0 %v370
    %2671 = vmatpush.msra.mxu0 %v366
    %2672 = vmatpush.msra.mxu0 %v362
    %2673 = vmatpush.msra.mxu0 %v358
    %2674 = vmatpush.msra.mxu0 %v354
    %2675 = vmatpush.msra.mxu0 %v350
    %2676 = vmatpush.msra.mxu0 %v346
    %2677 = vmatpush.msra.mxu0 %v342
    %2678 = vmatpush.msra.mxu0 %v338
    %2679 = vmatpush.msra.mxu0 %v334
    %2680 = vmatpush.msra.mxu0 %v330
    %2681 = vmatpush.msra.mxu0 %v326
    %2682 = vmatpush.msra.mxu0 %v322
    %2683 = vmatpush.msra.mxu0 %v318
    %2684 = vmatmul.f32.gmra.mxu0 %v2516
    %v2685 = vpop.f32.mrf.mxu0
    %v2686 = vadd.f32 0.0, %v2685
    %2687 = vdwg.mxu0
    %v2692 = vrot.slane %v2646, 7
    %v2693 = vrot.slane %v2666, 6
    %v2694 = vrot.slane %v2686, 5
    %v2695 = vsel %vm1828, %v2626, %v2692
    %v2696 = vsel %vm1830, %v2693, %v2694
    %v2697 = vsel %vm1832, %v2695, %v2696
    %v2699 = vadd.f32 %v2586, %v2697
    %v2700 = vxor.u32 %v2699, 2147483648
    %v2701 = vmul.f32 %v2700, 1.442695
    %v2702 = vpow.pop %v2701
    %v2703 = vadd.f32 %v2702, 1.0
    %v2704 = vrcp.pop %v2703
    %v2705 = vmul.f32 %v2703, %v2704
    %v2706 = vsub.f32 1.0, %v2705
    %v2707 = vmul.f32 %v2704, %v2706
    %v2708 = vadd.f32 %v2704, %v2707
    %vm2709 = vweird.f32 %v2703
    %vm2710 = vweird.f32 %v2704
    %vm2711 = vmor %vm2709, %vm2710
    %v2712 = vsel %vm2711, %v2704, %v2708
    %v2713 = vand.u32 2147483647, %v2703
    %vm2714 = vcmp.eq.f32.partialorder %v2713, 8.507059e+37
    %v2715 = vand.u32 %v2703, 2147483648
    %v2716 = vor.u32 1.1754944e-38, %v2715
    %v2717 = vsel %vm2714, %v2716, %v2712
    %v2718 = vmul.f32 1.0, %v2717
    %v2720 = vrot.slane %v2699, 3
    %v2722 = vtanh.pop %v2720
    %v2724 = vrot.slane %v2718, 1
    %v2726 = vmul.f32 %v2724, %v2512
    %v2727 = vmul.f32 %v2718, %v2722
    %v2728 = vadd.f32 %v2726, %v2727
    %v2729 = vtanh.pop %v2728
    %v2730 = vrot.slane %v2718, 2
    %v2732 = vmul.f32 %v2730, %v2729
    %p2733 = scmp.eq.s32.totalorder %s1730, 1
    // Predicated region
    $region126: #{tpu_custom_call.1} parent=1 // pred_check
      %p2734 = pneg %p2733
    $region127: #{tpu_custom_call.1} parent=1 // pred_check_branch
      %2736 = sbr.rel (%p2734) target = $region129
    $region128: #{tpu_custom_call.1} parent=1 // pred_region
      _
    $region129: #{tpu_custom_call.1} parent=1 // pred_fallthru
      _
    %p2737 = pneg %p2733
    // Predicated region
    $region130: #{tpu_custom_call.1} parent=1 // pred_check
      _
    $region131: #{tpu_custom_call.1} parent=1 // pred_check_branch
      %2739 = sbr.rel (%p2733) target = $region133
    $region132: #{tpu_custom_call.1} parent=1 // pred_region
      %2740 = vmatpush.msra.mxu0 %v394
      %2741 = vmatpush.msra.mxu0 %v393
      %2742 = vmatpush.msra.mxu0 %v392
      %2743 = vmatpush.msra.mxu0 %v391
      %2744 = vmatpush.msra.mxu0 %v390
      %2745 = vmatpush.msra.mxu0 %v389
      %2746 = vmatpush.msra.mxu0 %v388
      %2747 = vmatpush.msra.mxu0 %v387
      %2748 = vmatpush.msra.mxu0 %v386
      %2749 = vmatpush.msra.mxu0 %v385
      %2750 = vmatpush.msra.mxu0 %v384
      %2751 = vmatpush.msra.mxu0 %v383
      %2752 = vmatpush.msra.mxu0 %v382
      %2753 = vmatpush.msra.mxu0 %v381
      %2754 = vmatpush.msra.mxu0 %v380
      %2755 = vmatpush.msra.mxu0 %v379
      %2756 = vmatmul.f32.gmra.mxu0 %v2732
      %v2757 = vpop.f32.mrf.mxu0
      %v2758 = vadd.f32 %v395, %v2757
      %2759 = vdwg.mxu0
      %vm2761 = vcmp.lt.s32.totalorder %v2758, 0
      %v2762 = vsub.s32 2147483648, %v2758
      %v2763 = vsel %vm2761, %v2762, %v2758
      %v2764 = vand.u32 %v2763, 4294967288
      %v2765 = vor.u32 %v2764, %v400
      %v2766 = vsel %vm1828, %v2765, 2147483648
      %v2767 = vand.u32 %v2766, 65535
      %v2768 = vshra.s32 %v2766, 16
      %v2769 = vcvt.s32.f32 %v2767
      %v2770 = vcvt.s32.f32 %v2768
      %2771 = vmax.xlane.f32.xlu0 %v2770
      %v2772 = vpop.xlane.xlu0 %2771
      %vm2773 = vcmp.eq.f32.partialorder %v2770, %v2772
      %v2774 = vsel %vm2773, %v2769, -inf
      %2775 = vmax.xlane.f32.xlu0 %v2774
      %v2776 = vpop.xlane.xlu0 %2775
      %v2777 = vcvt.f32.s32 %v2776
      %v2778 = vcvt.f32.s32 %v2772
      %v2779 = vshll.u32 %v2778, 16
      %v2780 = vadd.s32 %v2779, %v2777
      %v2781 = vrot.slane %v2780, 4
      %vm2782 = vcmp.gt.s32.totalorder %v2780, %v2781
      %v2783 = vsel %vm2782, %v2780, %v2781
      %v2784 = vrot.slane %v2783, 2
      %vm2785 = vcmp.gt.s32.totalorder %v2783, %v2784
      %v2786 = vsel %vm2785, %v2783, %v2784
      %v2787 = vrot.slane %v2786, 1
      %vm2788 = vcmp.gt.s32.totalorder %v2786, %v2787
      %v2789 = vsel %vm2788, %v2786, %v2787
      %s2790 = vtos %v2789
      %s2791 = sand.u32 %s2790, 7
      %s2792 = ssub.s32 7, %s2791
    $region133: #{tpu_custom_call.1} parent=1 // pred_fallthru
      %s2793 = sphi %s1724, %s2792
    %s2794 = sshra.s32 %s2793, 3
    %s2795 = sand.u32 %s2793, 7
    %s2796 = sshra.s32 %s2793, 3
    %s2797 = sand.u32 %s2793, 7
    %s2798 = smul.u32 %s2794, 4
    %s2799 = smul.u32 %s2798, 8
    %s2800 = sadd.s32 %s2799, %s2797
    %s2801 = scalar_lea.vmem [#allocation2], %s2800
    %v2802 = vld [vmem:[%s2801] ss:$8 sm:$0xf]
    %2803 = vmatpush.msra.mxu0 %v394
    %2804 = vmatpush.msra.mxu0 %v393
    %2805 = vmatpush.msra.mxu0 %v392
    %2806 = vmatpush.msra.mxu0 %v391
    %2807 = vmatpush.msra.mxu0 %v390
    %2808 = vmatpush.msra.mxu0 %v389
    %2809 = vmatpush.msra.mxu0 %v388
    %2810 = vmatpush.msra.mxu0 %v387
    %2811 = vmatpush.msra.mxu0 %v386
    %2812 = vmatpush.msra.mxu0 %v385
    %2813 = vmatpush.msra.mxu0 %v384
    %2814 = vmatpush.msra.mxu0 %v383
    %2815 = vmatpush.msra.mxu0 %v382
    %2816 = vmatpush.msra.mxu0 %v381
    %2817 = vmatpush.msra.mxu0 %v380
    %2818 = vmatpush.msra.mxu0 %v379
    %2819 = vmatmul.f32.gmra.mxu0 %v2732
    %v2820 = vpop.f32.mrf.mxu0
    %v2821 = vadd.f32 %v395, %v2820
    %2822 = vdwg.mxu0
    %2823 = vst [vmem:[#allocation3 + $0x5] sm:$0x1] %v2821
    %2824 = vmatpush.msra.mxu0 %v375
    %2825 = vmatpush.msra.mxu0 %v371
    %2826 = vmatpush.msra.mxu0 %v367
    %2827 = vmatpush.msra.mxu0 %v363
    %2828 = vmatpush.msra.mxu0 %v359
    %2829 = vmatpush.msra.mxu0 %v355
    %2830 = vmatpush.msra.mxu0 %v351
    %2831 = vmatpush.msra.mxu0 %v347
    %2832 = vmatpush.msra.mxu0 %v343
    %2833 = vmatpush.msra.mxu0 %v339
    %2834 = vmatpush.msra.mxu0 %v335
    %2835 = vmatpush.msra.mxu0 %v331
    %2836 = vmatpush.msra.mxu0 %v327
    %2837 = vmatpush.msra.mxu0 %v323
    %2838 = vmatpush.msra.mxu0 %v319
    %2839 = vmatpush.msra.mxu0 %v315
    %2840 = vmatmul.f32.gmra.mxu0 %v2732
    %v2841 = vpop.f32.mrf.mxu0
    %v2842 = vadd.f32 0.0, %v2841
    %2843 = vdwg.mxu0
    %2844 = vmatpush.msra.mxu0 %v376
    %2845 = vmatpush.msra.mxu0 %v372
    %2846 = vmatpush.msra.mxu0 %v368
    %2847 = vmatpush.msra.mxu0 %v364
    %2848 = vmatpush.msra.mxu0 %v360
    %2849 = vmatpush.msra.mxu0 %v356
    %2850 = vmatpush.msra.mxu0 %v352
    %2851 = vmatpush.msra.mxu0 %v348
    %2852 = vmatpush.msra.mxu0 %v344
    %2853 = vmatpush.msra.mxu0 %v340
    %2854 = vmatpush.msra.mxu0 %v336
    %2855 = vmatpush.msra.mxu0 %v332
    %2856 = vmatpush.msra.mxu0 %v328
    %2857 = vmatpush.msra.mxu0 %v324
    %2858 = vmatpush.msra.mxu0 %v320
    %2859 = vmatpush.msra.mxu0 %v316
    %2860 = vmatmul.f32.gmra.mxu0 %v2732
    %v2861 = vpop.f32.mrf.mxu0
    %v2862 = vadd.f32 0.0, %v2861
    %2863 = vdwg.mxu0
    %2864 = vmatpush.msra.mxu0 %v377
    %2865 = vmatpush.msra.mxu0 %v373
    %2866 = vmatpush.msra.mxu0 %v369
    %2867 = vmatpush.msra.mxu0 %v365
    %2868 = vmatpush.msra.mxu0 %v361
    %2869 = vmatpush.msra.mxu0 %v357
    %2870 = vmatpush.msra.mxu0 %v353
    %2871 = vmatpush.msra.mxu0 %v349
    %2872 = vmatpush.msra.mxu0 %v345
    %2873 = vmatpush.msra.mxu0 %v341
    %2874 = vmatpush.msra.mxu0 %v337
    %2875 = vmatpush.msra.mxu0 %v333
    %2876 = vmatpush.msra.mxu0 %v329
    %2877 = vmatpush.msra.mxu0 %v325
    %2878 = vmatpush.msra.mxu0 %v321
    %2879 = vmatpush.msra.mxu0 %v317
    %2880 = vmatmul.f32.gmra.mxu0 %v2732
    %v2881 = vpop.f32.mrf.mxu0
    %v2882 = vadd.f32 0.0, %v2881
    %2883 = vdwg.mxu0
    %2884 = vmatpush.msra.mxu0 %v378
    %2885 = vmatpush.msra.mxu0 %v374
    %2886 = vmatpush.msra.mxu0 %v370
    %2887 = vmatpush.msra.mxu0 %v366
    %2888 = vmatpush.msra.mxu0 %v362
    %2889 = vmatpush.msra.mxu0 %v358
    %2890 = vmatpush.msra.mxu0 %v354
    %2891 = vmatpush.msra.mxu0 %v350
    %2892 = vmatpush.msra.mxu0 %v346
    %2893 = vmatpush.msra.mxu0 %v342
    %2894 = vmatpush.msra.mxu0 %v338
    %2895 = vmatpush.msra.mxu0 %v334
    %2896 = vmatpush.msra.mxu0 %v330
    %2897 = vmatpush.msra.mxu0 %v326
    %2898 = vmatpush.msra.mxu0 %v322
    %2899 = vmatpush.msra.mxu0 %v318
    %2900 = vmatmul.f32.gmra.mxu0 %v2732
    %v2901 = vpop.f32.mrf.mxu0
    %v2902 = vadd.f32 0.0, %v2901
    %2903 = vdwg.mxu0
    %v2908 = vrot.slane %v2862, 7
    %v2909 = vrot.slane %v2882, 6
    %v2910 = vrot.slane %v2902, 5
    %v2911 = vsel %vm1828, %v2842, %v2908
    %v2912 = vsel %vm1830, %v2909, %v2910
    %v2913 = vsel %vm1832, %v2911, %v2912
    %v2915 = vadd.f32 %v2802, %v2913
    %v2916 = vxor.u32 %v2915, 2147483648
    %v2917 = vmul.f32 %v2916, 1.442695
    %v2918 = vpow.pop %v2917
    %v2919 = vadd.f32 %v2918, 1.0
    %v2920 = vrcp.pop %v2919
    %v2921 = vmul.f32 %v2919, %v2920
    %v2922 = vsub.f32 1.0, %v2921
    %v2923 = vmul.f32 %v2920, %v2922
    %v2924 = vadd.f32 %v2920, %v2923
    %vm2925 = vweird.f32 %v2919
    %vm2926 = vweird.f32 %v2920
    %vm2927 = vmor %vm2925, %vm2926
    %v2928 = vsel %vm2927, %v2920, %v2924
    %v2929 = vand.u32 2147483647, %v2919
    %vm2930 = vcmp.eq.f32.partialorder %v2929, 8.507059e+37
    %v2931 = vand.u32 %v2919, 2147483648
    %v2932 = vor.u32 1.1754944e-38, %v2931
    %v2933 = vsel %vm2930, %v2932, %v2928
    %v2934 = vmul.f32 1.0, %v2933
    %v2936 = vrot.slane %v2915, 3
    %v2938 = vtanh.pop %v2936
    %v2940 = vrot.slane %v2934, 1
    %v2942 = vmul.f32 %v2940, %v2728
    %v2943 = vmul.f32 %v2934, %v2938
    %v2944 = vadd.f32 %v2942, %v2943
    %v2945 = vtanh.pop %v2944
    %v2946 = vrot.slane %v2934, 2
    %v2948 = vmul.f32 %v2946, %v2945
    %p2949 = scmp.eq.s32.totalorder %s1731, 1
    // Predicated region
    $region134: #{tpu_custom_call.1} parent=1 // pred_check
      %p2950 = pneg %p2949
    $region135: #{tpu_custom_call.1} parent=1 // pred_check_branch
      %2952 = sbr.rel (%p2950) target = $region137
    $region136: #{tpu_custom_call.1} parent=1 // pred_region
      _
    $region137: #{tpu_custom_call.1} parent=1 // pred_fallthru
      _
    %p2953 = pneg %p2949
    // Predicated region
    $region138: #{tpu_custom_call.1} parent=1 // pred_check
      _
    $region139: #{tpu_custom_call.1} parent=1 // pred_check_branch
      %2955 = sbr.rel (%p2949) target = $region141
    $region140: #{tpu_custom_call.1} parent=1 // pred_region
      %2956 = vmatpush.msra.mxu0 %v394
      %2957 = vmatpush.msra.mxu0 %v393
      %2958 = vmatpush.msra.mxu0 %v392
      %2959 = vmatpush.msra.mxu0 %v391
      %2960 = vmatpush.msra.mxu0 %v390
      %2961 = vmatpush.msra.mxu0 %v389
      %2962 = vmatpush.msra.mxu0 %v388
      %2963 = vmatpush.msra.mxu0 %v387
      %2964 = vmatpush.msra.mxu0 %v386
      %2965 = vmatpush.msra.mxu0 %v385
      %2966 = vmatpush.msra.mxu0 %v384
      %2967 = vmatpush.msra.mxu0 %v383
      %2968 = vmatpush.msra.mxu0 %v382
      %2969 = vmatpush.msra.mxu0 %v381
      %2970 = vmatpush.msra.mxu0 %v380
      %2971 = vmatpush.msra.mxu0 %v379
      %2972 = vmatmul.f32.gmra.mxu0 %v2948
      %v2973 = vpop.f32.mrf.mxu0
      %v2974 = vadd.f32 %v395, %v2973
      %2975 = vdwg.mxu0
      %vm2977 = vcmp.lt.s32.totalorder %v2974, 0
      %v2978 = vsub.s32 2147483648, %v2974
      %v2979 = vsel %vm2977, %v2978, %v2974
      %v2980 = vand.u32 %v2979, 4294967288
      %v2981 = vor.u32 %v2980, %v400
      %v2982 = vsel %vm1828, %v2981, 2147483648
      %v2983 = vand.u32 %v2982, 65535
      %v2984 = vshra.s32 %v2982, 16
      %v2985 = vcvt.s32.f32 %v2983
      %v2986 = vcvt.s32.f32 %v2984
      %2987 = vmax.xlane.f32.xlu0 %v2986
      %v2988 = vpop.xlane.xlu0 %2987
      %vm2989 = vcmp.eq.f32.partialorder %v2986, %v2988
      %v2990 = vsel %vm2989, %v2985, -inf
      %2991 = vmax.xlane.f32.xlu0 %v2990
      %v2992 = vpop.xlane.xlu0 %2991
      %v2993 = vcvt.f32.s32 %v2992
      %v2994 = vcvt.f32.s32 %v2988
      %v2995 = vshll.u32 %v2994, 16
      %v2996 = vadd.s32 %v2995, %v2993
      %v2997 = vrot.slane %v2996, 4
      %vm2998 = vcmp.gt.s32.totalorder %v2996, %v2997
      %v2999 = vsel %vm2998, %v2996, %v2997
      %v3000 = vrot.slane %v2999, 2
      %vm3001 = vcmp.gt.s32.totalorder %v2999, %v3000
      %v3002 = vsel %vm3001, %v2999, %v3000
      %v3003 = vrot.slane %v3002, 1
      %vm3004 = vcmp.gt.s32.totalorder %v3002, %v3003
      %v3005 = vsel %vm3004, %v3002, %v3003
      %s3006 = vtos %v3005
      %s3007 = sand.u32 %s3006, 7
      %s3008 = ssub.s32 7, %s3007
    $region141: #{tpu_custom_call.1} parent=1 // pred_fallthru
      %s3009 = sphi %s1725, %s3008
    %s3010 = sshra.s32 %s3009, 3
    %s3011 = sand.u32 %s3009, 7
    %s3012 = sshra.s32 %s3009, 3
    %s3013 = sand.u32 %s3009, 7
    %s3014 = smul.u32 %s3010, 4
    %s3015 = smul.u32 %s3014, 8
    %s3016 = sadd.s32 %s3015, %s3013
    %s3017 = scalar_lea.vmem [#allocation2], %s3016
    %v3018 = vld [vmem:[%s3017] ss:$8 sm:$0xf]
    %3019 = vmatpush.msra.mxu0 %v394
    %3020 = vmatpush.msra.mxu0 %v393
    %3021 = vmatpush.msra.mxu0 %v392
    %3022 = vmatpush.msra.mxu0 %v391
    %3023 = vmatpush.msra.mxu0 %v390
    %3024 = vmatpush.msra.mxu0 %v389
    %3025 = vmatpush.msra.mxu0 %v388
    %3026 = vmatpush.msra.mxu0 %v387
    %3027 = vmatpush.msra.mxu0 %v386
    %3028 = vmatpush.msra.mxu0 %v385
    %3029 = vmatpush.msra.mxu0 %v384
    %3030 = vmatpush.msra.mxu0 %v383
    %3031 = vmatpush.msra.mxu0 %v382
    %3032 = vmatpush.msra.mxu0 %v381
    %3033 = vmatpush.msra.mxu0 %v380
    %3034 = vmatpush.msra.mxu0 %v379
    %3035 = vmatmul.f32.gmra.mxu0 %v2948
    %v3036 = vpop.f32.mrf.mxu0
    %v3037 = vadd.f32 %v395, %v3036
    %3038 = vdwg.mxu0
    %3039 = vst [vmem:[#allocation3 + $0x6] sm:$0x1] %v3037
    %3040 = vmatpush.msra.mxu0 %v375
    %3041 = vmatpush.msra.mxu0 %v371
    %3042 = vmatpush.msra.mxu0 %v367
    %3043 = vmatpush.msra.mxu0 %v363
    %3044 = vmatpush.msra.mxu0 %v359
    %3045 = vmatpush.msra.mxu0 %v355
    %3046 = vmatpush.msra.mxu0 %v351
    %3047 = vmatpush.msra.mxu0 %v347
    %3048 = vmatpush.msra.mxu0 %v343
    %3049 = vmatpush.msra.mxu0 %v339
    %3050 = vmatpush.msra.mxu0 %v335
    %3051 = vmatpush.msra.mxu0 %v331
    %3052 = vmatpush.msra.mxu0 %v327
    %3053 = vmatpush.msra.mxu0 %v323
    %3054 = vmatpush.msra.mxu0 %v319
    %3055 = vmatpush.msra.mxu0 %v315
    %3056 = vmatmul.f32.gmra.mxu0 %v2948
    %v3057 = vpop.f32.mrf.mxu0
    %v3058 = vadd.f32 0.0, %v3057
    %3059 = vdwg.mxu0
    %3060 = vmatpush.msra.mxu0 %v376
    %3061 = vmatpush.msra.mxu0 %v372
    %3062 = vmatpush.msra.mxu0 %v368
    %3063 = vmatpush.msra.mxu0 %v364
    %3064 = vmatpush.msra.mxu0 %v360
    %3065 = vmatpush.msra.mxu0 %v356
    %3066 = vmatpush.msra.mxu0 %v352
    %3067 = vmatpush.msra.mxu0 %v348
    %3068 = vmatpush.msra.mxu0 %v344
    %3069 = vmatpush.msra.mxu0 %v340
    %3070 = vmatpush.msra.mxu0 %v336
    %3071 = vmatpush.msra.mxu0 %v332
    %3072 = vmatpush.msra.mxu0 %v328
    %3073 = vmatpush.msra.mxu0 %v324
    %3074 = vmatpush.msra.mxu0 %v320
    %3075 = vmatpush.msra.mxu0 %v316
    %3076 = vmatmul.f32.gmra.mxu0 %v2948
    %v3077 = vpop.f32.mrf.mxu0
    %v3078 = vadd.f32 0.0, %v3077
    %3079 = vdwg.mxu0
    %3080 = vmatpush.msra.mxu0 %v377
    %3081 = vmatpush.msra.mxu0 %v373
    %3082 = vmatpush.msra.mxu0 %v369
    %3083 = vmatpush.msra.mxu0 %v365
    %3084 = vmatpush.msra.mxu0 %v361
    %3085 = vmatpush.msra.mxu0 %v357
    %3086 = vmatpush.msra.mxu0 %v353
    %3087 = vmatpush.msra.mxu0 %v349
    %3088 = vmatpush.msra.mxu0 %v345
    %3089 = vmatpush.msra.mxu0 %v341
    %3090 = vmatpush.msra.mxu0 %v337
    %3091 = vmatpush.msra.mxu0 %v333
    %3092 = vmatpush.msra.mxu0 %v329
    %3093 = vmatpush.msra.mxu0 %v325
    %3094 = vmatpush.msra.mxu0 %v321
    %3095 = vmatpush.msra.mxu0 %v317
    %3096 = vmatmul.f32.gmra.mxu0 %v2948
    %v3097 = vpop.f32.mrf.mxu0
    %v3098 = vadd.f32 0.0, %v3097
    %3099 = vdwg.mxu0
    %3100 = vmatpush.msra.mxu0 %v378
    %3101 = vmatpush.msra.mxu0 %v374
    %3102 = vmatpush.msra.mxu0 %v370
    %3103 = vmatpush.msra.mxu0 %v366
    %3104 = vmatpush.msra.mxu0 %v362
    %3105 = vmatpush.msra.mxu0 %v358
    %3106 = vmatpush.msra.mxu0 %v354
    %3107 = vmatpush.msra.mxu0 %v350
    %3108 = vmatpush.msra.mxu0 %v346
    %3109 = vmatpush.msra.mxu0 %v342
    %3110 = vmatpush.msra.mxu0 %v338
    %3111 = vmatpush.msra.mxu0 %v334
    %3112 = vmatpush.msra.mxu0 %v330
    %3113 = vmatpush.msra.mxu0 %v326
    %3114 = vmatpush.msra.mxu0 %v322
    %3115 = vmatpush.msra.mxu0 %v318
    %3116 = vmatmul.f32.gmra.mxu0 %v2948
    %v3117 = vpop.f32.mrf.mxu0
    %v3118 = vadd.f32 0.0, %v3117
    %3119 = vdwg.mxu0
    %v3124 = vrot.slane %v3078, 7
    %v3125 = vrot.slane %v3098, 6
    %v3126 = vrot.slane %v3118, 5
    %v3127 = vsel %vm1828, %v3058, %v3124
    %v3128 = vsel %vm1830, %v3125, %v3126
    %v3129 = vsel %vm1832, %v3127, %v3128
    %v3131 = vadd.f32 %v3018, %v3129
    %v3132 = vxor.u32 %v3131, 2147483648
    %v3133 = vmul.f32 %v3132, 1.442695
    %v3134 = vpow.pop %v3133
    %v3135 = vadd.f32 %v3134, 1.0
    %v3136 = vrcp.pop %v3135
    %v3137 = vmul.f32 %v3135, %v3136
    %v3138 = vsub.f32 1.0, %v3137
    %v3139 = vmul.f32 %v3136, %v3138
    %v3140 = vadd.f32 %v3136, %v3139
    %vm3141 = vweird.f32 %v3135
    %vm3142 = vweird.f32 %v3136
    %vm3143 = vmor %vm3141, %vm3142
    %v3144 = vsel %vm3143, %v3136, %v3140
    %v3145 = vand.u32 2147483647, %v3135
    %vm3146 = vcmp.eq.f32.partialorder %v3145, 8.507059e+37
    %v3147 = vand.u32 %v3135, 2147483648
    %v3148 = vor.u32 1.1754944e-38, %v3147
    %v3149 = vsel %vm3146, %v3148, %v3144
    %v3150 = vmul.f32 1.0, %v3149
    %v3152 = vrot.slane %v3131, 3
    %v3154 = vtanh.pop %v3152
    %v3156 = vrot.slane %v3150, 1
    %v3158 = vmul.f32 %v3156, %v2944
    %v3159 = vmul.f32 %v3150, %v3154
    %v3160 = vadd.f32 %v3158, %v3159
    %v3161 = vtanh.pop %v3160
    %v3162 = vrot.slane %v3150, 2
    %v3164 = vmul.f32 %v3162, %v3161
    %3165 = vmatpush.msra.mxu0 %v394
    %3166 = vmatpush.msra.mxu0 %v393
    %3167 = vmatpush.msra.mxu0 %v392
    %3168 = vmatpush.msra.mxu0 %v391
    %3169 = vmatpush.msra.mxu0 %v390
    %3170 = vmatpush.msra.mxu0 %v389
    %3171 = vmatpush.msra.mxu0 %v388
    %3172 = vmatpush.msra.mxu0 %v387
    %3173 = vmatpush.msra.mxu0 %v386
    %3174 = vmatpush.msra.mxu0 %v385
    %3175 = vmatpush.msra.mxu0 %v384
    %3176 = vmatpush.msra.mxu0 %v383
    %3177 = vmatpush.msra.mxu0 %v382
    %3178 = vmatpush.msra.mxu0 %v381
    %3179 = vmatpush.msra.mxu0 %v380
    %3180 = vmatpush.msra.mxu0 %v379
    %3181 = vmatmul.f32.gmra.mxu0 %v3164
    %v3182 = vpop.f32.mrf.mxu0
    %v3183 = vadd.f32 %v395, %v3182
    %3184 = vdwg.mxu0
    %3185 = vst [vmem:[#allocation3 + $0x7] sm:$0x1] %v3183
    %v3186 = vld [vmem:[#allocation3] sm:$0xff]
    %vm3188 = vcmp.lt.s32.totalorder %v3186, 0
    %v3189 = vsub.s32 2147483648, %v3186
    %v3190 = vsel %vm3188, %v3189, %v3186
    %v3191 = vand.u32 %v3190, 4294967288
    %v3192 = vor.u32 %v3191, %v400
    %s3193 = scalar_lea.smem [#allocation21], 0
    %3194 = sst [smem:[%s3193]] 0.0
    %vm3195 = vcmask 1041409
    %v3196 = vsel %vm3195, %v3192, 2147483648
    %v3197 = vand.u32 %v3196, 65535
    %v3198 = vshra.s32 %v3196, 16
    %v3199 = vcvt.s32.f32 %v3197
    %v3200 = vcvt.s32.f32 %v3198
    %3201 = vmax.xlane.f32.xlu0 %v3200
    %v3202 = vpop.xlane.xlu0 %3201
    %vm3203 = vcmp.eq.f32.partialorder %v3200, %v3202
    %v3204 = vsel %vm3203, %v3199, -inf
    %3205 = vmax.xlane.f32.xlu0 %v3204
    %v3206 = vpop.xlane.xlu0 %3205
    %v3207 = vcvt.f32.s32 %v3206
    %v3208 = vcvt.f32.s32 %v3202
    %v3209 = vshll.u32 %v3208, 16
    %v3210 = vadd.s32 %v3209, %v3207
    %v3211 = vrot.slane %v3210, 4
    %vm3212 = vcmp.gt.s32.totalorder %v3210, %v3211
    %v3213 = vsel %vm3212, %v3210, %v3211
    %v3214 = vrot.slane %v3213, 2
    %vm3215 = vcmp.gt.s32.totalorder %v3213, %v3214
    %v3216 = vsel %vm3215, %v3213, %v3214
    %v3217 = vrot.slane %v3216, 1
    %vm3218 = vcmp.gt.s32.totalorder %v3216, %v3217
    %v3219 = vsel %vm3218, %v3216, %v3217
    %s3220 = vtos %v3219
    %s3221 = sand.u32 %s3220, 7
    %s3222 = ssub.s32 7, %s3221
    %s3223 = scvt.s32.f32 %s3222
    %s3224 = scalar_lea.smem [#allocation21], 1
    %3225 = sst [smem:[%s3224]] %s3223
    %v3226 = vsel %vm1830, %v3192, 2147483648
    %v3227 = vand.u32 %v3226, 65535
    %v3228 = vshra.s32 %v3226, 16
    %v3229 = vcvt.s32.f32 %v3227
    %v3230 = vcvt.s32.f32 %v3228
    %3231 = vmax.xlane.f32.xlu0 %v3230
    %v3232 = vpop.xlane.xlu0 %3231
    %vm3233 = vcmp.eq.f32.partialorder %v3230, %v3232
    %v3234 = vsel %vm3233, %v3229, -inf
    %3235 = vmax.xlane.f32.xlu0 %v3234
    %v3236 = vpop.xlane.xlu0 %3235
    %v3237 = vcvt.f32.s32 %v3236
    %v3238 = vcvt.f32.s32 %v3232
    %v3239 = vshll.u32 %v3238, 16
    %v3240 = vadd.s32 %v3239, %v3237
    %v3241 = vrot.slane %v3240, 4
    %vm3242 = vcmp.gt.s32.totalorder %v3240, %v3241
    %v3243 = vsel %vm3242, %v3240, %v3241
    %v3244 = vrot.slane %v3243, 2
    %vm3245 = vcmp.gt.s32.totalorder %v3243, %v3244
    %v3246 = vsel %vm3245, %v3243, %v3244
    %v3247 = vrot.slane %v3246, 1
    %vm3248 = vcmp.gt.s32.totalorder %v3246, %v3247
    %v3249 = vsel %vm3248, %v3246, %v3247
    %s3250 = vtos %v3249
    %s3251 = sand.u32 %s3250, 7
    %s3252 = ssub.s32 7, %s3251
    %s3253 = scvt.s32.f32 %s3252
    %s3254 = scalar_lea.smem [#allocation21], 2
    %3255 = sst [smem:[%s3254]] %s3253
    %vm3256 = vcmask 1043459
    %v3257 = vsel %vm3256, %v3192, 2147483648
    %v3258 = vand.u32 %v3257, 65535
    %v3259 = vshra.s32 %v3257, 16
    %v3260 = vcvt.s32.f32 %v3258
    %v3261 = vcvt.s32.f32 %v3259
    %3262 = vmax.xlane.f32.xlu0 %v3261
    %v3263 = vpop.xlane.xlu0 %3262
    %vm3264 = vcmp.eq.f32.partialorder %v3261, %v3263
    %v3265 = vsel %vm3264, %v3260, -inf
    %3266 = vmax.xlane.f32.xlu0 %v3265
    %v3267 = vpop.xlane.xlu0 %3266
    %v3268 = vcvt.f32.s32 %v3267
    %v3269 = vcvt.f32.s32 %v3263
    %v3270 = vshll.u32 %v3269, 16
    %v3271 = vadd.s32 %v3270, %v3268
    %v3272 = vrot.slane %v3271, 4
    %vm3273 = vcmp.gt.s32.totalorder %v3271, %v3272
    %v3274 = vsel %vm3273, %v3271, %v3272
    %v3275 = vrot.slane %v3274, 2
    %vm3276 = vcmp.gt.s32.totalorder %v3274, %v3275
    %v3277 = vsel %vm3276, %v3274, %v3275
    %v3278 = vrot.slane %v3277, 1
    %vm3279 = vcmp.gt.s32.totalorder %v3277, %v3278
    %v3280 = vsel %vm3279, %v3277, %v3278
    %s3281 = vtos %v3280
    %s3282 = sand.u32 %s3281, 7
    %s3283 = ssub.s32 7, %s3282
    %s3284 = scvt.s32.f32 %s3283
    %s3285 = scalar_lea.smem [#allocation21], 3
    %3286 = sst [smem:[%s3285]] %s3284
    %vm3287 = vcmask 1044484
    %v3288 = vsel %vm3287, %v3192, 2147483648
    %v3289 = vand.u32 %v3288, 65535
    %v3290 = vshra.s32 %v3288, 16
    %v3291 = vcvt.s32.f32 %v3289
    %v3292 = vcvt.s32.f32 %v3290
    %3293 = vmax.xlane.f32.xlu0 %v3292
    %v3294 = vpop.xlane.xlu0 %3293
    %vm3295 = vcmp.eq.f32.partialorder %v3292, %v3294
    %v3296 = vsel %vm3295, %v3291, -inf
    %3297 = vmax.xlane.f32.xlu0 %v3296
    %v3298 = vpop.xlane.xlu0 %3297
    %v3299 = vcvt.f32.s32 %v3298
    %v3300 = vcvt.f32.s32 %v3294
    %v3301 = vshll.u32 %v3300, 16
    %v3302 = vadd.s32 %v3301, %v3299
    %v3303 = vrot.slane %v3302, 4
    %vm3304 = vcmp.gt.s32.totalorder %v3302, %v3303
    %v3305 = vsel %vm3304, %v3302, %v3303
    %v3306 = vrot.slane %v3305, 2
    %vm3307 = vcmp.gt.s32.totalorder %v3305, %v3306
    %v3308 = vsel %vm3307, %v3305, %v3306
    %v3309 = vrot.slane %v3308, 1
    %vm3310 = vcmp.gt.s32.totalorder %v3308, %v3309
    %v3311 = vsel %vm3310, %v3308, %v3309
    %s3312 = vtos %v3311
    %s3313 = sand.u32 %s3312, 7
    %s3314 = ssub.s32 7, %s3313
    %s3315 = scvt.s32.f32 %s3314
    %s3316 = scalar_lea.smem [#allocation21], 4
    %3317 = sst [smem:[%s3316]] %s3315
    %vm3318 = vcmask 1045509
    %v3319 = vsel %vm3318, %v3192, 2147483648
    %v3320 = vand.u32 %v3319, 65535
    %v3321 = vshra.s32 %v3319, 16
    %v3322 = vcvt.s32.f32 %v3320
    %v3323 = vcvt.s32.f32 %v3321
    %3324 = vmax.xlane.f32.xlu0 %v3323
    %v3325 = vpop.xlane.xlu0 %3324
    %vm3326 = vcmp.eq.f32.partialorder %v3323, %v3325
    %v3327 = vsel %vm3326, %v3322, -inf
    %3328 = vmax.xlane.f32.xlu0 %v3327
    %v3329 = vpop.xlane.xlu0 %3328
    %v3330 = vcvt.f32.s32 %v3329
    %v3331 = vcvt.f32.s32 %v3325
    %v3332 = vshll.u32 %v3331, 16
    %v3333 = vadd.s32 %v3332, %v3330
    %v3334 = vrot.slane %v3333, 4
    %vm3335 = vcmp.gt.s32.totalorder %v3333, %v3334
    %v3336 = vsel %vm3335, %v3333, %v3334
    %v3337 = vrot.slane %v3336, 2
    %vm3338 = vcmp.gt.s32.totalorder %v3336, %v3337
    %v3339 = vsel %vm3338, %v3336, %v3337
    %v3340 = vrot.slane %v3339, 1
    %vm3341 = vcmp.gt.s32.totalorder %v3339, %v3340
    %v3342 = vsel %vm3341, %v3339, %v3340
    %s3343 = vtos %v3342
    %s3344 = sand.u32 %s3343, 7
    %s3345 = ssub.s32 7, %s3344
    %s3346 = scvt.s32.f32 %s3345
    %s3347 = scalar_lea.smem [#allocation21], 5
    %3348 = sst [smem:[%s3347]] %s3346
    %vm3349 = vcmask 1046534
    %v3350 = vsel %vm3349, %v3192, 2147483648
    %v3351 = vand.u32 %v3350, 65535
    %v3352 = vshra.s32 %v3350, 16
    %v3353 = vcvt.s32.f32 %v3351
    %v3354 = vcvt.s32.f32 %v3352
    %3355 = vmax.xlane.f32.xlu0 %v3354
    %v3356 = vpop.xlane.xlu0 %3355
    %vm3357 = vcmp.eq.f32.partialorder %v3354, %v3356
    %v3358 = vsel %vm3357, %v3353, -inf
    %3359 = vmax.xlane.f32.xlu0 %v3358
    %v3360 = vpop.xlane.xlu0 %3359
    %v3361 = vcvt.f32.s32 %v3360
    %v3362 = vcvt.f32.s32 %v3356
    %v3363 = vshll.u32 %v3362, 16
    %v3364 = vadd.s32 %v3363, %v3361
    %v3365 = vrot.slane %v3364, 4
    %vm3366 = vcmp.gt.s32.totalorder %v3364, %v3365
    %v3367 = vsel %vm3366, %v3364, %v3365
    %v3368 = vrot.slane %v3367, 2
    %vm3369 = vcmp.gt.s32.totalorder %v3367, %v3368
    %v3370 = vsel %vm3369, %v3367, %v3368
    %v3371 = vrot.slane %v3370, 1
    %vm3372 = vcmp.gt.s32.totalorder %v3370, %v3371
    %v3373 = vsel %vm3372, %v3370, %v3371
    %s3374 = vtos %v3373
    %s3375 = sand.u32 %s3374, 7
    %s3376 = ssub.s32 7, %s3375
    %s3377 = scvt.s32.f32 %s3376
    %s3378 = scalar_lea.smem [#allocation21], 6
    %3379 = sst [smem:[%s3378]] %s3377
    %vm3380 = vcmask 1047559
    %v3381 = vsel %vm3380, %v3192, 2147483648
    %v3382 = vand.u32 %v3381, 65535
    %v3383 = vshra.s32 %v3381, 16
    %v3384 = vcvt.s32.f32 %v3382
    %v3385 = vcvt.s32.f32 %v3383
    %3386 = vmax.xlane.f32.xlu0 %v3385
    %v3387 = vpop.xlane.xlu0 %3386
    %vm3388 = vcmp.eq.f32.partialorder %v3385, %v3387
    %v3389 = vsel %vm3388, %v3384, -inf
    %3390 = vmax.xlane.f32.xlu0 %v3389
    %v3391 = vpop.xlane.xlu0 %3390
    %v3392 = vcvt.f32.s32 %v3391
    %v3393 = vcvt.f32.s32 %v3387
    %v3394 = vshll.u32 %v3393, 16
    %v3395 = vadd.s32 %v3394, %v3392
    %v3396 = vrot.slane %v3395, 4
    %vm3397 = vcmp.gt.s32.totalorder %v3395, %v3396
    %v3398 = vsel %vm3397, %v3395, %v3396
    %v3399 = vrot.slane %v3398, 2
    %vm3400 = vcmp.gt.s32.totalorder %v3398, %v3399
    %v3401 = vsel %vm3400, %v3398, %v3399
    %v3402 = vrot.slane %v3401, 1
    %vm3403 = vcmp.gt.s32.totalorder %v3401, %v3402
    %v3404 = vsel %vm3403, %v3401, %v3402
    %s3405 = vtos %v3404
    %s3406 = sand.u32 %s3405, 7
    %s3407 = ssub.s32 7, %s3406
    %s3408 = scvt.s32.f32 %s3407
    %s3409 = scalar_lea.smem [#allocation21], 7
    %3410 = sst [smem:[%s3409]] %s3408
    // Predicated region
    $region142: #{tpu_custom_call.1} parent=1 // pred_check
      _
    $region143: #{tpu_custom_call.1} parent=1 // pred_check_branch
      %3412 = sbr.rel (0) target = $region145
    $region144: #{tpu_custom_call.1} parent=1 // pred_region
      %3414 = vsyncadd [#allocation7], 0
      %s3416 = sshll.u32 %s13, 4
      %s3417 = int_to_ptr.hbm [resolvable:$true] %s3416
      %3419 = dma.smem_to_hbm [#allocation21], 16, %s3417, [#allocation7]
    $region145: #{tpu_custom_call.1} parent=1 // pred_fallthru
      _
    // Predicated region
    $region146: #{tpu_custom_call.1} parent=1 // pred_check
      _
    $region147: #{tpu_custom_call.1} parent=1 // pred_check_branch
      %3421 = sbr.rel (0) target = $region149
    $region148: #{tpu_custom_call.1} parent=1 // pred_region
      %3423 = dma.done [#allocation7], 16
    $region149: #{tpu_custom_call.1} parent=1 // pred_fallthru
      _
    %3424 = sfence
    %3425 = vsyncpa [#allocation5], 1
    %3426 = vsyncpa [#allocation13], 1
    %3427 = vsyncpa [#allocation16], 1
    %3428 = vsyncpa [#allocation19], 1
    %3429 = vsyncpa [#allocation6], 1
    %3430 = vsyncpa [#allocation9], 1
    %3431 = vsyncpa [#allocation7], 1

</llo_original>
